<compile_context>
chip_gen: v7x
topology: tpu7x:2x2x1
jax: 0.10.0
libtpu: 0.0.40
codegen_flags: <defaults>
</compile_context>

<pallas_src>
import functools

import jax
import jax.numpy as jnp
from jax.experimental import pallas as pl
from jax.experimental.pallas import tpu as pltpu

# ---- module hyper-parameters (defaults of HybridPartiallyInformed) ----
GRAVITY = 9.81
L_PEND = 1.0
DT = 0.1
SAMPLING_POSITIONS = (0.25, 0.5, 0.75, 1.0)           # 4 positions -> observable_dim = 12
OBSERVABLE_DIM = 3 * len(SAMPLING_POSITIONS)           # 12
HIDDEN_DIM = 64
CONTEXT = 33                                           # conv kernel_size == context
KSIZE = CONTEXT
PAD = CONTEXT // 2                                     # 16 -> 'same' length output
FORECAST = 8
LATENT_CHANNELS = 2
BN_EPS = 1e-5


# --------------------------------------------------------------------------------------
# packed-parameter layout (row offsets into the single f32 buffer, all 8-row aligned)
# --------------------------------------------------------------------------------------
def _pk_layout(B):
    up8 = lambda n: -(-n // 8) * 8
    up128 = lambda n: -(-n // 128) * 128
    rows_h = B * CONTEXT                    # rows of the conv1/BN/ELU activation
    stride = up8(rows_h)                    # padded stride between the 3 wf blocks
    row_wfb = 8                             # rows 0..7: b1,gamma,beta,bfz,bc2,bc1,pad
    row_wc1 = row_wfb + 3 * stride
    row_wc2 = row_wc1 + 8
    row_dbig = row_wc2 + 8
    row_sel = row_dbig + up8(3 * FORECAST)
    total = row_sel + up8(B)
    lanes = up128(max(128, rows_h, FORECAST * OBSERVABLE_DIM, HIDDEN_DIM))
    return dict(rows_h=rows_h, stride=stride, row_wfb=row_wfb, row_wc1=row_wc1,
                row_wc2=row_wc2, row_dbig=row_dbig, row_sel=row_sel,
                total=total, lanes=lanes)


# --------------------------------------------------------------------------------------
# kernel
# --------------------------------------------------------------------------------------
def _hybrid_kernel(B, patches_ref, wbf_ref, pk_ref, out_ref):
    L = _pk_layout(B)
    H = HIDDEN_DIM

    # ---- hoisted small parameters (single aligned (8,lanes) load, value slices) ----
    head = pk_ref[0:8, :]
    b1, gamma, beta = head[0:1, 0:H], head[1:2, 0:H], head[2:3, 0:H]
    bfz = head[3:4, 0:3]
    bc2_0, bc2_1, bc2_2 = head[4:5, 0:1], head[4:5, 1:2], head[4:5, 2:3]
    bc1 = head[5:6, 0:H]

    # ---------- CNNEncoder ----------
    # conv1 (observable_dim -> hidden) as one im2col matmul, bf16 operands, f32 accum.
    h = jnp.dot(patches_ref[...], wbf_ref[...],
                preferred_element_type=jnp.float32) + b1          # (B*Lc, H) f32

    # BatchNorm1d, training-mode batch statistics over (batch, length) per channel.
    mean = jnp.mean(h, axis=0, keepdims=True)
    diff = h - mean
    var = jnp.mean(diff * diff, axis=0, keepdims=True)
    h = diff * jax.lax.rsqrt(var + BN_EPS) * gamma + beta

    # ELU (alpha = 1).  exp-1 instead of expm1 (expm1 is a Mosaic lowering risk;
    # the few-ulp difference for tiny negative h is cosmetic).
    h = jnp.where(h > 0.0, h, jnp.exp(h) - 1.0)

    # Fused conv2 + angle / angular-velocity heads, without the mid-tile reshape:
    #   per-row lane reduction against batch-tiled wf weights, then per-batch time
    #   sums via a precomputed (B, B*Lc) selector matmul.
    cols = []
    for j in range(3):
        r0 = L['row_wfb'] + j * L['stride']
        wfb_j = pk_ref[r0:r0 + L['rows_h'], 0:H]                   # (B*Lc, H)
        cols.append(jnp.sum(h * wfb_j, axis=1, keepdims=True))     # (B*Lc, 1)
    cols = jnp.concatenate(cols, axis=1)                           # (B*Lc, 3)
    sel = pk_ref[L['row_sel']:L['row_sel'] + B, 0:L['rows_h']]     # (B, B*Lc)
    z0 = jnp.dot(sel, cols, preferred_element_type=jnp.float32) + bfz    # (B, 3)

    # ---- hoisted correction-MLP weights (resident in vregs across all 8 steps) ----
    wc1b = pk_ref[L['row_wc1']:L['row_wc1'] + 3, 0:H]
    wc2b = pk_ref[L['row_wc2']:L['row_wc2'] + 3, 0:H]
    w1r0, w1r1, w1r2 = wc1b[0:1, :], wc1b[1:2, :], wc1b[2:3, :]
    w2r0, w2r1, w2r2 = wc2b[0:1, :], wc2b[1:2, :], wc2b[2:3, :]

    # ---------- forecast loop: HybridDynamics (k=1) + residual correction ----------
    cx, sy, w = z0[:, 0:1], z0[:, 1:2], z0[:, 2:3]                 # (B,1) each
    zcols = []
    for _ in range(FORECAST):
        # theta = atan2(y, x); theta += w*dt; emit cos/sin via the rotation identity.
        # rsqrt (EUP) instead of sqrt + divides; the select reproduces
        # torch.atan2(0, 0) = 0 -> (cos, sin) = (1, 0).
        r2 = cx * cx + sy * sy
        rinv = jax.lax.rsqrt(r2 + 1e-30)
        nz = r2 > 0.0
        c0 = jnp.where(nz, cx * rinv, 1.0)
        s0 = jnp.where(nz, sy * rinv, 0.0)
        d = w * DT
        cd, sd = jnp.cos(d), jnp.sin(d)
        c1 = c0 * cd - s0 * sd                    # cos(theta + w*dt)
        s1 = s0 * cd + c0 * sd                    # sin(theta + w*dt)
        wn = w - (DT * GRAVITY / L_PEND) * s1

        # correction MLP: Linear(3,H) as 3 broadcast-FMAs, ReLU, Linear(H,3) as
        # 3 lane reductions — no MXU on the serial chain.
        hc = jnp.maximum(c1 * w1r0 + s1 * w1r1 + wn * w1r2 + bc1, 0.0)   # (B, H)
        cx = c1 + jnp.sum(hc * w2r0, axis=1, keepdims=True) + bc2_0
        sy = s1 + jnp.sum(hc * w2r1, axis=1, keepdims=True) + bc2_1
        w = wn + jnp.sum(hc * w2r2, axis=1, keepdims=True) + bc2_2
        zcols += [cx, sy, w]

    # ---------- InformedDecoder: block-diagonal matmul + one lane-dense store ----------
    zall = jnp.concatenate(zcols, axis=1)                          # (B, 3*FORECAST)
    dbig = pk_ref[L['row_dbig']:L['row_dbig'] + 3 * FORECAST,
                  0:FORECAST * OBSERVABLE_DIM]                     # (3F, F*12)
    out_ref[...] = jnp.dot(zall, dbig, preferred_element_type=jnp.float32)


# --------------------------------------------------------------------------------------
# host-side glue: im2col, parameter construction & fusion/packing, wrapper
# --------------------------------------------------------------------------------------
def im2col(x):
    """x: (B, observable_dim, context) NCL -> (B*context, observable_dim*kernel)."""
    B = x.shape[0]
    xp = jnp.pad(x, ((0, 0), (0, 0), (PAD, PAD)))
    idx = jnp.arange(CONTEXT)[:, None] + jnp.arange(KSIZE)[None, :]      # (Lc, K)
    patches = xp[:, :, idx]                                              # (B, C, Lc, K)
    patches = jnp.transpose(patches, (0, 2, 1, 3))                       # (B, Lc, C, K)
    return patches.reshape(B * CONTEXT, OBSERVABLE_DIM * KSIZE)


def make_params(key):
    """Raw torch-layout parameters with torch default (uniform +-1/sqrt(fan_in)) init."""
    ks = jax.random.split(key, 12)

    def u(k, shape, fan_in):
        bound = 1.0 / float(fan_in) ** 0.5
        return jax.random.uniform(k, shape, jnp.float32, -bound, bound)

    return dict(
        conv1_w=u(ks[0], (HIDDEN_DIM, OBSERVABLE_DIM, KSIZE), OBSERVABLE_DIM * KSIZE),
        conv1_b=u(ks[1], (HIDDEN_DIM,), OBSERVABLE_DIM * KSIZE),
        bn_gamma=jnp.ones((HIDDEN_DIM,), jnp.float32),
        bn_beta=jnp.zeros((HIDDEN_DIM,), jnp.float32),
        conv2_w=u(ks[2], (LATENT_CHANNELS, HIDDEN_DIM, KSIZE), HIDDEN_DIM * KSIZE),
        conv2_b=u(ks[3], (LATENT_CHANNELS,), HIDDEN_DIM * KSIZE),
        ang_w=u(ks[4], (2, CONTEXT), CONTEXT),
        ang_b=u(ks[5], (2,), CONTEXT),
        av_w=u(ks[6], (1, CONTEXT), CONTEXT),
        av_b=u(ks[7], (1,), CONTEXT),
        c1_w=u(ks[8], (HIDDEN_DIM, 3), 3),
        c1_b=u(ks[9], (HIDDEN_DIM,), 3),
        c2_w=u(ks[10], (3, HIDDEN_DIM), HIDDEN_DIM),
        c2_b=u(ks[11], (3,), HIDDEN_DIM),
    )


def fuse_params(p, batch):
    """Exact algebraic weight fusions + packing into (bf16 conv1 weights, one f32 buffer)."""
    B = int(batch)
    L = _pk_layout(B)

    # conv1 -> im2col matrix (OBS*K, HIDDEN), bf16 for the MXU.
    wbf = jnp.transpose(p['conv1_w'], (1, 2, 0)).reshape(
        OBSERVABLE_DIM * KSIZE, HIDDEN_DIM).astype(jnp.bfloat16)

    # Fuse conv2 (same zero padding) with the two linear heads:
    #   z_enc[b, j] = bfz[j] + sum_{t, c} h[b, t, c] * wf3[j, t, c]
    # with wf3[j, t, c] = sum_s head_w[j, s] * conv2_w[ch_j, c, t + PAD - s].
    Lp = CONTEXT + 2 * PAD
    taps0 = jnp.transpose(p['conv2_w'][0])        # (K, H) latent channel 0
    taps1 = jnp.transpose(p['conv2_w'][1])        # (K, H) latent channel 1
    wfull = jnp.zeros((Lp, HIDDEN_DIM, 3), jnp.float32)
    for s in range(CONTEXT):
        wfull = wfull.at[s:s + KSIZE, :, 0].add(p['ang_w'][0, s] * taps0)
        wfull = wfull.at[s:s + KSIZE, :, 1].add(p['ang_w'][1, s] * taps0)
        wfull = wfull.at[s:s + KSIZE, :, 2].add(p['av_w'][0, s] * taps1)
    wf3 = jnp.transpose(wfull[PAD:PAD + CONTEXT], (2, 0, 1))             # (3, Lc, H)
    wfb = jnp.tile(wf3, (1, B, 1))                                       # (3, B*Lc, H)
    bfz = jnp.stack([
        p['ang_b'][0] + p['conv2_b'][0] * jnp.sum(p['ang_w'][0]),
        p['ang_b'][1] + p['conv2_b'][0] * jnp.sum(p['ang_w'][1]),
        p['av_b'][0] + p['conv2_b'][1] * jnp.sum(p['av_w'][0]),
    ])

    # selector matrix folding per-batch time sums: sel[b, b*Lc + t] = 1
    sel = jnp.kron(jnp.eye(B, dtype=jnp.float32),
                   jnp.ones((1, CONTEXT), jnp.float32))                  # (B, B*Lc)

    # InformedDecoder folded into a block-diagonal (3F, F*12) matrix.
    sp = jnp.asarray(SAMPLING_POSITIONS, jnp.float32)
    n = sp.shape[0]
    d = jnp.zeros((3, OBSERVABLE_DIM), jnp.float32)
    d = d.at[1, 0:n].set(sp)            # X   =  y * sp
    d = d.at[0, n:2 * n].set(-sp)       # Y   = -x * sp
    d = d.at[2, 2 * n:3 * n].set(sp)    # vel =  w * sp
    dbig = jnp.kron(jnp.eye(FORECAST, dtype=jnp.float32), d)

    # Pack every f32 parameter into one lane-aligned buffer (single HBM->VMEM DMA).
    pk = jnp.zeros((L['total'], L['lanes']), jnp.float32)
    pk = pk.at[0, 0:HIDDEN_DIM].set(p['conv1_b'])
    pk = pk.at[1, 0:HIDDEN_DIM].set(p['bn_gamma'])
    pk = pk.at[2, 0:HIDDEN_DIM].set(p['bn_beta'])
    pk = pk.at[3, 0:3].set(bfz)
    pk = pk.at[4, 0:3].set(p['c2_b'])
    pk = pk.at[5, 0:HIDDEN_DIM].set(p['c1_b'])
    for j in range(3):
        r0 = L['row_wfb'] + j * L['stride']
        pk = pk.at[r0:r0 + L['rows_h'], 0:HIDDEN_DIM].set(wfb[j])
    pk = pk.at[L['row_wc1']:L['row_wc1'] + 3, 0:HIDDEN_DIM].set(jnp.transpose(p['c1_w']))
    pk = pk.at[L['row_wc2']:L['row_wc2'] + 3, 0:HIDDEN_DIM].set(p['c2_w'])
    pk = pk.at[L['row_dbig']:L['row_dbig'] + 3 * FORECAST,
               0:FORECAST * OBSERVABLE_DIM].set(dbig)
    pk = pk.at[L['row_sel']:L['row_sel'] + B, 0:L['rows_h']].set(sel)
    return (wbf, pk)


def hybrid_partially_informed(x, fused):
    """x: (B, observable_dim, context) or (N, B, observable_dim, context) windows.

    Each window is one full module forward (BN statistics per window), gridded and
    marked 'parallel' so N windows pipeline / shard across TensorCores.
    """
    single = (x.ndim == 3)
    xw = x[None] if single else x
    N, B = xw.shape[0], xw.shape[1]
    L = _pk_layout(B)
    wbf, pk = fused
    assert pk.shape == (L['total'], L['lanes']), \
        "fused params were packed for a different batch size"

    patches = jax.vmap(im2col)(xw).astype(jnp.bfloat16)   # layout + bf16 (halves DMA)
    kernel = functools.partial(_hybrid_kernel, B)
    out = pl.pallas_call(
        kernel,
        out_shape=jax.ShapeDtypeStruct((N, B, FORECAST * OBSERVABLE_DIM), jnp.float32),
        grid=(N,),
        in_specs=[
            pl.BlockSpec((None, B * CONTEXT, OBSERVABLE_DIM * KSIZE),
                         lambda n: (n, 0, 0)),
            pl.BlockSpec(wbf.shape, lambda n: (0, 0)),     # window-invariant, stays resident
            pl.BlockSpec(pk.shape, lambda n: (0, 0)),
        ],
        out_specs=pl.BlockSpec((None, B, FORECAST * OBSERVABLE_DIM),
                               lambda n: (n, 0, 0)),
        compiler_params=pltpu.CompilerParams(dimension_semantics=("parallel",)),
    )(patches, wbf, pk)
    out = out.reshape(N, B, FORECAST, OBSERVABLE_DIM)
    return out[0] if single else out


# --------------------------------------------------------------------------------------
# straight (unfused) JAX reference of the torch forward, for validating the fusions
# --------------------------------------------------------------------------------------
def _reference_forward(x, p):
    B = x.shape[0]
    w1col = jnp.transpose(p['conv1_w'], (1, 2, 0)).reshape(
        OBSERVABLE_DIM * KSIZE, HIDDEN_DIM)
    # same bf16 conv1 as the kernel so the comparison isolates the fusion algebra
    h = jnp.dot(im2col(x).astype(jnp.bfloat16), w1col.astype(jnp.bfloat16),
                preferred_element_type=jnp.float32) + p['conv1_b'][None, :]
    mean = jnp.mean(h, axis=0, keepdims=True)
    var = jnp.mean((h - mean) ** 2, axis=0, keepdims=True)
    h = (h - mean) * jax.lax.rsqrt(var + BN_EPS) * p['bn_gamma'][None, :] + p['bn_beta'][None, :]
    h = jnp.where(h > 0.0, h, jnp.exp(h) - 1.0)
    h = h.reshape(B, CONTEXT, HIDDEN_DIM)
    hp = jnp.pad(h, ((0, 0), (PAD, PAD), (0, 0)))
    z2 = []
    for m in range(LATENT_CHANNELS):
        w = p['conv2_w'][m]                                      # (H, K)
        outs = [jnp.sum(hp[:, s:s + KSIZE, :] * w.T[None, :, :], axis=(1, 2))
                for s in range(CONTEXT)]
        z2.append(jnp.stack(outs, axis=1) + p['conv2_b'][m])     # (B, Lc)
    angle = z2[0] @ p['ang_w'].T + p['ang_b']
    angv = z2[1] @ p['av_w'].T + p['av_b']
    z = jnp.concatenate([angle, angv], axis=1)                   # (B, 3)
    outs = []
    for _ in range(FORECAST):
        th = jnp.arctan2(z[:, 1], z[:, 0])
        td = z[:, 2]
        th = th + td * DT
        td = td + DT * (-(GRAVITY / L_PEND) * jnp.sin(th))
        z = jnp.stack([jnp.cos(th), jnp.sin(th), td], axis=1)
        hc = jnp.maximum(z @ p['c1_w'].T + p['c1_b'], 0.0)
        z = z + hc @ p['c2_w'].T + p['c2_b']
        outs.append(z)
    zf = jnp.stack(outs, axis=1)                                 # (B, F, 3)
    sp = jnp.asarray(SAMPLING_POSITIONS, jnp.float32)[None, None, :]
    return jnp.concatenate([zf[:, :, 1:2] * sp, zf[:, :, 0:1] * (-sp),
                            zf[:, :, 2:3] * sp], axis=-1)        # (B, F, 12)


if __name__ == "__main__":
    key = jax.random.PRNGKey(0)
    kx, kp = jax.random.split(key)
    B = 2
    # PyTorch-style Conv1d input: (batch, observable_dim, context)
    x = jax.random.normal(kx, (B, OBSERVABLE_DIM, CONTEXT), jnp.float32)
    params = make_params(kp)
    fused = fuse_params(params, B)

    out = jax.jit(hybrid_partially_informed)(x, fused)
    out = jax.block_until_ready(out)

    assert out.shape == (B, FORECAST, OBSERVABLE_DIM), out.shape
    assert out.dtype == jnp.float32
    assert bool(jnp.all(jnp.isfinite(out)))

    # sanity check of the host-side weight fusions against the unfused forward
    # (loose tolerance: only expected differences are accumulation order /
    # transcendental approximations propagated through the 8 dynamics steps).
    ref = _reference_forward(x, params)
    err = float(jnp.max(jnp.abs(out - ref)))
    assert err < 5e-2, f"mismatch vs unfused reference: max|diff|={err}"

    print("KERNEL_OK")
</pallas_src>

<mosaic_0001>
module attributes {stable_mosaic.version = 11 : i64} {
  func.func @_hybrid_kernel(%arg0: i32, %arg1: memref<1x66x396xbf16, #tpu.memory_space<vmem>>, %arg2: memref<396x64xbf16, #tpu.memory_space<vmem>>, %arg3: memref<272x128xf32, #tpu.memory_space<vmem>>, %arg4: memref<1x2x96xf32, #tpu.memory_space<vmem>>) attributes {dimension_semantics = [#tpu.dimension_semantics<parallel>], iteration_bounds = array<i64: 1>, scalar_prefetch = 0 : i64, scratch_operands = 0 : i64, tpu.core_type = #tpu.core_type<tc>, window_params = [{transform_indices = @transform_0, window_bounds = array<i64: 1, 66, 396>}, {pipeline_mode = #tpu.pipeline_mode<synchronous>, transform_indices = @transform_1, window_bounds = array<i64: 396, 64>}, {pipeline_mode = #tpu.pipeline_mode<synchronous>, transform_indices = @transform_2, window_bounds = array<i64: 272, 128>}, {transform_indices = @transform_3, window_bounds = array<i64: 1, 2, 96>}]} {
    %c0 = arith.constant 0 : index
    %c0_0 = arith.constant 0 : index
    %0 = vector.load %arg3[%c0, %c0_0] : memref<272x128xf32, #tpu.memory_space<vmem>>, vector<8x128xf32>
    %1 = vector.extract_strided_slice %0 {offsets = [0, 0], sizes = [1, 64], strides = [1, 1]} : vector<8x128xf32> to vector<1x64xf32>
    %2 = vector.extract_strided_slice %0 {offsets = [1, 0], sizes = [1, 64], strides = [1, 1]} : vector<8x128xf32> to vector<1x64xf32>
    %3 = vector.extract_strided_slice %0 {offsets = [2, 0], sizes = [1, 64], strides = [1, 1]} : vector<8x128xf32> to vector<1x64xf32>
    %4 = vector.extract_strided_slice %0 {offsets = [3, 0], sizes = [1, 3], strides = [1, 1]} : vector<8x128xf32> to vector<1x3xf32>
    %5 = vector.extract_strided_slice %0 {offsets = [4, 0], sizes = [1, 1], strides = [1, 1]} : vector<8x128xf32> to vector<1x1xf32>
    %6 = vector.extract_strided_slice %0 {offsets = [4, 1], sizes = [1, 1], strides = [1, 1]} : vector<8x128xf32> to vector<1x1xf32>
    %7 = vector.extract_strided_slice %0 {offsets = [4, 2], sizes = [1, 1], strides = [1, 1]} : vector<8x128xf32> to vector<1x1xf32>
    %8 = vector.extract_strided_slice %0 {offsets = [5, 0], sizes = [1, 64], strides = [1, 1]} : vector<8x128xf32> to vector<1x64xf32>
    %c0_1 = arith.constant 0 : index
    %c0_2 = arith.constant 0 : index
    %c0_3 = arith.constant 0 : index
    %9 = vector.load %arg1[%c0_1, %c0_2, %c0_3] : memref<1x66x396xbf16, #tpu.memory_space<vmem>>, vector<1x66x396xbf16>
    %10 = vector.shape_cast %9 : vector<1x66x396xbf16> to vector<66x396xbf16>
    %c0_4 = arith.constant 0 : index
    %c0_5 = arith.constant 0 : index
    %11 = vector.load %arg2[%c0_4, %c0_5] : memref<396x64xbf16, #tpu.memory_space<vmem>>, vector<396x64xbf16>
    %cst = arith.constant dense<0.000000e+00> : vector<66x64xf32>
    %12 = tpu.matmul %10, %11, %cst {dimension_numbers = #tpu.dot_dimension_numbers<[1], [0], [0], [1], [0, 0, 1, 1], [], []>} : vector<66x396xbf16>, vector<396x64xbf16>, vector<66x64xf32> -> vector<66x64xf32>
    %13 = vector.broadcast %1 : vector<1x64xf32> to vector<66x64xf32>
    %14 = arith.addf %12, %13 : vector<66x64xf32>
    %cst_6 = arith.constant dense<0.000000e+00> : vector<64xf32>
    %15 = vector.multi_reduction <add>, %14, %cst_6 [0] : vector<66x64xf32> to vector<64xf32>
    %16 = vector.shape_cast %15 : vector<64xf32> to vector<1x64xf32>
    %cst_7 = arith.constant 6.600000e+01 : f32
    %17 = vector.broadcast %cst_7 : f32 to vector<1x64xf32>
    %18 = arith.divf %16, %17 : vector<1x64xf32>
    %19 = vector.broadcast %18 : vector<1x64xf32> to vector<66x64xf32>
    %20 = arith.subf %14, %19 : vector<66x64xf32>
    %21 = arith.mulf %20, %20 : vector<66x64xf32>
    %cst_8 = arith.constant dense<0.000000e+00> : vector<64xf32>
    %22 = vector.multi_reduction <add>, %21, %cst_8 [0] : vector<66x64xf32> to vector<64xf32>
    %23 = vector.shape_cast %22 : vector<64xf32> to vector<1x64xf32>
    %cst_9 = arith.constant 6.600000e+01 : f32
    %24 = vector.broadcast %cst_9 : f32 to vector<1x64xf32>
    %25 = arith.divf %23, %24 : vector<1x64xf32>
    %cst_10 = arith.constant 9.99999974E-6 : f32
    %26 = vector.broadcast %cst_10 : f32 to vector<1x64xf32>
    %27 = arith.addf %25, %26 : vector<1x64xf32>
    %28 = math.rsqrt %27 : vector<1x64xf32>
    %29 = vector.broadcast %28 : vector<1x64xf32> to vector<66x64xf32>
    %30 = arith.mulf %20, %29 : vector<66x64xf32>
    %31 = vector.broadcast %2 : vector<1x64xf32> to vector<66x64xf32>
    %32 = arith.mulf %30, %31 : vector<66x64xf32>
    %33 = vector.broadcast %3 : vector<1x64xf32> to vector<66x64xf32>
    %34 = arith.addf %32, %33 : vector<66x64xf32>
    %cst_11 = arith.constant 0.000000e+00 : f32
    %35 = vector.broadcast %cst_11 : f32 to vector<66x64xf32>
    %36 = arith.cmpf ogt, %34, %35 : vector<66x64xf32>
    %37 = math.exp %34 : vector<66x64xf32>
    %cst_12 = arith.constant 1.000000e+00 : f32
    %38 = vector.broadcast %cst_12 : f32 to vector<66x64xf32>
    %39 = arith.subf %37, %38 : vector<66x64xf32>
    %40 = arith.select %36, %34, %39 : vector<66x64xi1>, vector<66x64xf32>
    %c8 = arith.constant 8 : index
    %c0_13 = arith.constant 0 : index
    %41 = vector.load %arg3[%c8, %c0_13] : memref<272x128xf32, #tpu.memory_space<vmem>>, vector<66x64xf32>
    %42 = arith.mulf %40, %41 : vector<66x64xf32>
    %cst_14 = arith.constant dense<0.000000e+00> : vector<66xf32>
    %43 = vector.multi_reduction <add>, %42, %cst_14 [1] : vector<66x64xf32> to vector<66xf32>
    %44 = vector.shape_cast %43 : vector<66xf32> to vector<66x1xf32>
    %c80 = arith.constant 80 : index
    %c0_15 = arith.constant 0 : index
    %45 = vector.load %arg3[%c80, %c0_15] : memref<272x128xf32, #tpu.memory_space<vmem>>, vector<66x64xf32>
    %46 = arith.mulf %40, %45 : vector<66x64xf32>
    %cst_16 = arith.constant dense<0.000000e+00> : vector<66xf32>
    %47 = vector.multi_reduction <add>, %46, %cst_16 [1] : vector<66x64xf32> to vector<66xf32>
    %48 = vector.shape_cast %47 : vector<66xf32> to vector<66x1xf32>
    %c152 = arith.constant 152 : index
    %c0_17 = arith.constant 0 : index
    %49 = vector.load %arg3[%c152, %c0_17] : memref<272x128xf32, #tpu.memory_space<vmem>>, vector<66x64xf32>
    %50 = arith.mulf %40, %49 : vector<66x64xf32>
    %cst_18 = arith.constant dense<0.000000e+00> : vector<66xf32>
    %51 = vector.multi_reduction <add>, %50, %cst_18 [1] : vector<66x64xf32> to vector<66xf32>
    %52 = vector.shape_cast %51 : vector<66xf32> to vector<66x1xf32>
    %53 = tpu.concatenate %44, %48, %52 in 1 : vector<66x1xf32>, vector<66x1xf32>, vector<66x1xf32> -> vector<66x3xf32>
    %c264 = arith.constant 264 : index
    %c0_19 = arith.constant 0 : index
    %54 = vector.load %arg3[%c264, %c0_19] : memref<272x128xf32, #tpu.memory_space<vmem>>, vector<2x66xf32>
    %cst_20 = arith.constant dense<0.000000e+00> : vector<2x3xf32>
    %55 = tpu.matmul %54, %53, %cst_20 {dimension_numbers = #tpu.dot_dimension_numbers<[1], [0], [0], [1], [0, 0, 1, 1], [], []>} : vector<2x66xf32>, vector<66x3xf32>, vector<2x3xf32> -> vector<2x3xf32>
    %56 = vector.broadcast %4 : vector<1x3xf32> to vector<2x3xf32>
    %57 = arith.addf %55, %56 : vector<2x3xf32>
    %c224 = arith.constant 224 : index
    %c0_21 = arith.constant 0 : index
    %58 = vector.load %arg3[%c224, %c0_21] : memref<272x128xf32, #tpu.memory_space<vmem>>, vector<3x64xf32>
    %c232 = arith.constant 232 : index
    %c0_22 = arith.constant 0 : index
    %59 = vector.load %arg3[%c232, %c0_22] : memref<272x128xf32, #tpu.memory_space<vmem>>, vector<3x64xf32>
    %60 = vector.extract_strided_slice %58 {offsets = [0, 0], sizes = [1, 64], strides = [1, 1]} : vector<3x64xf32> to vector<1x64xf32>
    %61 = vector.extract_strided_slice %58 {offsets = [1, 0], sizes = [1, 64], strides = [1, 1]} : vector<3x64xf32> to vector<1x64xf32>
    %62 = vector.extract_strided_slice %58 {offsets = [2, 0], sizes = [1, 64], strides = [1, 1]} : vector<3x64xf32> to vector<1x64xf32>
    %63 = vector.extract_strided_slice %59 {offsets = [0, 0], sizes = [1, 64], strides = [1, 1]} : vector<3x64xf32> to vector<1x64xf32>
    %64 = vector.extract_strided_slice %59 {offsets = [1, 0], sizes = [1, 64], strides = [1, 1]} : vector<3x64xf32> to vector<1x64xf32>
    %65 = vector.extract_strided_slice %59 {offsets = [2, 0], sizes = [1, 64], strides = [1, 1]} : vector<3x64xf32> to vector<1x64xf32>
    %66 = vector.extract_strided_slice %57 {offsets = [0, 0], sizes = [2, 1], strides = [1, 1]} : vector<2x3xf32> to vector<2x1xf32>
    %67 = vector.extract_strided_slice %57 {offsets = [0, 1], sizes = [2, 1], strides = [1, 1]} : vector<2x3xf32> to vector<2x1xf32>
    %68 = vector.extract_strided_slice %57 {offsets = [0, 2], sizes = [2, 1], strides = [1, 1]} : vector<2x3xf32> to vector<2x1xf32>
    %69 = arith.mulf %66, %66 : vector<2x1xf32>
    %70 = arith.mulf %67, %67 : vector<2x1xf32>
    %71 = arith.addf %69, %70 : vector<2x1xf32>
    %cst_23 = arith.constant 1.000000e-30 : f32
    %72 = vector.broadcast %cst_23 : f32 to vector<2x1xf32>
    %73 = arith.addf %71, %72 : vector<2x1xf32>
    %74 = math.rsqrt %73 : vector<2x1xf32>
    %cst_24 = arith.constant 0.000000e+00 : f32
    %75 = vector.broadcast %cst_24 : f32 to vector<2x1xf32>
    %76 = arith.cmpf ogt, %71, %75 : vector<2x1xf32>
    %77 = arith.mulf %66, %74 : vector<2x1xf32>
    %cst_25 = arith.constant 1.000000e+00 : f32
    %78 = vector.broadcast %cst_25 : f32 to vector<2x1xf32>
    %79 = arith.select %76, %77, %78 : vector<2x1xi1>, vector<2x1xf32>
    %80 = arith.mulf %67, %74 : vector<2x1xf32>
    %cst_26 = arith.constant 0.000000e+00 : f32
    %81 = vector.broadcast %cst_26 : f32 to vector<2x1xf32>
    %82 = arith.select %76, %80, %81 : vector<2x1xi1>, vector<2x1xf32>
    %cst_27 = arith.constant 1.000000e-01 : f32
    %83 = vector.broadcast %cst_27 : f32 to vector<2x1xf32>
    %84 = arith.mulf %68, %83 : vector<2x1xf32>
    %85 = math.cos %84 : vector<2x1xf32>
    %86 = math.sin %84 : vector<2x1xf32>
    %87 = arith.mulf %79, %85 : vector<2x1xf32>
    %88 = arith.mulf %82, %86 : vector<2x1xf32>
    %89 = arith.subf %87, %88 : vector<2x1xf32>
    %90 = arith.mulf %82, %85 : vector<2x1xf32>
    %91 = arith.mulf %79, %86 : vector<2x1xf32>
    %92 = arith.addf %90, %91 : vector<2x1xf32>
    %cst_28 = arith.constant 9.810000e-01 : f32
    %93 = vector.broadcast %cst_28 : f32 to vector<2x1xf32>
    %94 = arith.mulf %93, %92 : vector<2x1xf32>
    %95 = arith.subf %68, %94 : vector<2x1xf32>
    %96 = vector.broadcast %89 : vector<2x1xf32> to vector<2x64xf32>
    %97 = vector.broadcast %60 : vector<1x64xf32> to vector<2x64xf32>
    %98 = arith.mulf %96, %97 : vector<2x64xf32>
    %99 = vector.broadcast %92 : vector<2x1xf32> to vector<2x64xf32>
    %100 = vector.broadcast %61 : vector<1x64xf32> to vector<2x64xf32>
    %101 = arith.mulf %99, %100 : vector<2x64xf32>
    %102 = arith.addf %98, %101 : vector<2x64xf32>
    %103 = vector.broadcast %95 : vector<2x1xf32> to vector<2x64xf32>
    %104 = vector.broadcast %62 : vector<1x64xf32> to vector<2x64xf32>
    %105 = arith.mulf %103, %104 : vector<2x64xf32>
    %106 = arith.addf %102, %105 : vector<2x64xf32>
    %107 = vector.broadcast %8 : vector<1x64xf32> to vector<2x64xf32>
    %108 = arith.addf %106, %107 : vector<2x64xf32>
    %cst_29 = arith.constant 0.000000e+00 : f32
    %109 = vector.broadcast %cst_29 : f32 to vector<2x64xf32>
    %110 = arith.maximumf %108, %109 : vector<2x64xf32>
    %111 = vector.broadcast %63 : vector<1x64xf32> to vector<2x64xf32>
    %112 = arith.mulf %110, %111 : vector<2x64xf32>
    %cst_30 = arith.constant dense<0.000000e+00> : vector<2xf32>
    %113 = vector.multi_reduction <add>, %112, %cst_30 [1] : vector<2x64xf32> to vector<2xf32>
    %114 = vector.shape_cast %113 : vector<2xf32> to vector<2x1xf32>
    %115 = arith.addf %89, %114 : vector<2x1xf32>
    %116 = vector.broadcast %5 : vector<1x1xf32> to vector<2x1xf32>
    %117 = arith.addf %115, %116 : vector<2x1xf32>
    %118 = vector.broadcast %64 : vector<1x64xf32> to vector<2x64xf32>
    %119 = arith.mulf %110, %118 : vector<2x64xf32>
    %cst_31 = arith.constant dense<0.000000e+00> : vector<2xf32>
    %120 = vector.multi_reduction <add>, %119, %cst_31 [1] : vector<2x64xf32> to vector<2xf32>
    %121 = vector.shape_cast %120 : vector<2xf32> to vector<2x1xf32>
    %122 = arith.addf %92, %121 : vector<2x1xf32>
    %123 = vector.broadcast %6 : vector<1x1xf32> to vector<2x1xf32>
    %124 = arith.addf %122, %123 : vector<2x1xf32>
    %125 = vector.broadcast %65 : vector<1x64xf32> to vector<2x64xf32>
    %126 = arith.mulf %110, %125 : vector<2x64xf32>
    %cst_32 = arith.constant dense<0.000000e+00> : vector<2xf32>
    %127 = vector.multi_reduction <add>, %126, %cst_32 [1] : vector<2x64xf32> to vector<2xf32>
    %128 = vector.shape_cast %127 : vector<2xf32> to vector<2x1xf32>
    %129 = arith.addf %95, %128 : vector<2x1xf32>
    %130 = vector.broadcast %7 : vector<1x1xf32> to vector<2x1xf32>
    %131 = arith.addf %129, %130 : vector<2x1xf32>
    %132 = arith.mulf %117, %117 : vector<2x1xf32>
    %133 = arith.mulf %124, %124 : vector<2x1xf32>
    %134 = arith.addf %132, %133 : vector<2x1xf32>
    %cst_33 = arith.constant 1.000000e-30 : f32
    %135 = vector.broadcast %cst_33 : f32 to vector<2x1xf32>
    %136 = arith.addf %134, %135 : vector<2x1xf32>
    %137 = math.rsqrt %136 : vector<2x1xf32>
    %cst_34 = arith.constant 0.000000e+00 : f32
    %138 = vector.broadcast %cst_34 : f32 to vector<2x1xf32>
    %139 = arith.cmpf ogt, %134, %138 : vector<2x1xf32>
    %140 = arith.mulf %117, %137 : vector<2x1xf32>
    %cst_35 = arith.constant 1.000000e+00 : f32
    %141 = vector.broadcast %cst_35 : f32 to vector<2x1xf32>
    %142 = arith.select %139, %140, %141 : vector<2x1xi1>, vector<2x1xf32>
    %143 = arith.mulf %124, %137 : vector<2x1xf32>
    %cst_36 = arith.constant 0.000000e+00 : f32
    %144 = vector.broadcast %cst_36 : f32 to vector<2x1xf32>
    %145 = arith.select %139, %143, %144 : vector<2x1xi1>, vector<2x1xf32>
    %cst_37 = arith.constant 1.000000e-01 : f32
    %146 = vector.broadcast %cst_37 : f32 to vector<2x1xf32>
    %147 = arith.mulf %131, %146 : vector<2x1xf32>
    %148 = math.cos %147 : vector<2x1xf32>
    %149 = math.sin %147 : vector<2x1xf32>
    %150 = arith.mulf %142, %148 : vector<2x1xf32>
    %151 = arith.mulf %145, %149 : vector<2x1xf32>
    %152 = arith.subf %150, %151 : vector<2x1xf32>
    %153 = arith.mulf %145, %148 : vector<2x1xf32>
    %154 = arith.mulf %142, %149 : vector<2x1xf32>
    %155 = arith.addf %153, %154 : vector<2x1xf32>
    %cst_38 = arith.constant 9.810000e-01 : f32
    %156 = vector.broadcast %cst_38 : f32 to vector<2x1xf32>
    %157 = arith.mulf %156, %155 : vector<2x1xf32>
    %158 = arith.subf %131, %157 : vector<2x1xf32>
    %159 = vector.broadcast %152 : vector<2x1xf32> to vector<2x64xf32>
    %160 = vector.broadcast %60 : vector<1x64xf32> to vector<2x64xf32>
    %161 = arith.mulf %159, %160 : vector<2x64xf32>
    %162 = vector.broadcast %155 : vector<2x1xf32> to vector<2x64xf32>
    %163 = vector.broadcast %61 : vector<1x64xf32> to vector<2x64xf32>
    %164 = arith.mulf %162, %163 : vector<2x64xf32>
    %165 = arith.addf %161, %164 : vector<2x64xf32>
    %166 = vector.broadcast %158 : vector<2x1xf32> to vector<2x64xf32>
    %167 = vector.broadcast %62 : vector<1x64xf32> to vector<2x64xf32>
    %168 = arith.mulf %166, %167 : vector<2x64xf32>
    %169 = arith.addf %165, %168 : vector<2x64xf32>
    %170 = vector.broadcast %8 : vector<1x64xf32> to vector<2x64xf32>
    %171 = arith.addf %169, %170 : vector<2x64xf32>
    %cst_39 = arith.constant 0.000000e+00 : f32
    %172 = vector.broadcast %cst_39 : f32 to vector<2x64xf32>
    %173 = arith.maximumf %171, %172 : vector<2x64xf32>
    %174 = vector.broadcast %63 : vector<1x64xf32> to vector<2x64xf32>
    %175 = arith.mulf %173, %174 : vector<2x64xf32>
    %cst_40 = arith.constant dense<0.000000e+00> : vector<2xf32>
    %176 = vector.multi_reduction <add>, %175, %cst_40 [1] : vector<2x64xf32> to vector<2xf32>
    %177 = vector.shape_cast %176 : vector<2xf32> to vector<2x1xf32>
    %178 = arith.addf %152, %177 : vector<2x1xf32>
    %179 = vector.broadcast %5 : vector<1x1xf32> to vector<2x1xf32>
    %180 = arith.addf %178, %179 : vector<2x1xf32>
    %181 = vector.broadcast %64 : vector<1x64xf32> to vector<2x64xf32>
    %182 = arith.mulf %173, %181 : vector<2x64xf32>
    %cst_41 = arith.constant dense<0.000000e+00> : vector<2xf32>
    %183 = vector.multi_reduction <add>, %182, %cst_41 [1] : vector<2x64xf32> to vector<2xf32>
    %184 = vector.shape_cast %183 : vector<2xf32> to vector<2x1xf32>
    %185 = arith.addf %155, %184 : vector<2x1xf32>
    %186 = vector.broadcast %6 : vector<1x1xf32> to vector<2x1xf32>
    %187 = arith.addf %185, %186 : vector<2x1xf32>
    %188 = vector.broadcast %65 : vector<1x64xf32> to vector<2x64xf32>
    %189 = arith.mulf %173, %188 : vector<2x64xf32>
    %cst_42 = arith.constant dense<0.000000e+00> : vector<2xf32>
    %190 = vector.multi_reduction <add>, %189, %cst_42 [1] : vector<2x64xf32> to vector<2xf32>
    %191 = vector.shape_cast %190 : vector<2xf32> to vector<2x1xf32>
    %192 = arith.addf %158, %191 : vector<2x1xf32>
    %193 = vector.broadcast %7 : vector<1x1xf32> to vector<2x1xf32>
    %194 = arith.addf %192, %193 : vector<2x1xf32>
    %195 = arith.mulf %180, %180 : vector<2x1xf32>
    %196 = arith.mulf %187, %187 : vector<2x1xf32>
    %197 = arith.addf %195, %196 : vector<2x1xf32>
    %cst_43 = arith.constant 1.000000e-30 : f32
    %198 = vector.broadcast %cst_43 : f32 to vector<2x1xf32>
    %199 = arith.addf %197, %198 : vector<2x1xf32>
    %200 = math.rsqrt %199 : vector<2x1xf32>
    %cst_44 = arith.constant 0.000000e+00 : f32
    %201 = vector.broadcast %cst_44 : f32 to vector<2x1xf32>
    %202 = arith.cmpf ogt, %197, %201 : vector<2x1xf32>
    %203 = arith.mulf %180, %200 : vector<2x1xf32>
    %cst_45 = arith.constant 1.000000e+00 : f32
    %204 = vector.broadcast %cst_45 : f32 to vector<2x1xf32>
    %205 = arith.select %202, %203, %204 : vector<2x1xi1>, vector<2x1xf32>
    %206 = arith.mulf %187, %200 : vector<2x1xf32>
    %cst_46 = arith.constant 0.000000e+00 : f32
    %207 = vector.broadcast %cst_46 : f32 to vector<2x1xf32>
    %208 = arith.select %202, %206, %207 : vector<2x1xi1>, vector<2x1xf32>
    %cst_47 = arith.constant 1.000000e-01 : f32
    %209 = vector.broadcast %cst_47 : f32 to vector<2x1xf32>
    %210 = arith.mulf %194, %209 : vector<2x1xf32>
    %211 = math.cos %210 : vector<2x1xf32>
    %212 = math.sin %210 : vector<2x1xf32>
    %213 = arith.mulf %205, %211 : vector<2x1xf32>
    %214 = arith.mulf %208, %212 : vector<2x1xf32>
    %215 = arith.subf %213, %214 : vector<2x1xf32>
    %216 = arith.mulf %208, %211 : vector<2x1xf32>
    %217 = arith.mulf %205, %212 : vector<2x1xf32>
    %218 = arith.addf %216, %217 : vector<2x1xf32>
    %cst_48 = arith.constant 9.810000e-01 : f32
    %219 = vector.broadcast %cst_48 : f32 to vector<2x1xf32>
    %220 = arith.mulf %219, %218 : vector<2x1xf32>
    %221 = arith.subf %194, %220 : vector<2x1xf32>
    %222 = vector.broadcast %215 : vector<2x1xf32> to vector<2x64xf32>
    %223 = vector.broadcast %60 : vector<1x64xf32> to vector<2x64xf32>
    %224 = arith.mulf %222, %223 : vector<2x64xf32>
    %225 = vector.broadcast %218 : vector<2x1xf32> to vector<2x64xf32>
    %226 = vector.broadcast %61 : vector<1x64xf32> to vector<2x64xf32>
    %227 = arith.mulf %225, %226 : vector<2x64xf32>
    %228 = arith.addf %224, %227 : vector<2x64xf32>
    %229 = vector.broadcast %221 : vector<2x1xf32> to vector<2x64xf32>
    %230 = vector.broadcast %62 : vector<1x64xf32> to vector<2x64xf32>
    %231 = arith.mulf %229, %230 : vector<2x64xf32>
    %232 = arith.addf %228, %231 : vector<2x64xf32>
    %233 = vector.broadcast %8 : vector<1x64xf32> to vector<2x64xf32>
    %234 = arith.addf %232, %233 : vector<2x64xf32>
    %cst_49 = arith.constant 0.000000e+00 : f32
    %235 = vector.broadcast %cst_49 : f32 to vector<2x64xf32>
    %236 = arith.maximumf %234, %235 : vector<2x64xf32>
    %237 = vector.broadcast %63 : vector<1x64xf32> to vector<2x64xf32>
    %238 = arith.mulf %236, %237 : vector<2x64xf32>
    %cst_50 = arith.constant dense<0.000000e+00> : vector<2xf32>
    %239 = vector.multi_reduction <add>, %238, %cst_50 [1] : vector<2x64xf32> to vector<2xf32>
    %240 = vector.shape_cast %239 : vector<2xf32> to vector<2x1xf32>
    %241 = arith.addf %215, %240 : vector<2x1xf32>
    %242 = vector.broadcast %5 : vector<1x1xf32> to vector<2x1xf32>
    %243 = arith.addf %241, %242 : vector<2x1xf32>
    %244 = vector.broadcast %64 : vector<1x64xf32> to vector<2x64xf32>
    %245 = arith.mulf %236, %244 : vector<2x64xf32>
    %cst_51 = arith.constant dense<0.000000e+00> : vector<2xf32>
    %246 = vector.multi_reduction <add>, %245, %cst_51 [1] : vector<2x64xf32> to vector<2xf32>
    %247 = vector.shape_cast %246 : vector<2xf32> to vector<2x1xf32>
    %248 = arith.addf %218, %247 : vector<2x1xf32>
    %249 = vector.broadcast %6 : vector<1x1xf32> to vector<2x1xf32>
    %250 = arith.addf %248, %249 : vector<2x1xf32>
    %251 = vector.broadcast %65 : vector<1x64xf32> to vector<2x64xf32>
    %252 = arith.mulf %236, %251 : vector<2x64xf32>
    %cst_52 = arith.constant dense<0.000000e+00> : vector<2xf32>
    %253 = vector.multi_reduction <add>, %252, %cst_52 [1] : vector<2x64xf32> to vector<2xf32>
    %254 = vector.shape_cast %253 : vector<2xf32> to vector<2x1xf32>
    %255 = arith.addf %221, %254 : vector<2x1xf32>
    %256 = vector.broadcast %7 : vector<1x1xf32> to vector<2x1xf32>
    %257 = arith.addf %255, %256 : vector<2x1xf32>
    %258 = arith.mulf %243, %243 : vector<2x1xf32>
    %259 = arith.mulf %250, %250 : vector<2x1xf32>
    %260 = arith.addf %258, %259 : vector<2x1xf32>
    %cst_53 = arith.constant 1.000000e-30 : f32
    %261 = vector.broadcast %cst_53 : f32 to vector<2x1xf32>
    %262 = arith.addf %260, %261 : vector<2x1xf32>
    %263 = math.rsqrt %262 : vector<2x1xf32>
    %cst_54 = arith.constant 0.000000e+00 : f32
    %264 = vector.broadcast %cst_54 : f32 to vector<2x1xf32>
    %265 = arith.cmpf ogt, %260, %264 : vector<2x1xf32>
    %266 = arith.mulf %243, %263 : vector<2x1xf32>
    %cst_55 = arith.constant 1.000000e+00 : f32
    %267 = vector.broadcast %cst_55 : f32 to vector<2x1xf32>
    %268 = arith.select %265, %266, %267 : vector<2x1xi1>, vector<2x1xf32>
    %269 = arith.mulf %250, %263 : vector<2x1xf32>
    %cst_56 = arith.constant 0.000000e+00 : f32
    %270 = vector.broadcast %cst_56 : f32 to vector<2x1xf32>
    %271 = arith.select %265, %269, %270 : vector<2x1xi1>, vector<2x1xf32>
    %cst_57 = arith.constant 1.000000e-01 : f32
    %272 = vector.broadcast %cst_57 : f32 to vector<2x1xf32>
    %273 = arith.mulf %257, %272 : vector<2x1xf32>
    %274 = math.cos %273 : vector<2x1xf32>
    %275 = math.sin %273 : vector<2x1xf32>
    %276 = arith.mulf %268, %274 : vector<2x1xf32>
    %277 = arith.mulf %271, %275 : vector<2x1xf32>
    %278 = arith.subf %276, %277 : vector<2x1xf32>
    %279 = arith.mulf %271, %274 : vector<2x1xf32>
    %280 = arith.mulf %268, %275 : vector<2x1xf32>
    %281 = arith.addf %279, %280 : vector<2x1xf32>
    %cst_58 = arith.constant 9.810000e-01 : f32
    %282 = vector.broadcast %cst_58 : f32 to vector<2x1xf32>
    %283 = arith.mulf %282, %281 : vector<2x1xf32>
    %284 = arith.subf %257, %283 : vector<2x1xf32>
    %285 = vector.broadcast %278 : vector<2x1xf32> to vector<2x64xf32>
    %286 = vector.broadcast %60 : vector<1x64xf32> to vector<2x64xf32>
    %287 = arith.mulf %285, %286 : vector<2x64xf32>
    %288 = vector.broadcast %281 : vector<2x1xf32> to vector<2x64xf32>
    %289 = vector.broadcast %61 : vector<1x64xf32> to vector<2x64xf32>
    %290 = arith.mulf %288, %289 : vector<2x64xf32>
    %291 = arith.addf %287, %290 : vector<2x64xf32>
    %292 = vector.broadcast %284 : vector<2x1xf32> to vector<2x64xf32>
    %293 = vector.broadcast %62 : vector<1x64xf32> to vector<2x64xf32>
    %294 = arith.mulf %292, %293 : vector<2x64xf32>
    %295 = arith.addf %291, %294 : vector<2x64xf32>
    %296 = vector.broadcast %8 : vector<1x64xf32> to vector<2x64xf32>
    %297 = arith.addf %295, %296 : vector<2x64xf32>
    %cst_59 = arith.constant 0.000000e+00 : f32
    %298 = vector.broadcast %cst_59 : f32 to vector<2x64xf32>
    %299 = arith.maximumf %297, %298 : vector<2x64xf32>
    %300 = vector.broadcast %63 : vector<1x64xf32> to vector<2x64xf32>
    %301 = arith.mulf %299, %300 : vector<2x64xf32>
    %cst_60 = arith.constant dense<0.000000e+00> : vector<2xf32>
    %302 = vector.multi_reduction <add>, %301, %cst_60 [1] : vector<2x64xf32> to vector<2xf32>
    %303 = vector.shape_cast %302 : vector<2xf32> to vector<2x1xf32>
    %304 = arith.addf %278, %303 : vector<2x1xf32>
    %305 = vector.broadcast %5 : vector<1x1xf32> to vector<2x1xf32>
    %306 = arith.addf %304, %305 : vector<2x1xf32>
    %307 = vector.broadcast %64 : vector<1x64xf32> to vector<2x64xf32>
    %308 = arith.mulf %299, %307 : vector<2x64xf32>
    %cst_61 = arith.constant dense<0.000000e+00> : vector<2xf32>
    %309 = vector.multi_reduction <add>, %308, %cst_61 [1] : vector<2x64xf32> to vector<2xf32>
    %310 = vector.shape_cast %309 : vector<2xf32> to vector<2x1xf32>
    %311 = arith.addf %281, %310 : vector<2x1xf32>
    %312 = vector.broadcast %6 : vector<1x1xf32> to vector<2x1xf32>
    %313 = arith.addf %311, %312 : vector<2x1xf32>
    %314 = vector.broadcast %65 : vector<1x64xf32> to vector<2x64xf32>
    %315 = arith.mulf %299, %314 : vector<2x64xf32>
    %cst_62 = arith.constant dense<0.000000e+00> : vector<2xf32>
    %316 = vector.multi_reduction <add>, %315, %cst_62 [1] : vector<2x64xf32> to vector<2xf32>
    %317 = vector.shape_cast %316 : vector<2xf32> to vector<2x1xf32>
    %318 = arith.addf %284, %317 : vector<2x1xf32>
    %319 = vector.broadcast %7 : vector<1x1xf32> to vector<2x1xf32>
    %320 = arith.addf %318, %319 : vector<2x1xf32>
    %321 = arith.mulf %306, %306 : vector<2x1xf32>
    %322 = arith.mulf %313, %313 : vector<2x1xf32>
    %323 = arith.addf %321, %322 : vector<2x1xf32>
    %cst_63 = arith.constant 1.000000e-30 : f32
    %324 = vector.broadcast %cst_63 : f32 to vector<2x1xf32>
    %325 = arith.addf %323, %324 : vector<2x1xf32>
    %326 = math.rsqrt %325 : vector<2x1xf32>
    %cst_64 = arith.constant 0.000000e+00 : f32
    %327 = vector.broadcast %cst_64 : f32 to vector<2x1xf32>
    %328 = arith.cmpf ogt, %323, %327 : vector<2x1xf32>
    %329 = arith.mulf %306, %326 : vector<2x1xf32>
    %cst_65 = arith.constant 1.000000e+00 : f32
    %330 = vector.broadcast %cst_65 : f32 to vector<2x1xf32>
    %331 = arith.select %328, %329, %330 : vector<2x1xi1>, vector<2x1xf32>
    %332 = arith.mulf %313, %326 : vector<2x1xf32>
    %cst_66 = arith.constant 0.000000e+00 : f32
    %333 = vector.broadcast %cst_66 : f32 to vector<2x1xf32>
    %334 = arith.select %328, %332, %333 : vector<2x1xi1>, vector<2x1xf32>
    %cst_67 = arith.constant 1.000000e-01 : f32
    %335 = vector.broadcast %cst_67 : f32 to vector<2x1xf32>
    %336 = arith.mulf %320, %335 : vector<2x1xf32>
    %337 = math.cos %336 : vector<2x1xf32>
    %338 = math.sin %336 : vector<2x1xf32>
    %339 = arith.mulf %331, %337 : vector<2x1xf32>
    %340 = arith.mulf %334, %338 : vector<2x1xf32>
    %341 = arith.subf %339, %340 : vector<2x1xf32>
    %342 = arith.mulf %334, %337 : vector<2x1xf32>
    %343 = arith.mulf %331, %338 : vector<2x1xf32>
    %344 = arith.addf %342, %343 : vector<2x1xf32>
    %cst_68 = arith.constant 9.810000e-01 : f32
    %345 = vector.broadcast %cst_68 : f32 to vector<2x1xf32>
    %346 = arith.mulf %345, %344 : vector<2x1xf32>
    %347 = arith.subf %320, %346 : vector<2x1xf32>
    %348 = vector.broadcast %341 : vector<2x1xf32> to vector<2x64xf32>
    %349 = vector.broadcast %60 : vector<1x64xf32> to vector<2x64xf32>
    %350 = arith.mulf %348, %349 : vector<2x64xf32>
    %351 = vector.broadcast %344 : vector<2x1xf32> to vector<2x64xf32>
    %352 = vector.broadcast %61 : vector<1x64xf32> to vector<2x64xf32>
    %353 = arith.mulf %351, %352 : vector<2x64xf32>
    %354 = arith.addf %350, %353 : vector<2x64xf32>
    %355 = vector.broadcast %347 : vector<2x1xf32> to vector<2x64xf32>
    %356 = vector.broadcast %62 : vector<1x64xf32> to vector<2x64xf32>
    %357 = arith.mulf %355, %356 : vector<2x64xf32>
    %358 = arith.addf %354, %357 : vector<2x64xf32>
    %359 = vector.broadcast %8 : vector<1x64xf32> to vector<2x64xf32>
    %360 = arith.addf %358, %359 : vector<2x64xf32>
    %cst_69 = arith.constant 0.000000e+00 : f32
    %361 = vector.broadcast %cst_69 : f32 to vector<2x64xf32>
    %362 = arith.maximumf %360, %361 : vector<2x64xf32>
    %363 = vector.broadcast %63 : vector<1x64xf32> to vector<2x64xf32>
    %364 = arith.mulf %362, %363 : vector<2x64xf32>
    %cst_70 = arith.constant dense<0.000000e+00> : vector<2xf32>
    %365 = vector.multi_reduction <add>, %364, %cst_70 [1] : vector<2x64xf32> to vector<2xf32>
    %366 = vector.shape_cast %365 : vector<2xf32> to vector<2x1xf32>
    %367 = arith.addf %341, %366 : vector<2x1xf32>
    %368 = vector.broadcast %5 : vector<1x1xf32> to vector<2x1xf32>
    %369 = arith.addf %367, %368 : vector<2x1xf32>
    %370 = vector.broadcast %64 : vector<1x64xf32> to vector<2x64xf32>
    %371 = arith.mulf %362, %370 : vector<2x64xf32>
    %cst_71 = arith.constant dense<0.000000e+00> : vector<2xf32>
    %372 = vector.multi_reduction <add>, %371, %cst_71 [1] : vector<2x64xf32> to vector<2xf32>
    %373 = vector.shape_cast %372 : vector<2xf32> to vector<2x1xf32>
    %374 = arith.addf %344, %373 : vector<2x1xf32>
    %375 = vector.broadcast %6 : vector<1x1xf32> to vector<2x1xf32>
    %376 = arith.addf %374, %375 : vector<2x1xf32>
    %377 = vector.broadcast %65 : vector<1x64xf32> to vector<2x64xf32>
    %378 = arith.mulf %362, %377 : vector<2x64xf32>
    %cst_72 = arith.constant dense<0.000000e+00> : vector<2xf32>
    %379 = vector.multi_reduction <add>, %378, %cst_72 [1] : vector<2x64xf32> to vector<2xf32>
    %380 = vector.shape_cast %379 : vector<2xf32> to vector<2x1xf32>
    %381 = arith.addf %347, %380 : vector<2x1xf32>
    %382 = vector.broadcast %7 : vector<1x1xf32> to vector<2x1xf32>
    %383 = arith.addf %381, %382 : vector<2x1xf32>
    %384 = arith.mulf %369, %369 : vector<2x1xf32>
    %385 = arith.mulf %376, %376 : vector<2x1xf32>
    %386 = arith.addf %384, %385 : vector<2x1xf32>
    %cst_73 = arith.constant 1.000000e-30 : f32
    %387 = vector.broadcast %cst_73 : f32 to vector<2x1xf32>
    %388 = arith.addf %386, %387 : vector<2x1xf32>
    %389 = math.rsqrt %388 : vector<2x1xf32>
    %cst_74 = arith.constant 0.000000e+00 : f32
    %390 = vector.broadcast %cst_74 : f32 to vector<2x1xf32>
    %391 = arith.cmpf ogt, %386, %390 : vector<2x1xf32>
    %392 = arith.mulf %369, %389 : vector<2x1xf32>
    %cst_75 = arith.constant 1.000000e+00 : f32
    %393 = vector.broadcast %cst_75 : f32 to vector<2x1xf32>
    %394 = arith.select %391, %392, %393 : vector<2x1xi1>, vector<2x1xf32>
    %395 = arith.mulf %376, %389 : vector<2x1xf32>
    %cst_76 = arith.constant 0.000000e+00 : f32
    %396 = vector.broadcast %cst_76 : f32 to vector<2x1xf32>
    %397 = arith.select %391, %395, %396 : vector<2x1xi1>, vector<2x1xf32>
    %cst_77 = arith.constant 1.000000e-01 : f32
    %398 = vector.broadcast %cst_77 : f32 to vector<2x1xf32>
    %399 = arith.mulf %383, %398 : vector<2x1xf32>
    %400 = math.cos %399 : vector<2x1xf32>
    %401 = math.sin %399 : vector<2x1xf32>
    %402 = arith.mulf %394, %400 : vector<2x1xf32>
    %403 = arith.mulf %397, %401 : vector<2x1xf32>
    %404 = arith.subf %402, %403 : vector<2x1xf32>
    %405 = arith.mulf %397, %400 : vector<2x1xf32>
    %406 = arith.mulf %394, %401 : vector<2x1xf32>
    %407 = arith.addf %405, %406 : vector<2x1xf32>
    %cst_78 = arith.constant 9.810000e-01 : f32
    %408 = vector.broadcast %cst_78 : f32 to vector<2x1xf32>
    %409 = arith.mulf %408, %407 : vector<2x1xf32>
    %410 = arith.subf %383, %409 : vector<2x1xf32>
    %411 = vector.broadcast %404 : vector<2x1xf32> to vector<2x64xf32>
    %412 = vector.broadcast %60 : vector<1x64xf32> to vector<2x64xf32>
    %413 = arith.mulf %411, %412 : vector<2x64xf32>
    %414 = vector.broadcast %407 : vector<2x1xf32> to vector<2x64xf32>
    %415 = vector.broadcast %61 : vector<1x64xf32> to vector<2x64xf32>
    %416 = arith.mulf %414, %415 : vector<2x64xf32>
    %417 = arith.addf %413, %416 : vector<2x64xf32>
    %418 = vector.broadcast %410 : vector<2x1xf32> to vector<2x64xf32>
    %419 = vector.broadcast %62 : vector<1x64xf32> to vector<2x64xf32>
    %420 = arith.mulf %418, %419 : vector<2x64xf32>
    %421 = arith.addf %417, %420 : vector<2x64xf32>
    %422 = vector.broadcast %8 : vector<1x64xf32> to vector<2x64xf32>
    %423 = arith.addf %421, %422 : vector<2x64xf32>
    %cst_79 = arith.constant 0.000000e+00 : f32
    %424 = vector.broadcast %cst_79 : f32 to vector<2x64xf32>
    %425 = arith.maximumf %423, %424 : vector<2x64xf32>
    %426 = vector.broadcast %63 : vector<1x64xf32> to vector<2x64xf32>
    %427 = arith.mulf %425, %426 : vector<2x64xf32>
    %cst_80 = arith.constant dense<0.000000e+00> : vector<2xf32>
    %428 = vector.multi_reduction <add>, %427, %cst_80 [1] : vector<2x64xf32> to vector<2xf32>
    %429 = vector.shape_cast %428 : vector<2xf32> to vector<2x1xf32>
    %430 = arith.addf %404, %429 : vector<2x1xf32>
    %431 = vector.broadcast %5 : vector<1x1xf32> to vector<2x1xf32>
    %432 = arith.addf %430, %431 : vector<2x1xf32>
    %433 = vector.broadcast %64 : vector<1x64xf32> to vector<2x64xf32>
    %434 = arith.mulf %425, %433 : vector<2x64xf32>
    %cst_81 = arith.constant dense<0.000000e+00> : vector<2xf32>
    %435 = vector.multi_reduction <add>, %434, %cst_81 [1] : vector<2x64xf32> to vector<2xf32>
    %436 = vector.shape_cast %435 : vector<2xf32> to vector<2x1xf32>
    %437 = arith.addf %407, %436 : vector<2x1xf32>
    %438 = vector.broadcast %6 : vector<1x1xf32> to vector<2x1xf32>
    %439 = arith.addf %437, %438 : vector<2x1xf32>
    %440 = vector.broadcast %65 : vector<1x64xf32> to vector<2x64xf32>
    %441 = arith.mulf %425, %440 : vector<2x64xf32>
    %cst_82 = arith.constant dense<0.000000e+00> : vector<2xf32>
    %442 = vector.multi_reduction <add>, %441, %cst_82 [1] : vector<2x64xf32> to vector<2xf32>
    %443 = vector.shape_cast %442 : vector<2xf32> to vector<2x1xf32>
    %444 = arith.addf %410, %443 : vector<2x1xf32>
    %445 = vector.broadcast %7 : vector<1x1xf32> to vector<2x1xf32>
    %446 = arith.addf %444, %445 : vector<2x1xf32>
    %447 = arith.mulf %432, %432 : vector<2x1xf32>
    %448 = arith.mulf %439, %439 : vector<2x1xf32>
    %449 = arith.addf %447, %448 : vector<2x1xf32>
    %cst_83 = arith.constant 1.000000e-30 : f32
    %450 = vector.broadcast %cst_83 : f32 to vector<2x1xf32>
    %451 = arith.addf %449, %450 : vector<2x1xf32>
    %452 = math.rsqrt %451 : vector<2x1xf32>
    %cst_84 = arith.constant 0.000000e+00 : f32
    %453 = vector.broadcast %cst_84 : f32 to vector<2x1xf32>
    %454 = arith.cmpf ogt, %449, %453 : vector<2x1xf32>
    %455 = arith.mulf %432, %452 : vector<2x1xf32>
    %cst_85 = arith.constant 1.000000e+00 : f32
    %456 = vector.broadcast %cst_85 : f32 to vector<2x1xf32>
    %457 = arith.select %454, %455, %456 : vector<2x1xi1>, vector<2x1xf32>
    %458 = arith.mulf %439, %452 : vector<2x1xf32>
    %cst_86 = arith.constant 0.000000e+00 : f32
    %459 = vector.broadcast %cst_86 : f32 to vector<2x1xf32>
    %460 = arith.select %454, %458, %459 : vector<2x1xi1>, vector<2x1xf32>
    %cst_87 = arith.constant 1.000000e-01 : f32
    %461 = vector.broadcast %cst_87 : f32 to vector<2x1xf32>
    %462 = arith.mulf %446, %461 : vector<2x1xf32>
    %463 = math.cos %462 : vector<2x1xf32>
    %464 = math.sin %462 : vector<2x1xf32>
    %465 = arith.mulf %457, %463 : vector<2x1xf32>
    %466 = arith.mulf %460, %464 : vector<2x1xf32>
    %467 = arith.subf %465, %466 : vector<2x1xf32>
    %468 = arith.mulf %460, %463 : vector<2x1xf32>
    %469 = arith.mulf %457, %464 : vector<2x1xf32>
    %470 = arith.addf %468, %469 : vector<2x1xf32>
    %cst_88 = arith.constant 9.810000e-01 : f32
    %471 = vector.broadcast %cst_88 : f32 to vector<2x1xf32>
    %472 = arith.mulf %471, %470 : vector<2x1xf32>
    %473 = arith.subf %446, %472 : vector<2x1xf32>
    %474 = vector.broadcast %467 : vector<2x1xf32> to vector<2x64xf32>
    %475 = vector.broadcast %60 : vector<1x64xf32> to vector<2x64xf32>
    %476 = arith.mulf %474, %475 : vector<2x64xf32>
    %477 = vector.broadcast %470 : vector<2x1xf32> to vector<2x64xf32>
    %478 = vector.broadcast %61 : vector<1x64xf32> to vector<2x64xf32>
    %479 = arith.mulf %477, %478 : vector<2x64xf32>
    %480 = arith.addf %476, %479 : vector<2x64xf32>
    %481 = vector.broadcast %473 : vector<2x1xf32> to vector<2x64xf32>
    %482 = vector.broadcast %62 : vector<1x64xf32> to vector<2x64xf32>
    %483 = arith.mulf %481, %482 : vector<2x64xf32>
    %484 = arith.addf %480, %483 : vector<2x64xf32>
    %485 = vector.broadcast %8 : vector<1x64xf32> to vector<2x64xf32>
    %486 = arith.addf %484, %485 : vector<2x64xf32>
    %cst_89 = arith.constant 0.000000e+00 : f32
    %487 = vector.broadcast %cst_89 : f32 to vector<2x64xf32>
    %488 = arith.maximumf %486, %487 : vector<2x64xf32>
    %489 = vector.broadcast %63 : vector<1x64xf32> to vector<2x64xf32>
    %490 = arith.mulf %488, %489 : vector<2x64xf32>
    %cst_90 = arith.constant dense<0.000000e+00> : vector<2xf32>
    %491 = vector.multi_reduction <add>, %490, %cst_90 [1] : vector<2x64xf32> to vector<2xf32>
    %492 = vector.shape_cast %491 : vector<2xf32> to vector<2x1xf32>
    %493 = arith.addf %467, %492 : vector<2x1xf32>
    %494 = vector.broadcast %5 : vector<1x1xf32> to vector<2x1xf32>
    %495 = arith.addf %493, %494 : vector<2x1xf32>
    %496 = vector.broadcast %64 : vector<1x64xf32> to vector<2x64xf32>
    %497 = arith.mulf %488, %496 : vector<2x64xf32>
    %cst_91 = arith.constant dense<0.000000e+00> : vector<2xf32>
    %498 = vector.multi_reduction <add>, %497, %cst_91 [1] : vector<2x64xf32> to vector<2xf32>
    %499 = vector.shape_cast %498 : vector<2xf32> to vector<2x1xf32>
    %500 = arith.addf %470, %499 : vector<2x1xf32>
    %501 = vector.broadcast %6 : vector<1x1xf32> to vector<2x1xf32>
    %502 = arith.addf %500, %501 : vector<2x1xf32>
    %503 = vector.broadcast %65 : vector<1x64xf32> to vector<2x64xf32>
    %504 = arith.mulf %488, %503 : vector<2x64xf32>
    %cst_92 = arith.constant dense<0.000000e+00> : vector<2xf32>
    %505 = vector.multi_reduction <add>, %504, %cst_92 [1] : vector<2x64xf32> to vector<2xf32>
    %506 = vector.shape_cast %505 : vector<2xf32> to vector<2x1xf32>
    %507 = arith.addf %473, %506 : vector<2x1xf32>
    %508 = vector.broadcast %7 : vector<1x1xf32> to vector<2x1xf32>
    %509 = arith.addf %507, %508 : vector<2x1xf32>
    %510 = arith.mulf %495, %495 : vector<2x1xf32>
    %511 = arith.mulf %502, %502 : vector<2x1xf32>
    %512 = arith.addf %510, %511 : vector<2x1xf32>
    %cst_93 = arith.constant 1.000000e-30 : f32
    %513 = vector.broadcast %cst_93 : f32 to vector<2x1xf32>
    %514 = arith.addf %512, %513 : vector<2x1xf32>
    %515 = math.rsqrt %514 : vector<2x1xf32>
    %cst_94 = arith.constant 0.000000e+00 : f32
    %516 = vector.broadcast %cst_94 : f32 to vector<2x1xf32>
    %517 = arith.cmpf ogt, %512, %516 : vector<2x1xf32>
    %518 = arith.mulf %495, %515 : vector<2x1xf32>
    %cst_95 = arith.constant 1.000000e+00 : f32
    %519 = vector.broadcast %cst_95 : f32 to vector<2x1xf32>
    %520 = arith.select %517, %518, %519 : vector<2x1xi1>, vector<2x1xf32>
    %521 = arith.mulf %502, %515 : vector<2x1xf32>
    %cst_96 = arith.constant 0.000000e+00 : f32
    %522 = vector.broadcast %cst_96 : f32 to vector<2x1xf32>
    %523 = arith.select %517, %521, %522 : vector<2x1xi1>, vector<2x1xf32>
    %cst_97 = arith.constant 1.000000e-01 : f32
    %524 = vector.broadcast %cst_97 : f32 to vector<2x1xf32>
    %525 = arith.mulf %509, %524 : vector<2x1xf32>
    %526 = math.cos %525 : vector<2x1xf32>
    %527 = math.sin %525 : vector<2x1xf32>
    %528 = arith.mulf %520, %526 : vector<2x1xf32>
    %529 = arith.mulf %523, %527 : vector<2x1xf32>
    %530 = arith.subf %528, %529 : vector<2x1xf32>
    %531 = arith.mulf %523, %526 : vector<2x1xf32>
    %532 = arith.mulf %520, %527 : vector<2x1xf32>
    %533 = arith.addf %531, %532 : vector<2x1xf32>
    %cst_98 = arith.constant 9.810000e-01 : f32
    %534 = vector.broadcast %cst_98 : f32 to vector<2x1xf32>
    %535 = arith.mulf %534, %533 : vector<2x1xf32>
    %536 = arith.subf %509, %535 : vector<2x1xf32>
    %537 = vector.broadcast %530 : vector<2x1xf32> to vector<2x64xf32>
    %538 = vector.broadcast %60 : vector<1x64xf32> to vector<2x64xf32>
    %539 = arith.mulf %537, %538 : vector<2x64xf32>
    %540 = vector.broadcast %533 : vector<2x1xf32> to vector<2x64xf32>
    %541 = vector.broadcast %61 : vector<1x64xf32> to vector<2x64xf32>
    %542 = arith.mulf %540, %541 : vector<2x64xf32>
    %543 = arith.addf %539, %542 : vector<2x64xf32>
    %544 = vector.broadcast %536 : vector<2x1xf32> to vector<2x64xf32>
    %545 = vector.broadcast %62 : vector<1x64xf32> to vector<2x64xf32>
    %546 = arith.mulf %544, %545 : vector<2x64xf32>
    %547 = arith.addf %543, %546 : vector<2x64xf32>
    %548 = vector.broadcast %8 : vector<1x64xf32> to vector<2x64xf32>
    %549 = arith.addf %547, %548 : vector<2x64xf32>
    %cst_99 = arith.constant 0.000000e+00 : f32
    %550 = vector.broadcast %cst_99 : f32 to vector<2x64xf32>
    %551 = arith.maximumf %549, %550 : vector<2x64xf32>
    %552 = vector.broadcast %63 : vector<1x64xf32> to vector<2x64xf32>
    %553 = arith.mulf %551, %552 : vector<2x64xf32>
    %cst_100 = arith.constant dense<0.000000e+00> : vector<2xf32>
    %554 = vector.multi_reduction <add>, %553, %cst_100 [1] : vector<2x64xf32> to vector<2xf32>
    %555 = vector.shape_cast %554 : vector<2xf32> to vector<2x1xf32>
    %556 = arith.addf %530, %555 : vector<2x1xf32>
    %557 = vector.broadcast %5 : vector<1x1xf32> to vector<2x1xf32>
    %558 = arith.addf %556, %557 : vector<2x1xf32>
    %559 = vector.broadcast %64 : vector<1x64xf32> to vector<2x64xf32>
    %560 = arith.mulf %551, %559 : vector<2x64xf32>
    %cst_101 = arith.constant dense<0.000000e+00> : vector<2xf32>
    %561 = vector.multi_reduction <add>, %560, %cst_101 [1] : vector<2x64xf32> to vector<2xf32>
    %562 = vector.shape_cast %561 : vector<2xf32> to vector<2x1xf32>
    %563 = arith.addf %533, %562 : vector<2x1xf32>
    %564 = vector.broadcast %6 : vector<1x1xf32> to vector<2x1xf32>
    %565 = arith.addf %563, %564 : vector<2x1xf32>
    %566 = vector.broadcast %65 : vector<1x64xf32> to vector<2x64xf32>
    %567 = arith.mulf %551, %566 : vector<2x64xf32>
    %cst_102 = arith.constant dense<0.000000e+00> : vector<2xf32>
    %568 = vector.multi_reduction <add>, %567, %cst_102 [1] : vector<2x64xf32> to vector<2xf32>
    %569 = vector.shape_cast %568 : vector<2xf32> to vector<2x1xf32>
    %570 = arith.addf %536, %569 : vector<2x1xf32>
    %571 = vector.broadcast %7 : vector<1x1xf32> to vector<2x1xf32>
    %572 = arith.addf %570, %571 : vector<2x1xf32>
    %573 = tpu.concatenate %117, %124, %131, %180, %187, %194, %243, %250, %257, %306, %313, %320, %369, %376, %383, %432 in 1 : vector<2x1xf32>, vector<2x1xf32>, vector<2x1xf32>, vector<2x1xf32>, vector<2x1xf32>, vector<2x1xf32>, vector<2x1xf32>, vector<2x1xf32>, vector<2x1xf32>, vector<2x1xf32>, vector<2x1xf32>, vector<2x1xf32>, vector<2x1xf32>, vector<2x1xf32>, vector<2x1xf32>, vector<2x1xf32> -> vector<2x16xf32>
    %574 = tpu.concatenate %439, %446, %495, %502, %509, %558, %565, %572 in 1 : vector<2x1xf32>, vector<2x1xf32>, vector<2x1xf32>, vector<2x1xf32>, vector<2x1xf32>, vector<2x1xf32>, vector<2x1xf32>, vector<2x1xf32> -> vector<2x8xf32>
    %575 = tpu.concatenate %573, %574 in 1 : vector<2x16xf32>, vector<2x8xf32> -> vector<2x24xf32>
    %c240 = arith.constant 240 : index
    %c0_103 = arith.constant 0 : index
    %576 = vector.load %arg3[%c240, %c0_103] : memref<272x128xf32, #tpu.memory_space<vmem>>, vector<24x96xf32>
    %cst_104 = arith.constant dense<0.000000e+00> : vector<2x96xf32>
    %577 = tpu.matmul %575, %576, %cst_104 {dimension_numbers = #tpu.dot_dimension_numbers<[1], [0], [0], [1], [0, 0, 1, 1], [], []>} : vector<2x24xf32>, vector<24x96xf32>, vector<2x96xf32> -> vector<2x96xf32>
    %c0_105 = arith.constant 0 : index
    %c0_106 = arith.constant 0 : index
    %c0_107 = arith.constant 0 : index
    %578 = vector.load %arg4[%c0_105, %c0_106, %c0_107] : memref<1x2x96xf32, #tpu.memory_space<vmem>>, vector<1x2x96xf32>
    %579 = vector.shape_cast %578 : vector<1x2x96xf32> to vector<2x96xf32>
    %580 = vector.shape_cast %577 : vector<2x96xf32> to vector<1x2x96xf32>
    tpu.vector_store %arg4[%c0_105, %c0_106, %c0_107], %580 {strides = array<i32>} : memref<1x2x96xf32, #tpu.memory_space<vmem>>, vector<1x2x96xf32>,
    return
  }
  func.func @transform_0(%arg0: i32) -> (i32, i32, i32) {
    %c0_i32 = arith.constant 0 : i32
    %c0_i32_0 = arith.constant 0 : i32
    %c0_i32_1 = arith.constant 0 : i32
    return %arg0, %c0_i32, %c0_i32_0 : i32, i32, i32
  }
  func.func @transform_1(%arg0: i32) -> (i32, i32) {
    %c0_i32 = arith.constant 0 : i32
    %c0_i32_0 = arith.constant 0 : i32
    %c0_i32_1 = arith.constant 0 : i32
    return %c0_i32, %c0_i32_0 : i32, i32
  }
  func.func @transform_2(%arg0: i32) -> (i32, i32) {
    %c0_i32 = arith.constant 0 : i32
    %c0_i32_0 = arith.constant 0 : i32
    %c0_i32_1 = arith.constant 0 : i32
    return %c0_i32, %c0_i32_0 : i32, i32
  }
  func.func @transform_3(%arg0: i32) -> (i32, i32, i32) {
    %c0_i32 = arith.constant 0 : i32
    %c0_i32_0 = arith.constant 0 : i32
    %c0_i32_1 = arith.constant 0 : i32
    return %arg0, %c0_i32, %c0_i32_0 : i32, i32, i32
  }
}

</mosaic_0001>

<llo_original>
// kernel: hybrid_partially_informed.1
$region0: #{hybrid_partially_informed.1}
  #allocation0 [shape = 'u32[]', space=smem, size = 0x4, offset = 0x4, fixed_abs, tag = 'smem constant byte address 0x4 - core index']
  #allocation1 [shape = 'u32[144,128]{1,0:T(1,128)}', space=vmem, size = 0x12000, scoped, tag = 'internal scratch']
  %s0 = inlined_call_operand.vmem [shape: bf16[1,66,396], index: 0, kind: input, shape index: {}]
  %s1 = inlined_call_operand.vmem [shape: bf16[396,64], index: 1, kind: input, shape index: {}]
  %s2 = inlined_call_operand.vmem [shape: f32[272,128], index: 2, kind: input, shape index: {}]
  %s3 = inlined_call_operand.vmem [shape: f32[1,2,96], index: 3, kind: output, shape index: {}]
  %s4 = sld [smem:[#allocation0]]
  $region22: #{hybrid_partially_informed.1} parent=0
    _
  %s6 = ssub.s32 1, %s4
  %s7 = scalar_select 0, %s6, %s4
  // Predicated region
  $region2: #{hybrid_partially_informed.1} parent=0 // pred_check
    _
  $region3: #{hybrid_partially_informed.1} parent=0 // pred_check_branch
    %9 = sbr.rel (0) target = $region5
  $region4: #{hybrid_partially_informed.1} parent=0 // pred_region
    _
  $region5: #{hybrid_partially_informed.1} parent=0 // pred_fallthru
    _
  // Predicated region
  $region6: #{hybrid_partially_informed.1} parent=0 // pred_check
    _
  $region7: #{hybrid_partially_informed.1} parent=0 // pred_check_branch
    %11 = sbr.rel (0) target = $region9
  $region8: #{hybrid_partially_informed.1} parent=0 // pred_region
    _
  $region9: #{hybrid_partially_informed.1} parent=0 // pred_fallthru
    _
  // Predicated region
  $region10: #{hybrid_partially_informed.1} parent=0 // pred_check
    _
  $region11: #{hybrid_partially_informed.1} parent=0 // pred_check_branch
    %13 = sbr.rel (0) target = $region13
  $region12: #{hybrid_partially_informed.1} parent=0 // pred_region
    _
  $region13: #{hybrid_partially_informed.1} parent=0 // pred_fallthru
    _
  %v15 = vld [vmem:[%s2] sm:$0xff]
  %v16 = vld [vmem:[%s0] sm:$0xff]
  %v17 = vld [vmem:[%s0 + $0x8] sm:$0xff]
  %v18 = vld [vmem:[%s0 + $0x10] sm:$0xff]
  %v19 = vld [vmem:[%s0 + $0x18] sm:$0xff]
  %v20 = vld [vmem:[%s0 + $0x20] sm:$0xff]
  %v21 = vld [vmem:[%s0 + $0x28] sm:$0xff]
  %v22 = vld [vmem:[%s0 + $0x30] sm:$0xff]
  %v23 = vld [vmem:[%s0 + $0x38] sm:$0xff]
  %v24 = vld [vmem:[%s0 + $0x40] sm:$0xff]
  %v25 = vld [vmem:[%s0 + $0x48] sm:$0xff]
  %v26 = vld [vmem:[%s0 + $0x50] sm:$0xff]
  %v27 = vld [vmem:[%s0 + $0x58] sm:$0xff]
  %v28 = vld [vmem:[%s0 + $0x60] sm:$0xff]
  %v29 = vld [vmem:[%s0 + $0x68] sm:$0xff]
  %v30 = vld [vmem:[%s0 + $0x70] sm:$0xff]
  %v31 = vld [vmem:[%s0 + $0x78] sm:$0xff]
  %v32 = vld [vmem:[%s0 + $0x80] sm:$0x11]
  %v33 = vld [vmem:[%s0 + $0x88] sm:$0x11]
  %v34 = vld [vmem:[%s1] sm:$0xf]
  %v35 = vld [vmem:[%s1 + $0x4] sm:$0xf]
  %v36 = vld [vmem:[%s1 + $0x8] sm:$0xf]
  %v37 = vld [vmem:[%s1 + $0xc] sm:$0xf]
  %v38 = vld [vmem:[%s1 + $0x10] sm:$0xf]
  %v39 = vld [vmem:[%s1 + $0x14] sm:$0xf]
  %v40 = vld [vmem:[%s1 + $0x18] sm:$0xf]
  %v41 = vld [vmem:[%s1 + $0x1c] sm:$0xf]
  %v42 = vld [vmem:[%s1 + $0x20] sm:$0xf]
  %v43 = vld [vmem:[%s1 + $0x24] sm:$0xf]
  %v44 = vld [vmem:[%s1 + $0x28] sm:$0xf]
  %v45 = vld [vmem:[%s1 + $0x2c] sm:$0xf]
  %v46 = vld [vmem:[%s1 + $0x30] sm:$0xf]
  %v47 = vld [vmem:[%s1 + $0x34] sm:$0xf]
  %v48 = vld [vmem:[%s1 + $0x38] sm:$0xf]
  %v49 = vld [vmem:[%s1 + $0x3c] sm:$0xf]
  %v50 = vld [vmem:[%s1 + $0x40] sm:$0xf]
  %v51 = vld [vmem:[%s1 + $0x44] sm:$0xf]
  %v52 = vld [vmem:[%s1 + $0x48] sm:$0xf]
  %v53 = vld [vmem:[%s1 + $0x4c] sm:$0xf]
  %v54 = vld [vmem:[%s1 + $0x50] sm:$0xf]
  %v55 = vld [vmem:[%s1 + $0x54] sm:$0xf]
  %v56 = vld [vmem:[%s1 + $0x58] sm:$0xf]
  %v57 = vld [vmem:[%s1 + $0x5c] sm:$0xf]
  %v58 = vld [vmem:[%s1 + $0x60] sm:$0xf]
  %v59 = vld [vmem:[%s1 + $0x64] sm:$0xf]
  %v60 = vld [vmem:[%s1 + $0x68] sm:$0xf]
  %v61 = vld [vmem:[%s1 + $0x6c] sm:$0xf]
  %v62 = vld [vmem:[%s1 + $0x70] sm:$0xf]
  %v63 = vld [vmem:[%s1 + $0x74] sm:$0xf]
  %v64 = vld [vmem:[%s1 + $0x78] sm:$0xf]
  %v65 = vld [vmem:[%s1 + $0x7c] sm:$0xf]
  %v66 = vld [vmem:[%s1 + $0x80] sm:$0xf]
  %v67 = vld [vmem:[%s1 + $0x84] sm:$0xf]
  %v68 = vld [vmem:[%s1 + $0x88] sm:$0xf]
  %v69 = vld [vmem:[%s1 + $0x8c] sm:$0xf]
  %v70 = vld [vmem:[%s1 + $0x90] sm:$0xf]
  %v71 = vld [vmem:[%s1 + $0x94] sm:$0xf]
  %v72 = vld [vmem:[%s1 + $0x98] sm:$0xf]
  %v73 = vld [vmem:[%s1 + $0x9c] sm:$0xf]
  %v74 = vld [vmem:[%s1 + $0xa0] sm:$0xf]
  %v75 = vld [vmem:[%s1 + $0xa4] sm:$0xf]
  %v76 = vld [vmem:[%s1 + $0xa8] sm:$0xf]
  %v77 = vld [vmem:[%s1 + $0xac] sm:$0xf]
  %v78 = vld [vmem:[%s1 + $0xb0] sm:$0xf]
  %v79 = vld [vmem:[%s1 + $0xb4] sm:$0xf]
  %v80 = vld [vmem:[%s1 + $0xb8] sm:$0xf]
  %v81 = vld [vmem:[%s1 + $0xbc] sm:$0xf]
  %v82 = vld [vmem:[%s1 + $0xc0] sm:$0xf]
  %v83 = vld [vmem:[%s1 + $0xc4] sm:$0x3]
  %v84 = vlaneseq
  %v85 = vshrl.u32 %v84, 7
  %v86 = vsub.s32 0, %v85
  %v87 = vrot.slane %v15, %v86
  %v106 = vunpack.c.l.b16 %v16
  %v107 = vunpack.c.h.b16 %v16
  %v108 = vunpack.c.l.b16 %v17
  %v109 = vunpack.c.h.b16 %v17
  %v110 = vunpack.c.l.b16 %v18
  %v111 = vunpack.c.h.b16 %v18
  %v112 = vunpack.c.l.b16 %v19
  %v113 = vunpack.c.h.b16 %v19
  %v114 = vunpack.c.l.b16 %v20
  %v115 = vunpack.c.h.b16 %v20
  %v116 = vunpack.c.l.b16 %v21
  %v117 = vunpack.c.h.b16 %v21
  %v118 = vunpack.c.l.b16 %v22
  %v119 = vunpack.c.h.b16 %v22
  %v120 = vunpack.c.l.b16 %v23
  %v121 = vunpack.c.h.b16 %v23
  %v122 = vunpack.c.l.b16 %v24
  %v123 = vunpack.c.h.b16 %v24
  %v124 = vunpack.c.l.b16 %v25
  %v125 = vunpack.c.h.b16 %v25
  %v126 = vunpack.c.l.b16 %v26
  %v127 = vunpack.c.h.b16 %v26
  %v128 = vunpack.c.l.b16 %v27
  %v129 = vunpack.c.h.b16 %v27
  %v130 = vunpack.c.l.b16 %v28
  %v131 = vunpack.c.h.b16 %v28
  %v132 = vunpack.c.l.b16 %v29
  %v133 = vunpack.c.h.b16 %v29
  %v134 = vunpack.c.l.b16 %v30
  %v135 = vunpack.c.h.b16 %v30
  %v136 = vunpack.c.l.b16 %v31
  %v137 = vunpack.c.h.b16 %v31
  %v138 = vunpack.c.l.b16 %v32
  %v139 = vunpack.c.h.b16 %v32
  %v140 = vunpack.c.l.b16 %v33
  %v141 = vunpack.c.h.b16 %v33
  %v142 = vpack.c.b16 %v110, %v106
  %v143 = vpack.c.b16 %v111, %v107
  %v144 = vpack.c.b16 %v112, %v108
  %v145 = vpack.c.b16 %v113, %v109
  %v146 = vpack.c.b16 %v118, %v114
  %v147 = vpack.c.b16 %v119, %v115
  %v148 = vpack.c.b16 %v120, %v116
  %v149 = vpack.c.b16 %v121, %v117
  %v150 = vpack.c.b16 %v126, %v122
  %v151 = vpack.c.b16 %v127, %v123
  %v152 = vpack.c.b16 %v128, %v124
  %v153 = vpack.c.b16 %v129, %v125
  %v154 = vpack.c.b16 %v134, %v130
  %v155 = vpack.c.b16 %v135, %v131
  %v156 = vpack.c.b16 %v136, %v132
  %v157 = vpack.c.b16 %v137, %v133
  %v158 = vpack.c.b16 %v138, %v138
  %v159 = vpack.c.b16 %v139, %v139
  %v160 = vpack.c.b16 %v140, %v140
  %v161 = vpack.c.b16 %v141, %v141
  %v227 = vunpack.c.l.b16 %v34
  %v228 = vunpack.c.l.b16 %v35
  %v229 = vunpack.c.l.b16 %v36
  %v230 = vunpack.c.l.b16 %v37
  %v231 = vunpack.c.l.b16 %v38
  %v232 = vunpack.c.l.b16 %v39
  %v233 = vunpack.c.l.b16 %v40
  %v234 = vunpack.c.l.b16 %v41
  %v235 = vunpack.c.l.b16 %v42
  %v236 = vunpack.c.l.b16 %v43
  %v237 = vunpack.c.l.b16 %v44
  %v238 = vunpack.c.l.b16 %v45
  %v239 = vunpack.c.l.b16 %v46
  %v240 = vunpack.c.l.b16 %v47
  %v241 = vunpack.c.l.b16 %v48
  %v242 = vunpack.c.l.b16 %v49
  %v243 = vunpack.c.l.b16 %v50
  %v244 = vunpack.c.l.b16 %v51
  %v245 = vunpack.c.l.b16 %v52
  %v246 = vunpack.c.l.b16 %v53
  %v247 = vunpack.c.l.b16 %v54
  %v248 = vunpack.c.l.b16 %v55
  %v249 = vunpack.c.l.b16 %v56
  %v250 = vunpack.c.l.b16 %v57
  %v251 = vunpack.c.l.b16 %v58
  %v252 = vunpack.c.l.b16 %v59
  %v253 = vunpack.c.l.b16 %v60
  %v254 = vunpack.c.l.b16 %v61
  %v255 = vunpack.c.l.b16 %v62
  %v256 = vunpack.c.l.b16 %v63
  %v257 = vunpack.c.l.b16 %v64
  %v258 = vunpack.c.l.b16 %v65
  %v259 = vunpack.c.l.b16 %v66
  %v260 = vunpack.c.l.b16 %v67
  %v261 = vunpack.c.l.b16 %v68
  %v262 = vunpack.c.l.b16 %v69
  %v263 = vunpack.c.l.b16 %v70
  %v264 = vunpack.c.l.b16 %v71
  %v265 = vunpack.c.l.b16 %v72
  %v266 = vunpack.c.l.b16 %v73
  %v267 = vunpack.c.l.b16 %v74
  %v268 = vunpack.c.l.b16 %v75
  %v269 = vunpack.c.l.b16 %v76
  %v270 = vunpack.c.l.b16 %v77
  %v271 = vunpack.c.l.b16 %v78
  %v272 = vunpack.c.l.b16 %v79
  %v273 = vunpack.c.l.b16 %v80
  %v274 = vunpack.c.l.b16 %v81
  %v275 = vunpack.c.l.b16 %v82
  %v276 = vunpack.c.l.b16 %v83
  %v277 = vpack.c.b16 %v228, %v227
  %v278 = vpack.c.b16 %v230, %v229
  %v279 = vpack.c.b16 %v232, %v231
  %v280 = vpack.c.b16 %v234, %v233
  %v281 = vpack.c.b16 %v236, %v235
  %v282 = vpack.c.b16 %v238, %v237
  %v283 = vpack.c.b16 %v240, %v239
  %v284 = vpack.c.b16 %v242, %v241
  %v285 = vpack.c.b16 %v244, %v243
  %v286 = vpack.c.b16 %v246, %v245
  %v287 = vpack.c.b16 %v248, %v247
  %v288 = vpack.c.b16 %v250, %v249
  %v289 = vpack.c.b16 %v252, %v251
  %v290 = vpack.c.b16 %v254, %v253
  %v291 = vpack.c.b16 %v256, %v255
  %v292 = vpack.c.b16 %v258, %v257
  %v293 = vpack.c.b16 %v260, %v259
  %v294 = vpack.c.b16 %v262, %v261
  %v295 = vpack.c.b16 %v264, %v263
  %v296 = vpack.c.b16 %v266, %v265
  %v297 = vpack.c.b16 %v268, %v267
  %v298 = vpack.c.b16 %v270, %v269
  %v299 = vpack.c.b16 %v272, %v271
  %v300 = vpack.c.b16 %v274, %v273
  %v301 = vpack.c.b16 %v276, %v275
  %vm326 = vcmask 97280
  %v328 = vsel %vm326, %v145, 0
  %v331 = vsel %vm326, %v149, 0
  %v334 = vsel %vm326, %v153, 0
  %v337 = vsel %vm326, %v157, 0
  %v340 = vsel %vm326, %v161, 0
  %vm342 = vcmask 1045504
  %v344 = vsel %vm342, %v301, 0
  %346 = vmatprep.subr.bf16.mxu0 0
  %347 = vmatpush1.bf16.msra.mxu0 %v277
  %348 = vmatprep.subr.bf16.mxu0 0
  %349 = vmatpush1.bf16.msra.mxu0 %v278
  %350 = vmatprep.subr.bf16.mxu0 0
  %351 = vmatpush1.bf16.msra.mxu0 %v279
  %352 = vmatprep.subr.bf16.mxu0 0
  %353 = vmatpush1.bf16.msra.mxu0 %v280
  %354 = vmatprep.subr.bf16.mxu0 0
  %355 = vmatpush1.bf16.msra.mxu0 %v281
  %356 = vmatprep.subr.bf16.mxu0 0
  %357 = vmatpush1.bf16.msra.mxu0 %v282
  %358 = vmatprep.subr.bf16.mxu0 0
  %359 = vmatpush1.bf16.msra.mxu0 %v283
  %360 = vmatprep.subr.bf16.mxu0 0
  %361 = vmatpush1.bf16.msra.mxu0 %v284
  %362 = vmatprep.subr.bf16.mxu0 0
  %363 = vmatpush1.bf16.msra.mxu0 %v285
  %364 = vmatprep.subr.bf16.mxu0 0
  %365 = vmatpush1.bf16.msra.mxu0 %v286
  %366 = vmatprep.subr.bf16.mxu0 0
  %367 = vmatpush1.bf16.msra.mxu0 %v287
  %368 = vmatprep.subr.bf16.mxu0 0
  %369 = vmatpush1.bf16.msra.mxu0 %v288
  %370 = vmatprep.subr.bf16.mxu0 0
  %371 = vmatpush1.bf16.msra.mxu0 %v289
  %372 = vmatprep.subr.bf16.mxu0 0
  %373 = vmatpush1.bf16.msra.mxu0 %v290
  %374 = vmatprep.subr.bf16.mxu0 0
  %375 = vmatpush1.bf16.msra.mxu0 %v291
  %376 = vmatprep.subr.bf16.mxu0 0
  %377 = vmatpush1.bf16.msra.mxu0 %v292
  %378 = vmatprep.mubr.bf16.mxu0 %v143
  %379 = vmatmul.mubr.bf16.gmra.mrb[0].mxu0 %v142
  %v380 = vpop.f32.mrb[0].mxu0
  %v381 = vadd.f32 %v87, %v380
  %v382 = vpop.f32.mrb[0].mxu0
  %v383 = vpop.f32.mrb[0].mxu0
  %v384 = vadd.f32 %v87, %v383
  %v385 = vpop.f32.mrb[0].mxu0
  %386 = vmatprep.mubr.bf16.mxu0 %v147
  %387 = vmatmul.mubr.bf16.gmra.mrb[0].mxu0 %v146
  %v388 = vpop.f32.mrb[0].mxu0
  %v389 = vadd.f32 %v87, %v388
  %v390 = vpop.f32.mrb[0].mxu0
  %v391 = vpop.f32.mrb[0].mxu0
  %v392 = vadd.f32 %v87, %v391
  %v393 = vpop.f32.mrb[0].mxu0
  %394 = vmatprep.mubr.bf16.mxu0 %v151
  %395 = vmatmul.mubr.bf16.gmra.mrb[0].mxu0 %v150
  %v396 = vpop.f32.mrb[0].mxu0
  %v397 = vadd.f32 %v87, %v396
  %v398 = vpop.f32.mrb[0].mxu0
  %v399 = vpop.f32.mrb[0].mxu0
  %v400 = vadd.f32 %v87, %v399
  %v401 = vpop.f32.mrb[0].mxu0
  %402 = vmatprep.mubr.bf16.mxu0 %v155
  %403 = vmatmul.mubr.bf16.gmra.mrb[0].mxu0 %v154
  %v404 = vpop.f32.mrb[0].mxu0
  %v405 = vadd.f32 %v87, %v404
  %v406 = vpop.f32.mrb[0].mxu0
  %v407 = vpop.f32.mrb[0].mxu0
  %v408 = vadd.f32 %v87, %v407
  %v409 = vpop.f32.mrb[0].mxu0
  %410 = vmatprep.mubr.bf16.mxu0 %v159
  %411 = vmatmul.mubr.bf16.gmra.mrb[0].mxu0 %v158
  %v412 = vpop.f32.mrb[0].mxu0
  %v413 = vadd.f32 %v87, %v412
  %v414 = vpop.f32.mrb[0].mxu0
  %v415 = vpop.f32.mrb[0].mxu0
  %v416 = vpop.f32.mrb[0].mxu0
  %417 = vdwg.mxu0
  %418 = vmatprep.subr.bf16.mxu0 0
  %419 = vmatpush1.bf16.msra.mxu0 %v293
  %420 = vmatprep.subr.bf16.mxu0 0
  %421 = vmatpush1.bf16.msra.mxu0 %v294
  %422 = vmatprep.subr.bf16.mxu0 0
  %423 = vmatpush1.bf16.msra.mxu0 %v295
  %424 = vmatprep.subr.bf16.mxu0 0
  %425 = vmatpush1.bf16.msra.mxu0 %v296
  %426 = vmatprep.subr.bf16.mxu0 0
  %427 = vmatpush1.bf16.msra.mxu0 %v297
  %428 = vmatprep.subr.bf16.mxu0 0
  %429 = vmatpush1.bf16.msra.mxu0 %v298
  %430 = vmatprep.subr.bf16.mxu0 0
  %431 = vmatpush1.bf16.msra.mxu0 %v299
  %432 = vmatprep.subr.bf16.mxu0 0
  %433 = vmatpush1.bf16.msra.mxu0 %v300
  %434 = vmatprep.subr.bf16.mxu0 0
  %435 = vmatpush1.bf16.msra.mxu0 %v344
  %436 = vmatprep.subr.bf16.mxu0 0
  %437 = vmatpush1.bf16.msra.mxu0 0
  %438 = vmatprep.subr.bf16.mxu0 0
  %439 = vmatpush1.bf16.msra.mxu0 0
  %440 = vmatprep.subr.bf16.mxu0 0
  %441 = vmatpush1.bf16.msra.mxu0 0
  %442 = vmatprep.subr.bf16.mxu0 0
  %443 = vmatpush1.bf16.msra.mxu0 0
  %444 = vmatprep.subr.bf16.mxu0 0
  %445 = vmatpush1.bf16.msra.mxu0 0
  %446 = vmatprep.subr.bf16.mxu0 0
  %447 = vmatpush1.bf16.msra.mxu0 0
  %448 = vmatprep.subr.bf16.mxu0 0
  %449 = vmatpush1.bf16.msra.mxu0 0
  %450 = vmatprep.mubr.bf16.mxu0 %v328
  %451 = vmatmul.mubr.bf16.gmra.mrb[0].mxu0 %v144
  %v452 = vpop.f32.mrb[0].mxu0
  %v453 = vadd.f32 %v381, %v452
  %v454 = vpop.f32.mrb[0].mxu0
  %v455 = vpop.f32.mrb[0].mxu0
  %v456 = vadd.f32 %v384, %v455
  %v457 = vpop.f32.mrb[0].mxu0
  %458 = vmatprep.mubr.bf16.mxu0 %v331
  %459 = vmatmul.mubr.bf16.gmra.mrb[0].mxu0 %v148
  %v460 = vpop.f32.mrb[0].mxu0
  %v461 = vadd.f32 %v389, %v460
  %v462 = vpop.f32.mrb[0].mxu0
  %v463 = vpop.f32.mrb[0].mxu0
  %v464 = vadd.f32 %v392, %v463
  %v465 = vpop.f32.mrb[0].mxu0
  %466 = vmatprep.mubr.bf16.mxu0 %v334
  %467 = vmatmul.mubr.bf16.gmra.mrb[0].mxu0 %v152
  %v468 = vpop.f32.mrb[0].mxu0
  %v469 = vadd.f32 %v397, %v468
  %v470 = vpop.f32.mrb[0].mxu0
  %v471 = vpop.f32.mrb[0].mxu0
  %v472 = vadd.f32 %v400, %v471
  %v473 = vpop.f32.mrb[0].mxu0
  %474 = vmatprep.mubr.bf16.mxu0 %v337
  %475 = vmatmul.mubr.bf16.gmra.mrb[0].mxu0 %v156
  %v476 = vpop.f32.mrb[0].mxu0
  %v477 = vadd.f32 %v405, %v476
  %v478 = vpop.f32.mrb[0].mxu0
  %v479 = vpop.f32.mrb[0].mxu0
  %v480 = vadd.f32 %v408, %v479
  %v481 = vpop.f32.mrb[0].mxu0
  %482 = vmatprep.mubr.bf16.mxu0 %v340
  %483 = vmatmul.mubr.bf16.gmra.mrb[0].mxu0 %v160
  %v484 = vpop.f32.mrb[0].mxu0
  %v485 = vadd.f32 %v413, %v484
  %v486 = vpop.f32.mrb[0].mxu0
  %v487 = vpop.f32.mrb[0].mxu0
  %v488 = vpop.f32.mrb[0].mxu0
  %489 = vdwg.mxu0
  %vm490 = vcmask 523264
  %v491 = vsel %vm490, %v453, 0.0
  %v492 = vsel %vm490, %v456, 0.0
  %v493 = vadd.f32 %v491, %v492
  %v494 = vsel %vm490, %v461, 0.0
  %v495 = vadd.f32 %v493, %v494
  %v496 = vsel %vm490, %v464, 0.0
  %v497 = vadd.f32 %v495, %v496
  %v498 = vsel %vm490, %v469, 0.0
  %v499 = vadd.f32 %v497, %v498
  %v500 = vsel %vm490, %v472, 0.0
  %v501 = vadd.f32 %v499, %v500
  %v502 = vsel %vm490, %v477, 0.0
  %v503 = vadd.f32 %v501, %v502
  %v504 = vsel %vm490, %v480, 0.0
  %v505 = vadd.f32 %v503, %v504
  %vm506 = vcmask 517120
  %v507 = vsel %vm506, %v485, 0.0
  %v508 = vadd.f32 %v505, %v507
  %v509 = vrot.slane %v508, 4
  %v510 = vadd.f32 %v508, %v509
  %v511 = vrot.slane %v510, 2
  %v512 = vadd.f32 %v510, %v511
  %v513 = vrot.slane %v512, 1
  %v514 = vadd.f32 %v512, %v513
  %v515 = vrcp.pop 66.0
  %v516 = vmul.f32 %v514, %v515
  %v517 = vsub.f32 %v453, %v516
  %v518 = vsub.f32 %v456, %v516
  %v519 = vsub.f32 %v461, %v516
  %v520 = vsub.f32 %v464, %v516
  %v521 = vsub.f32 %v469, %v516
  %v522 = vsub.f32 %v472, %v516
  %v523 = vsub.f32 %v477, %v516
  %v524 = vsub.f32 %v480, %v516
  %v525 = vsub.f32 %v485, %v516
  %v526 = vmul.f32 %v517, %v517
  %v527 = vmul.f32 %v518, %v518
  %v528 = vmul.f32 %v519, %v519
  %v529 = vmul.f32 %v520, %v520
  %v530 = vmul.f32 %v521, %v521
  %v531 = vmul.f32 %v522, %v522
  %v532 = vmul.f32 %v523, %v523
  %v533 = vmul.f32 %v524, %v524
  %v534 = vmul.f32 %v525, %v525
  %v535 = vsel %vm490, %v526, 0.0
  %v536 = vsel %vm490, %v527, 0.0
  %v537 = vadd.f32 %v535, %v536
  %v538 = vsel %vm490, %v528, 0.0
  %v539 = vadd.f32 %v537, %v538
  %v540 = vsel %vm490, %v529, 0.0
  %v541 = vadd.f32 %v539, %v540
  %v542 = vsel %vm490, %v530, 0.0
  %v543 = vadd.f32 %v541, %v542
  %v544 = vsel %vm490, %v531, 0.0
  %v545 = vadd.f32 %v543, %v544
  %v546 = vsel %vm490, %v532, 0.0
  %v547 = vadd.f32 %v545, %v546
  %v548 = vsel %vm490, %v533, 0.0
  %v549 = vadd.f32 %v547, %v548
  %v550 = vsel %vm506, %v534, 0.0
  %v551 = vadd.f32 %v549, %v550
  %v552 = vrot.slane %v551, 4
  %v553 = vadd.f32 %v551, %v552
  %v554 = vrot.slane %v553, 2
  %v555 = vadd.f32 %v553, %v554
  %v556 = vrot.slane %v555, 1
  %v557 = vadd.f32 %v555, %v556
  %v558 = vmul.f32 %v557, %v515
  %v559 = vadd.f32 %v558, 1e-05
  %v560 = vrsqrt.pop %v559
  %v561 = vmul.f32 %v517, %v560
  %v562 = vmul.f32 %v518, %v560
  %v563 = vmul.f32 %v519, %v560
  %v564 = vmul.f32 %v520, %v560
  %v565 = vmul.f32 %v521, %v560
  %v566 = vmul.f32 %v522, %v560
  %v567 = vmul.f32 %v523, %v560
  %v568 = vmul.f32 %v524, %v560
  %v569 = vmul.f32 %v525, %v560
  %v570 = vlaneseq
  %v571 = vshrl.u32 %v570, 7
  %v572 = vsub.s32 1, %v571
  %v573 = vrot.slane %v15, %v572
  %v574 = vmul.f32 %v561, %v573
  %v575 = vmul.f32 %v562, %v573
  %v576 = vmul.f32 %v563, %v573
  %v577 = vmul.f32 %v564, %v573
  %v578 = vmul.f32 %v565, %v573
  %v579 = vmul.f32 %v566, %v573
  %v580 = vmul.f32 %v567, %v573
  %v581 = vmul.f32 %v568, %v573
  %v582 = vmul.f32 %v569, %v573
  %v583 = vlaneseq
  %v584 = vshrl.u32 %v583, 7
  %v585 = vsub.s32 2, %v584
  %v586 = vrot.slane %v15, %v585
  %v587 = vadd.f32 %v574, %v586
  %v588 = vadd.f32 %v575, %v586
  %v589 = vadd.f32 %v576, %v586
  %v590 = vadd.f32 %v577, %v586
  %v591 = vadd.f32 %v578, %v586
  %v592 = vadd.f32 %v579, %v586
  %v593 = vadd.f32 %v580, %v586
  %v594 = vadd.f32 %v581, %v586
  %v595 = vadd.f32 %v582, %v586
  %vm596 = vcmp.gt.f32.partialorder %v587, 0.0
  %vm597 = vcmp.gt.f32.partialorder %v588, 0.0
  %vm598 = vcmp.gt.f32.partialorder %v589, 0.0
  %vm599 = vcmp.gt.f32.partialorder %v590, 0.0
  %vm600 = vcmp.gt.f32.partialorder %v591, 0.0
  %vm601 = vcmp.gt.f32.partialorder %v592, 0.0
  %vm602 = vcmp.gt.f32.partialorder %v593, 0.0
  %vm603 = vcmp.gt.f32.partialorder %v594, 0.0
  %vm604 = vcmp.gt.f32.partialorder %v595, 0.0
  %v605 = vmul.f32 %v587, 1.442695
  %v606 = vpow.pop %v605
  %v607 = vmul.f32 %v588, 1.442695
  %v608 = vpow.pop %v607
  %v609 = vmul.f32 %v589, 1.442695
  %v610 = vpow.pop %v609
  %v611 = vmul.f32 %v590, 1.442695
  %v612 = vpow.pop %v611
  %v613 = vmul.f32 %v591, 1.442695
  %v614 = vpow.pop %v613
  %v615 = vmul.f32 %v592, 1.442695
  %v616 = vpow.pop %v615
  %v617 = vmul.f32 %v593, 1.442695
  %v618 = vpow.pop %v617
  %v619 = vmul.f32 %v594, 1.442695
  %v620 = vpow.pop %v619
  %v621 = vmul.f32 %v595, 1.442695
  %v622 = vpow.pop %v621
  %v623 = vsub.f32 %v606, 1.0
  %v624 = vsub.f32 %v608, 1.0
  %v625 = vsub.f32 %v610, 1.0
  %v626 = vsub.f32 %v612, 1.0
  %v627 = vsub.f32 %v614, 1.0
  %v628 = vsub.f32 %v616, 1.0
  %v629 = vsub.f32 %v618, 1.0
  %v630 = vsub.f32 %v620, 1.0
  %v631 = vsub.f32 %v622, 1.0
  %v632 = vsel %vm596, %v587, %v623
  %v633 = vsel %vm597, %v588, %v624
  %v634 = vsel %vm598, %v589, %v625
  %v635 = vsel %vm599, %v590, %v626
  %v636 = vsel %vm600, %v591, %v627
  %v637 = vsel %vm601, %v592, %v628
  %v638 = vsel %vm602, %v593, %v629
  %v639 = vsel %vm603, %v594, %v630
  %v640 = vsel %vm604, %v595, %v631
  %v641 = vld [vmem:[%s2 + $0x8] sm:$0xff]
  %v642 = vld [vmem:[%s2 + $0x10] sm:$0xff]
  %v643 = vld [vmem:[%s2 + $0x18] sm:$0xff]
  %v644 = vld [vmem:[%s2 + $0x20] sm:$0xff]
  %v645 = vld [vmem:[%s2 + $0x28] sm:$0xff]
  %v646 = vld [vmem:[%s2 + $0x30] sm:$0xff]
  %v647 = vld [vmem:[%s2 + $0x38] sm:$0xff]
  %v648 = vld [vmem:[%s2 + $0x40] sm:$0xff]
  %v649 = vld [vmem:[%s2 + $0x48] sm:$0x3]
  %v650 = vmul.f32 %v632, %v641
  %v651 = vmul.f32 %v633, %v642
  %v652 = vmul.f32 %v634, %v643
  %v653 = vmul.f32 %v635, %v644
  %v654 = vmul.f32 %v636, %v645
  %v655 = vmul.f32 %v637, %v646
  %v656 = vmul.f32 %v638, %v647
  %v657 = vmul.f32 %v639, %v648
  %v658 = vmul.f32 %v640, %v649
  %v659 = vsel %vm490, %v650, 0.0
  %660 = vadd.xlane.f32.xlu0 %v659
  %v661 = vpop.xlane.xlu0 %660
  %v662 = vsel %vm490, %v651, 0.0
  %663 = vadd.xlane.f32.xlu0 %v662
  %v664 = vpop.xlane.xlu0 %663
  %v665 = vsel %vm490, %v652, 0.0
  %666 = vadd.xlane.f32.xlu0 %v665
  %v667 = vpop.xlane.xlu0 %666
  %v668 = vsel %vm490, %v653, 0.0
  %669 = vadd.xlane.f32.xlu0 %v668
  %v670 = vpop.xlane.xlu0 %669
  %v671 = vsel %vm490, %v654, 0.0
  %672 = vadd.xlane.f32.xlu0 %v671
  %v673 = vpop.xlane.xlu0 %672
  %v674 = vsel %vm490, %v655, 0.0
  %675 = vadd.xlane.f32.xlu0 %v674
  %v676 = vpop.xlane.xlu0 %675
  %v677 = vsel %vm490, %v656, 0.0
  %678 = vadd.xlane.f32.xlu0 %v677
  %v679 = vpop.xlane.xlu0 %678
  %v680 = vsel %vm490, %v657, 0.0
  %681 = vadd.xlane.f32.xlu0 %v680
  %v682 = vpop.xlane.xlu0 %681
  %v683 = vsel %vm506, %v658, 0.0
  %684 = vadd.xlane.f32.xlu0 %v683
  %v685 = vpop.xlane.xlu0 %684
  %v686 = vld [vmem:[%s2 + $0x50] sm:$0xff]
  %v687 = vld [vmem:[%s2 + $0x58] sm:$0xff]
  %v688 = vld [vmem:[%s2 + $0x60] sm:$0xff]
  %v689 = vld [vmem:[%s2 + $0x68] sm:$0xff]
  %v690 = vld [vmem:[%s2 + $0x70] sm:$0xff]
  %v691 = vld [vmem:[%s2 + $0x78] sm:$0xff]
  %v692 = vld [vmem:[%s2 + $0x80] sm:$0xff]
  %v693 = vld [vmem:[%s2 + $0x88] sm:$0xff]
  %v694 = vld [vmem:[%s2 + $0x90] sm:$0x3]
  %v695 = vmul.f32 %v632, %v686
  %v696 = vmul.f32 %v633, %v687
  %v697 = vmul.f32 %v634, %v688
  %v698 = vmul.f32 %v635, %v689
  %v699 = vmul.f32 %v636, %v690
  %v700 = vmul.f32 %v637, %v691
  %v701 = vmul.f32 %v638, %v692
  %v702 = vmul.f32 %v639, %v693
  %v703 = vmul.f32 %v640, %v694
  %v704 = vsel %vm490, %v695, 0.0
  %705 = vadd.xlane.f32.xlu0 %v704
  %v706 = vpop.xlane.xlu0 %705
  %v707 = vsel %vm490, %v696, 0.0
  %708 = vadd.xlane.f32.xlu0 %v707
  %v709 = vpop.xlane.xlu0 %708
  %v710 = vsel %vm490, %v697, 0.0
  %711 = vadd.xlane.f32.xlu0 %v710
  %v712 = vpop.xlane.xlu0 %711
  %v713 = vsel %vm490, %v698, 0.0
  %714 = vadd.xlane.f32.xlu0 %v713
  %v715 = vpop.xlane.xlu0 %714
  %v716 = vsel %vm490, %v699, 0.0
  %717 = vadd.xlane.f32.xlu0 %v716
  %v718 = vpop.xlane.xlu0 %717
  %v719 = vsel %vm490, %v700, 0.0
  %720 = vadd.xlane.f32.xlu0 %v719
  %v721 = vpop.xlane.xlu0 %720
  %v722 = vsel %vm490, %v701, 0.0
  %723 = vadd.xlane.f32.xlu0 %v722
  %v724 = vpop.xlane.xlu0 %723
  %v725 = vsel %vm490, %v702, 0.0
  %726 = vadd.xlane.f32.xlu0 %v725
  %v727 = vpop.xlane.xlu0 %726
  %v728 = vsel %vm506, %v703, 0.0
  %729 = vadd.xlane.f32.xlu0 %v728
  %v730 = vpop.xlane.xlu0 %729
  %v731 = vld [vmem:[%s2 + $0x98] sm:$0xff]
  %v732 = vld [vmem:[%s2 + $0xa0] sm:$0xff]
  %v733 = vld [vmem:[%s2 + $0xa8] sm:$0xff]
  %v734 = vld [vmem:[%s2 + $0xb0] sm:$0xff]
  %v735 = vld [vmem:[%s2 + $0xb8] sm:$0xff]
  %v736 = vld [vmem:[%s2 + $0xc0] sm:$0xff]
  %v737 = vld [vmem:[%s2 + $0xc8] sm:$0xff]
  %v738 = vld [vmem:[%s2 + $0xd0] sm:$0xff]
  %v739 = vld [vmem:[%s2 + $0xd8] sm:$0x3]
  %v740 = vmul.f32 %v632, %v731
  %v741 = vmul.f32 %v633, %v732
  %v742 = vmul.f32 %v634, %v733
  %v743 = vmul.f32 %v635, %v734
  %v744 = vmul.f32 %v636, %v735
  %v745 = vmul.f32 %v637, %v736
  %v746 = vmul.f32 %v638, %v737
  %v747 = vmul.f32 %v639, %v738
  %v748 = vmul.f32 %v640, %v739
  %v749 = vsel %vm490, %v740, 0.0
  %750 = vadd.xlane.f32.xlu0 %v749
  %v751 = vpop.xlane.xlu0 %750
  %v752 = vsel %vm490, %v741, 0.0
  %753 = vadd.xlane.f32.xlu0 %v752
  %v754 = vpop.xlane.xlu0 %753
  %v755 = vsel %vm490, %v742, 0.0
  %756 = vadd.xlane.f32.xlu0 %v755
  %v757 = vpop.xlane.xlu0 %756
  %v758 = vsel %vm490, %v743, 0.0
  %759 = vadd.xlane.f32.xlu0 %v758
  %v760 = vpop.xlane.xlu0 %759
  %v761 = vsel %vm490, %v744, 0.0
  %762 = vadd.xlane.f32.xlu0 %v761
  %v763 = vpop.xlane.xlu0 %762
  %v764 = vsel %vm490, %v745, 0.0
  %765 = vadd.xlane.f32.xlu0 %v764
  %v766 = vpop.xlane.xlu0 %765
  %v767 = vsel %vm490, %v746, 0.0
  %768 = vadd.xlane.f32.xlu0 %v767
  %v769 = vpop.xlane.xlu0 %768
  %v770 = vsel %vm490, %v747, 0.0
  %771 = vadd.xlane.f32.xlu0 %v770
  %v772 = vpop.xlane.xlu0 %771
  %v773 = vsel %vm506, %v748, 0.0
  %774 = vadd.xlane.f32.xlu0 %v773
  %v775 = vpop.xlane.xlu0 %774
  %vm776 = vcmask 7168
  %v777 = vsel %vm776, %v661, %v706
  %v778 = vsel %vm776, %v664, %v709
  %v779 = vsel %vm776, %v667, %v712
  %v780 = vsel %vm776, %v670, %v715
  %v781 = vsel %vm776, %v673, %v718
  %v782 = vsel %vm776, %v676, %v721
  %v783 = vsel %vm776, %v679, %v724
  %v784 = vsel %vm776, %v682, %v727
  %v785 = vsel %vm776, %v685, %v730
  %vm786 = vcmask 15360
  %v787 = vsel %vm786, %v777, %v751
  %v788 = vsel %vm786, %v778, %v754
  %v789 = vsel %vm786, %v779, %v757
  %v790 = vsel %vm786, %v780, %v760
  %v791 = vsel %vm786, %v781, %v763
  %v792 = vsel %vm786, %v782, %v766
  %v793 = vsel %vm786, %v783, %v769
  %v794 = vsel %vm786, %v784, %v772
  %v795 = vsel %vm786, %v785, %v775
  %v796 = vld [vmem:[%s2 + $0x108] sm:$0x3]
  %v797 = vlaneseq
  %v798 = vshrl.u32 %v797, 7
  %v799 = vsub.s32 3, %v798
  %v800 = vrot.slane %v15, %v799
  %vm801 = vcmask 539648
  %v803 = vsel %vm801, %v796, 0
  %vm805 = vcmask 1041408
  %v807 = vsel %vm805, %v795, 0
  %809 = vmatprep.subr.mxu0 0.0
  %810 = vmatpush1.msra.mxu0 %v787
  %811 = vmatprep.subr.mxu0 0.0
  %812 = vmatpush1.msra.mxu0 %v788
  %813 = vmatprep.subr.mxu0 0.0
  %814 = vmatpush1.msra.mxu0 %v789
  %815 = vmatprep.subr.mxu0 0.0
  %816 = vmatpush1.msra.mxu0 %v790
  %817 = vmatprep.subr.mxu0 0.0
  %818 = vmatpush1.msra.mxu0 %v791
  %819 = vmatprep.subr.mxu0 0.0
  %820 = vmatpush1.msra.mxu0 %v792
  %821 = vmatprep.subr.mxu0 0.0
  %822 = vmatpush1.msra.mxu0 %v793
  %823 = vmatprep.subr.mxu0 0.0
  %824 = vmatpush1.msra.mxu0 %v794
  %825 = vmatprep.subr.mxu0 0.0
  %826 = vmatpush1.msra.mxu0 %v807
  %827 = vmatprep.subr.mxu0 0.0
  %828 = vmatpush1.msra.mxu0 0.0
  %829 = vmatprep.subr.mxu0 0.0
  %830 = vmatpush1.msra.mxu0 0.0
  %831 = vmatprep.subr.mxu0 0.0
  %832 = vmatpush1.msra.mxu0 0.0
  %833 = vmatprep.subr.mxu0 0.0
  %834 = vmatpush1.msra.mxu0 0.0
  %835 = vmatprep.subr.mxu0 0.0
  %836 = vmatpush1.msra.mxu0 0.0
  %837 = vmatprep.subr.mxu0 0.0
  %838 = vmatpush1.msra.mxu0 0.0
  %839 = vmatprep.subr.mxu0 0.0
  %840 = vmatpush1.msra.mxu0 0.0
  %841 = vmatprep.subr.mxu0 0.0
  %842 = vmatpush1.msra.mxu0 0.0
  %843 = vmatprep.subr.mxu0 0.0
  %844 = vmatpush1.msra.mxu0 0.0
  %845 = vmatprep.subr.mxu0 0.0
  %846 = vmatpush1.msra.mxu0 0.0
  %847 = vmatprep.subr.mxu0 0.0
  %848 = vmatpush1.msra.mxu0 0.0
  %849 = vmatprep.subr.mxu0 0.0
  %850 = vmatpush1.msra.mxu0 0.0
  %851 = vmatprep.subr.mxu0 0.0
  %852 = vmatpush1.msra.mxu0 0.0
  %853 = vmatprep.subr.mxu0 0.0
  %854 = vmatpush1.msra.mxu0 0.0
  %855 = vmatprep.subr.mxu0 0.0
  %856 = vmatpush1.msra.mxu0 0.0
  %857 = vmatprep.subr.mxu0 0.0
  %858 = vmatpush1.msra.mxu0 0.0
  %859 = vmatprep.subr.mxu0 0.0
  %860 = vmatpush1.msra.mxu0 0.0
  %861 = vmatprep.subr.mxu0 0.0
  %862 = vmatpush1.msra.mxu0 0.0
  %863 = vmatprep.subr.mxu0 0.0
  %864 = vmatpush1.msra.mxu0 0.0
  %865 = vmatprep.subr.mxu0 0.0
  %866 = vmatpush1.msra.mxu0 0.0
  %867 = vmatprep.subr.mxu0 0.0
  %868 = vmatpush1.msra.mxu0 0.0
  %869 = vmatprep.subr.mxu0 0.0
  %870 = vmatpush1.msra.mxu0 0.0
  %871 = vmatprep.subr.mxu0 0.0
  %872 = vmatpush1.msra.mxu0 0.0
  %873 = vmatprep.mubr.f32.mxu0 0.0
  %874 = vmatmul.mubr.f32.gmra.mrb[0].mxu0 %v803
  %v875 = vpop.f32.mrb[0].mxu0
  %v876 = vadd.f32 %v800, %v875
  %v877 = vpop.f32.mrb[0].mxu0
  %878 = vdwg.mxu0
  %v879 = vld [vmem:[%s2 + $0xe0] sm:$0x7]
  %v880 = vld [vmem:[%s2 + $0xe8] sm:$0x7]
  %v881 = vmul.f32 %v876, %v876
  %883 = vrot.lane.b32.xlu0 %v881, 127
  %v884 = vpop.permute.xlu0 %883
  %v886 = vadd.f32 %v881, %v884
  %v887 = vadd.f32 %v886, 1e-30
  %v888 = vrsqrt.pop %v887
  %vm889 = vcmp.gt.f32.partialorder %v886, 0.0
  %v890 = vmul.f32 %v876, %v888
  %v891 = vsel %vm889, %v890, 1.0
  %893 = vrot.lane.b32.xlu0 %v888, 1
  %v894 = vpop.permute.xlu0 %893
  %v896 = vmul.f32 %v876, %v894
  %898 = vrot.lane.b32.xlu0 %v896, 127
  %v899 = vpop.permute.xlu0 %898
  %v901 = vsel %vm889, %v899, 0.0
  %v902 = vmul.f32 %v876, 0.1
  %v903 = vand.u32 2147483647, %v902
  %vm904 = vcmp.le.f32.partialorder %v903, 0.7853982
  %vm905 = vcmp.lt.s32.totalorder %v902, 0
  %v906 = vand.u32 %v902, 2139095040
  %v907 = vshrl.u32 %v906, 23
  %v908 = vsub.s32 %v907, 127
  %v909 = vand.u32 2147483647, %v902
  %v910 = vand.u32 %v909, 8388607
  %v911 = vor.u32 %v910, 8388608
  %v912 = vsub.s32 0, %v911
  %v913 = vadd.s32 %v908, 1
  %vm914 = vcmp.gt.s32.totalorder %v913, 0
  %v915 = vsel %vm914, %v913, 0
  %v916 = vshrl.u32 %v915, 5
  %v917 = vand.u32 %v915, 31
  %v918 = vsub.s32 32, %v917
  %v919 = vshrl.u32 683565275, %v918
  %v920 = vshll.u32 683565275, %v917
  %v921 = vshrl.u32 2475754826, %v918
  %v922 = vor.u32 %v920, %v921
  %v923 = vshll.u32 2475754826, %v917
  %v924 = vshrl.u32 2131351028, %v918
  %v925 = vor.u32 %v923, %v924
  %v926 = vshll.u32 2131351028, %v917
  %v927 = vshrl.u32 2102212464, %v918
  %v928 = vor.u32 %v926, %v927
  %v929 = vshll.u32 2102212464, %v917
  %v930 = vshrl.u32 920167782, %v918
  %v931 = vor.u32 %v929, %v930
  %v932 = vshll.u32 920167782, %v917
  %v933 = vshrl.u32 1326507024, %v918
  %v934 = vor.u32 %v932, %v933
  %vm935 = vcmp.lt.s32.totalorder %v916, 1
  %vm936 = vcmp.lt.s32.totalorder %v916, 2
  %vm937 = vcmp.lt.s32.totalorder %v916, 3
  %vm938 = vcmp.lt.s32.totalorder %v916, 4
  %v939 = vsel %vm935, %v919, %v922
  %v940 = vsel %vm938, %v928, 2102212464
  %v941 = vsel %vm937, %v925, %v940
  %v942 = vsel %vm936, %v939, %v941
  %v943 = vsel %vm935, %v922, %v925
  %v944 = vsel %vm938, %v931, 920167782
  %v945 = vsel %vm937, %v928, %v944
  %v946 = vsel %vm936, %v943, %v945
  %v947 = vsel %vm935, %v925, %v928
  %v948 = vsel %vm938, %v934, 1326507024
  %v949 = vsel %vm937, %v931, %v948
  %v950 = vsel %vm936, %v947, %v949
  %v951 = vshll.u32 %v911, 8
  %v952 = vmul.u32.u64.compose %v951, %v950
  %v953 = vextract.low.u32 %v952
  %v954 = vextract.high.u32 %v952
  %v955 = vmul.u32.u64.compose %v951, %v946
  %v956 = vextract.low.u32 %v955
  %v957 = vextract.high.u32 %v955
  %v958 = vmul.u32 %v951, %v942
  %v959 = vadd.s32 %v954, %v956
  %vm960 = vc.u32 %v954, %v956
  %v961 = vadd.s32 %v957, 1
  %v962 = vsel %vm960, %v961, %v957
  %v963 = vadd.s32 %v958, %v962
  %v964 = vadd.s32 %v963, 536870912
  %v965 = vshrl.u32 %v964, 30
  %v966 = vshll.u32 %v965, 30
  %v967 = vsub.s32 %v963, %v966
  %vm968 = vcmp.lt.s32.totalorder %v967, 0
  %v969 = vsub.s32 0, %v967
  %v970 = vsel %vm968, %v969, %v967
  %v971 = vclz %v970
  %v972 = vsub.s32 %v971, 2
  %vm973 = vcmp.gt.s32.totalorder 0, %v972
  %v974 = vsel %vm973, 0, %v972
  %v975 = vsub.s32 32, %v974
  %v976 = vshll.u32 %v967, %v974
  %v977 = vshrl.u32 %v959, %v975
  %v978 = vor.u32 %v976, %v977
  %v979 = vsub.s32 4294967266, %v974
  %v980 = vadd.s32 %v979, 127
  %v981 = vshll.u32 %v980, 23
  %v982 = vor.u32 4788187, %v981
  %v983 = vand.u32 2147483647, %v982
  %v985 = vcvt.s32.f32 %v978
  %v986 = vmul.f32 %v985, %v983
  %v987 = vxor.u32 %v986, 2147483648
  %v988 = vsel %vm905, %v987, %v986
  %v989 = vsub.s32 4, %v965
  %v990 = vsel %vm905, %v989, %v965
  %v991 = vsel %vm904, %v902, %v988
  %v992 = vsel %vm904, 0, %v990
  %v993 = vcosq.f32.pop %v991
  %v994 = vsinq.f32.pop %v991
  %vm995 = vweird.f32 %v902
  %v996 = vand.u32 %v992, 3
  %vm997 = vcmp.lt.s32.totalorder %v996, 2
  %vm998 = vcmp.eq.s32.totalorder %v996, 0
  %v999 = vxor.u32 %v994, 2147483648
  %v1000 = vsel %vm998, %v993, %v999
  %vm1001 = vcmp.eq.s32.totalorder %v996, 2
  %v1002 = vxor.u32 %v993, 2147483648
  %v1003 = vsel %vm1001, %v1002, %v994
  %v1004 = vsel %vm997, %v1000, %v1003
  %v1005 = vsel %vm995, nan, %v1004
  %v1006 = vand.u32 2147483647, %v902
  %vm1007 = vcmp.le.f32.partialorder %v1006, 0.7853982
  %vm1008 = vcmp.lt.s32.totalorder %v902, 0
  %v1009 = vand.u32 %v902, 2139095040
  %v1010 = vshrl.u32 %v1009, 23
  %v1011 = vsub.s32 %v1010, 127
  %v1012 = vand.u32 2147483647, %v902
  %v1013 = vand.u32 %v1012, 8388607
  %v1014 = vor.u32 %v1013, 8388608
  %v1015 = vsub.s32 0, %v1014
  %v1016 = vadd.s32 %v1011, 1
  %vm1017 = vcmp.gt.s32.totalorder %v1016, 0
  %v1018 = vsel %vm1017, %v1016, 0
  %v1019 = vshrl.u32 %v1018, 5
  %v1020 = vand.u32 %v1018, 31
  %v1021 = vsub.s32 32, %v1020
  %v1022 = vshrl.u32 683565275, %v1021
  %v1023 = vshll.u32 683565275, %v1020
  %v1024 = vshrl.u32 2475754826, %v1021
  %v1025 = vor.u32 %v1023, %v1024
  %v1026 = vshll.u32 2475754826, %v1020
  %v1027 = vshrl.u32 2131351028, %v1021
  %v1028 = vor.u32 %v1026, %v1027
  %v1029 = vshll.u32 2131351028, %v1020
  %v1030 = vshrl.u32 2102212464, %v1021
  %v1031 = vor.u32 %v1029, %v1030
  %v1032 = vshll.u32 2102212464, %v1020
  %v1033 = vshrl.u32 920167782, %v1021
  %v1034 = vor.u32 %v1032, %v1033
  %v1035 = vshll.u32 920167782, %v1020
  %v1036 = vshrl.u32 1326507024, %v1021
  %v1037 = vor.u32 %v1035, %v1036
  %vm1038 = vcmp.lt.s32.totalorder %v1019, 1
  %vm1039 = vcmp.lt.s32.totalorder %v1019, 2
  %vm1040 = vcmp.lt.s32.totalorder %v1019, 3
  %vm1041 = vcmp.lt.s32.totalorder %v1019, 4
  %v1042 = vsel %vm1038, %v1022, %v1025
  %v1043 = vsel %vm1041, %v1031, 2102212464
  %v1044 = vsel %vm1040, %v1028, %v1043
  %v1045 = vsel %vm1039, %v1042, %v1044
  %v1046 = vsel %vm1038, %v1025, %v1028
  %v1047 = vsel %vm1041, %v1034, 920167782
  %v1048 = vsel %vm1040, %v1031, %v1047
  %v1049 = vsel %vm1039, %v1046, %v1048
  %v1050 = vsel %vm1038, %v1028, %v1031
  %v1051 = vsel %vm1041, %v1037, 1326507024
  %v1052 = vsel %vm1040, %v1034, %v1051
  %v1053 = vsel %vm1039, %v1050, %v1052
  %v1054 = vshll.u32 %v1014, 8
  %v1055 = vmul.u32.u64.compose %v1054, %v1053
  %v1056 = vextract.low.u32 %v1055
  %v1057 = vextract.high.u32 %v1055
  %v1058 = vmul.u32.u64.compose %v1054, %v1049
  %v1059 = vextract.low.u32 %v1058
  %v1060 = vextract.high.u32 %v1058
  %v1061 = vmul.u32 %v1054, %v1045
  %v1062 = vadd.s32 %v1057, %v1059
  %vm1063 = vc.u32 %v1057, %v1059
  %v1064 = vadd.s32 %v1060, 1
  %v1065 = vsel %vm1063, %v1064, %v1060
  %v1066 = vadd.s32 %v1061, %v1065
  %v1067 = vadd.s32 %v1066, 536870912
  %v1068 = vshrl.u32 %v1067, 30
  %v1069 = vshll.u32 %v1068, 30
  %v1070 = vsub.s32 %v1066, %v1069
  %vm1071 = vcmp.lt.s32.totalorder %v1070, 0
  %v1072 = vsub.s32 0, %v1070
  %v1073 = vsel %vm1071, %v1072, %v1070
  %v1074 = vclz %v1073
  %v1075 = vsub.s32 %v1074, 2
  %vm1076 = vcmp.gt.s32.totalorder 0, %v1075
  %v1077 = vsel %vm1076, 0, %v1075
  %v1078 = vsub.s32 32, %v1077
  %v1079 = vshll.u32 %v1070, %v1077
  %v1080 = vshrl.u32 %v1062, %v1078
  %v1081 = vor.u32 %v1079, %v1080
  %v1082 = vsub.s32 4294967266, %v1077
  %v1083 = vadd.s32 %v1082, 127
  %v1084 = vshll.u32 %v1083, 23
  %v1085 = vor.u32 4788187, %v1084
  %v1086 = vand.u32 2147483647, %v1085
  %v1088 = vcvt.s32.f32 %v1081
  %v1089 = vmul.f32 %v1088, %v1086
  %v1090 = vxor.u32 %v1089, 2147483648
  %v1091 = vsel %vm1008, %v1090, %v1089
  %v1092 = vsub.s32 4, %v1068
  %v1093 = vsel %vm1008, %v1092, %v1068
  %v1094 = vsel %vm1007, %v902, %v1091
  %v1095 = vsel %vm1007, 0, %v1093
  %v1096 = vcosq.f32.pop %v1094
  %v1097 = vsinq.f32.pop %v1094
  %vm1098 = vweird.f32 %v902
  %v1099 = vadd.s32 %v1095, 3
  %v1100 = vand.u32 %v1099, 3
  %vm1101 = vcmp.lt.s32.totalorder %v1100, 2
  %vm1102 = vcmp.eq.s32.totalorder %v1100, 0
  %v1103 = vxor.u32 %v1097, 2147483648
  %v1104 = vsel %vm1102, %v1096, %v1103
  %vm1105 = vcmp.eq.s32.totalorder %v1100, 2
  %v1106 = vxor.u32 %v1096, 2147483648
  %v1107 = vsel %vm1105, %v1106, %v1097
  %v1108 = vsel %vm1101, %v1104, %v1107
  %v1109 = vsel %vm1098, nan, %v1108
  %1111 = vrot.lane.b32.xlu0 %v1005, 126
  %v1112 = vpop.permute.xlu0 %1111
  %v1114 = vmul.f32 %v891, %v1112
  %1116 = vrot.lane.b32.xlu0 %v1109, 126
  %v1117 = vpop.permute.xlu0 %1116
  %v1119 = vmul.f32 %v901, %v1117
  %v1120 = vsub.f32 %v1114, %v1119
  %v1121 = vmul.f32 %v901, %v1112
  %v1122 = vmul.f32 %v891, %v1117
  %v1123 = vadd.f32 %v1121, %v1122
  %v1124 = vmul.f32 %v1123, 0.981
  %1126 = vrot.lane.b32.xlu0 %v1124, 2
  %v1127 = vpop.permute.xlu0 %1126
  %v1129 = vsub.f32 %v876, %v1127
  %1131 = vset.pattern.permute.xlu0 0
  %1132 = vperm.xlu0 %1131, %v1120
  %v1133 = vpop.permute.xlu0 %1132
  %v1135 = vlaneseq
  %v1136 = vshrl.u32 %v1135, 7
  %v1137 = vsub.s32 0, %v1136
  %v1138 = vrot.slane %v879, %v1137
  %v1139 = vmul.f32 %v1133, %v1138
  %1141 = vset.pattern.permute.xlu0 0
  %1142 = vperm.xlu0 %1141, %v1123
  %v1143 = vpop.permute.xlu0 %1142
  %v1145 = vlaneseq
  %v1146 = vshrl.u32 %v1145, 7
  %v1147 = vsub.s32 1, %v1146
  %v1148 = vrot.slane %v879, %v1147
  %v1149 = vmul.f32 %v1143, %v1148
  %v1150 = vadd.f32 %v1139, %v1149
  %1152 = vset.pattern.permute.xlu0 2
  %1153 = vperm.xlu0 %1152, %v1129
  %v1154 = vpop.permute.xlu0 %1153
  %v1156 = vlaneseq
  %v1157 = vshrl.u32 %v1156, 7
  %v1158 = vsub.s32 2, %v1157
  %v1159 = vrot.slane %v879, %v1158
  %v1160 = vmul.f32 %v1154, %v1159
  %v1161 = vadd.f32 %v1150, %v1160
  %v1162 = vlaneseq
  %v1163 = vshrl.u32 %v1162, 7
  %v1164 = vsub.s32 5, %v1163
  %v1165 = vrot.slane %v15, %v1164
  %v1166 = vadd.f32 %v1161, %v1165
  %v1167 = vmax.f32 %v1166, 0.0
  %v1168 = vlaneseq
  %v1169 = vshrl.u32 %v1168, 7
  %v1170 = vsub.s32 0, %v1169
  %v1171 = vrot.slane %v880, %v1170
  %v1172 = vmul.f32 %v1167, %v1171
  %v1173 = vsel %vm506, %v1172, 0.0
  %1174 = vadd.xlane.f32.xlu0 %v1173
  %v1175 = vpop.xlane.xlu0 %1174
  %v1176 = vadd.f32 %v1120, %v1175
  %v1177 = vlaneseq
  %v1178 = vshrl.u32 %v1177, 7
  %v1179 = vsub.s32 4, %v1178
  %v1180 = vrot.slane %v15, %v1179
  %v1181 = vadd.f32 %v1176, %v1180
  %v1182 = vlaneseq
  %v1183 = vshrl.u32 %v1182, 7
  %v1184 = vsub.s32 1, %v1183
  %v1185 = vrot.slane %v880, %v1184
  %v1186 = vmul.f32 %v1167, %v1185
  %v1187 = vsel %vm506, %v1186, 0.0
  %1188 = vadd.xlane.f32.xlu0 %v1187
  %v1189 = vpop.xlane.xlu0 %1188
  %v1190 = vadd.f32 %v1123, %v1189
  %1192 = vrot.lane.b32.xlu0 %v1180, 127
  %v1193 = vpop.permute.xlu0 %1192
  %v1195 = vadd.f32 %v1190, %v1193
  %v1196 = vlaneseq
  %v1197 = vshrl.u32 %v1196, 7
  %v1198 = vsub.s32 2, %v1197
  %v1199 = vrot.slane %v880, %v1198
  %v1200 = vmul.f32 %v1167, %v1199
  %v1201 = vsel %vm506, %v1200, 0.0
  %1202 = vadd.xlane.f32.xlu0 %v1201
  %v1203 = vpop.xlane.xlu0 %1202
  %v1204 = vadd.f32 %v1129, %v1203
  %v1205 = vadd.f32 %v1204, %v1180
  %v1206 = vmul.f32 %v1181, %v1181
  %v1207 = vmul.f32 %v1195, %v1195
  %v1208 = vadd.f32 %v1206, %v1207
  %v1209 = vadd.f32 %v1208, 1e-30
  %v1210 = vrsqrt.pop %v1209
  %vm1211 = vcmp.gt.f32.partialorder %v1208, 0.0
  %v1212 = vmul.f32 %v1181, %v1210
  %v1213 = vsel %vm1211, %v1212, 1.0
  %v1214 = vmul.f32 %v1195, %v1210
  %v1215 = vsel %vm1211, %v1214, 0.0
  %v1216 = vmul.f32 %v1205, 0.1
  %v1217 = vand.u32 2147483647, %v1216
  %vm1218 = vcmp.le.f32.partialorder %v1217, 0.7853982
  %vm1219 = vcmp.lt.s32.totalorder %v1216, 0
  %v1220 = vand.u32 %v1216, 2139095040
  %v1221 = vshrl.u32 %v1220, 23
  %v1222 = vsub.s32 %v1221, 127
  %v1223 = vand.u32 2147483647, %v1216
  %v1224 = vand.u32 %v1223, 8388607
  %v1225 = vor.u32 %v1224, 8388608
  %v1226 = vsub.s32 0, %v1225
  %v1227 = vadd.s32 %v1222, 1
  %vm1228 = vcmp.gt.s32.totalorder %v1227, 0
  %v1229 = vsel %vm1228, %v1227, 0
  %v1230 = vshrl.u32 %v1229, 5
  %v1231 = vand.u32 %v1229, 31
  %v1232 = vsub.s32 32, %v1231
  %v1233 = vshrl.u32 683565275, %v1232
  %v1234 = vshll.u32 683565275, %v1231
  %v1235 = vshrl.u32 2475754826, %v1232
  %v1236 = vor.u32 %v1234, %v1235
  %v1237 = vshll.u32 2475754826, %v1231
  %v1238 = vshrl.u32 2131351028, %v1232
  %v1239 = vor.u32 %v1237, %v1238
  %v1240 = vshll.u32 2131351028, %v1231
  %v1241 = vshrl.u32 2102212464, %v1232
  %v1242 = vor.u32 %v1240, %v1241
  %v1243 = vshll.u32 2102212464, %v1231
  %v1244 = vshrl.u32 920167782, %v1232
  %v1245 = vor.u32 %v1243, %v1244
  %v1246 = vshll.u32 920167782, %v1231
  %v1247 = vshrl.u32 1326507024, %v1232
  %v1248 = vor.u32 %v1246, %v1247
  %vm1249 = vcmp.lt.s32.totalorder %v1230, 1
  %vm1250 = vcmp.lt.s32.totalorder %v1230, 2
  %vm1251 = vcmp.lt.s32.totalorder %v1230, 3
  %vm1252 = vcmp.lt.s32.totalorder %v1230, 4
  %v1253 = vsel %vm1249, %v1233, %v1236
  %v1254 = vsel %vm1252, %v1242, 2102212464
  %v1255 = vsel %vm1251, %v1239, %v1254
  %v1256 = vsel %vm1250, %v1253, %v1255
  %v1257 = vsel %vm1249, %v1236, %v1239
  %v1258 = vsel %vm1252, %v1245, 920167782
  %v1259 = vsel %vm1251, %v1242, %v1258
  %v1260 = vsel %vm1250, %v1257, %v1259
  %v1261 = vsel %vm1249, %v1239, %v1242
  %v1262 = vsel %vm1252, %v1248, 1326507024
  %v1263 = vsel %vm1251, %v1245, %v1262
  %v1264 = vsel %vm1250, %v1261, %v1263
  %v1265 = vshll.u32 %v1225, 8
  %v1266 = vmul.u32.u64.compose %v1265, %v1264
  %v1267 = vextract.low.u32 %v1266
  %v1268 = vextract.high.u32 %v1266
  %v1269 = vmul.u32.u64.compose %v1265, %v1260
  %v1270 = vextract.low.u32 %v1269
  %v1271 = vextract.high.u32 %v1269
  %v1272 = vmul.u32 %v1265, %v1256
  %v1273 = vadd.s32 %v1268, %v1270
  %vm1274 = vc.u32 %v1268, %v1270
  %v1275 = vadd.s32 %v1271, 1
  %v1276 = vsel %vm1274, %v1275, %v1271
  %v1277 = vadd.s32 %v1272, %v1276
  %v1278 = vadd.s32 %v1277, 536870912
  %v1279 = vshrl.u32 %v1278, 30
  %v1280 = vshll.u32 %v1279, 30
  %v1281 = vsub.s32 %v1277, %v1280
  %vm1282 = vcmp.lt.s32.totalorder %v1281, 0
  %v1283 = vsub.s32 0, %v1281
  %v1284 = vsel %vm1282, %v1283, %v1281
  %v1285 = vclz %v1284
  %v1286 = vsub.s32 %v1285, 2
  %vm1287 = vcmp.gt.s32.totalorder 0, %v1286
  %v1288 = vsel %vm1287, 0, %v1286
  %v1289 = vsub.s32 32, %v1288
  %v1290 = vshll.u32 %v1281, %v1288
  %v1291 = vshrl.u32 %v1273, %v1289
  %v1292 = vor.u32 %v1290, %v1291
  %v1293 = vsub.s32 4294967266, %v1288
  %v1294 = vadd.s32 %v1293, 127
  %v1295 = vshll.u32 %v1294, 23
  %v1296 = vor.u32 4788187, %v1295
  %v1297 = vand.u32 2147483647, %v1296
  %v1299 = vcvt.s32.f32 %v1292
  %v1300 = vmul.f32 %v1299, %v1297
  %v1301 = vxor.u32 %v1300, 2147483648
  %v1302 = vsel %vm1219, %v1301, %v1300
  %v1303 = vsub.s32 4, %v1279
  %v1304 = vsel %vm1219, %v1303, %v1279
  %v1305 = vsel %vm1218, %v1216, %v1302
  %v1306 = vsel %vm1218, 0, %v1304
  %v1307 = vcosq.f32.pop %v1305
  %v1308 = vsinq.f32.pop %v1305
  %vm1309 = vweird.f32 %v1216
  %v1310 = vand.u32 %v1306, 3
  %vm1311 = vcmp.lt.s32.totalorder %v1310, 2
  %vm1312 = vcmp.eq.s32.totalorder %v1310, 0
  %v1313 = vxor.u32 %v1308, 2147483648
  %v1314 = vsel %vm1312, %v1307, %v1313
  %vm1315 = vcmp.eq.s32.totalorder %v1310, 2
  %v1316 = vxor.u32 %v1307, 2147483648
  %v1317 = vsel %vm1315, %v1316, %v1308
  %v1318 = vsel %vm1311, %v1314, %v1317
  %v1319 = vsel %vm1309, nan, %v1318
  %v1320 = vand.u32 2147483647, %v1216
  %vm1321 = vcmp.le.f32.partialorder %v1320, 0.7853982
  %vm1322 = vcmp.lt.s32.totalorder %v1216, 0
  %v1323 = vand.u32 %v1216, 2139095040
  %v1324 = vshrl.u32 %v1323, 23
  %v1325 = vsub.s32 %v1324, 127
  %v1326 = vand.u32 2147483647, %v1216
  %v1327 = vand.u32 %v1326, 8388607
  %v1328 = vor.u32 %v1327, 8388608
  %v1329 = vsub.s32 0, %v1328
  %v1330 = vadd.s32 %v1325, 1
  %vm1331 = vcmp.gt.s32.totalorder %v1330, 0
  %v1332 = vsel %vm1331, %v1330, 0
  %v1333 = vshrl.u32 %v1332, 5
  %v1334 = vand.u32 %v1332, 31
  %v1335 = vsub.s32 32, %v1334
  %v1336 = vshrl.u32 683565275, %v1335
  %v1337 = vshll.u32 683565275, %v1334
  %v1338 = vshrl.u32 2475754826, %v1335
  %v1339 = vor.u32 %v1337, %v1338
  %v1340 = vshll.u32 2475754826, %v1334
  %v1341 = vshrl.u32 2131351028, %v1335
  %v1342 = vor.u32 %v1340, %v1341
  %v1343 = vshll.u32 2131351028, %v1334
  %v1344 = vshrl.u32 2102212464, %v1335
  %v1345 = vor.u32 %v1343, %v1344
  %v1346 = vshll.u32 2102212464, %v1334
  %v1347 = vshrl.u32 920167782, %v1335
  %v1348 = vor.u32 %v1346, %v1347
  %v1349 = vshll.u32 920167782, %v1334
  %v1350 = vshrl.u32 1326507024, %v1335
  %v1351 = vor.u32 %v1349, %v1350
  %vm1352 = vcmp.lt.s32.totalorder %v1333, 1
  %vm1353 = vcmp.lt.s32.totalorder %v1333, 2
  %vm1354 = vcmp.lt.s32.totalorder %v1333, 3
  %vm1355 = vcmp.lt.s32.totalorder %v1333, 4
  %v1356 = vsel %vm1352, %v1336, %v1339
  %v1357 = vsel %vm1355, %v1345, 2102212464
  %v1358 = vsel %vm1354, %v1342, %v1357
  %v1359 = vsel %vm1353, %v1356, %v1358
  %v1360 = vsel %vm1352, %v1339, %v1342
  %v1361 = vsel %vm1355, %v1348, 920167782
  %v1362 = vsel %vm1354, %v1345, %v1361
  %v1363 = vsel %vm1353, %v1360, %v1362
  %v1364 = vsel %vm1352, %v1342, %v1345
  %v1365 = vsel %vm1355, %v1351, 1326507024
  %v1366 = vsel %vm1354, %v1348, %v1365
  %v1367 = vsel %vm1353, %v1364, %v1366
  %v1368 = vshll.u32 %v1328, 8
  %v1369 = vmul.u32.u64.compose %v1368, %v1367
  %v1370 = vextract.low.u32 %v1369
  %v1371 = vextract.high.u32 %v1369
  %v1372 = vmul.u32.u64.compose %v1368, %v1363
  %v1373 = vextract.low.u32 %v1372
  %v1374 = vextract.high.u32 %v1372
  %v1375 = vmul.u32 %v1368, %v1359
  %v1376 = vadd.s32 %v1371, %v1373
  %vm1377 = vc.u32 %v1371, %v1373
  %v1378 = vadd.s32 %v1374, 1
  %v1379 = vsel %vm1377, %v1378, %v1374
  %v1380 = vadd.s32 %v1375, %v1379
  %v1381 = vadd.s32 %v1380, 536870912
  %v1382 = vshrl.u32 %v1381, 30
  %v1383 = vshll.u32 %v1382, 30
  %v1384 = vsub.s32 %v1380, %v1383
  %vm1385 = vcmp.lt.s32.totalorder %v1384, 0
  %v1386 = vsub.s32 0, %v1384
  %v1387 = vsel %vm1385, %v1386, %v1384
  %v1388 = vclz %v1387
  %v1389 = vsub.s32 %v1388, 2
  %vm1390 = vcmp.gt.s32.totalorder 0, %v1389
  %v1391 = vsel %vm1390, 0, %v1389
  %v1392 = vsub.s32 32, %v1391
  %v1393 = vshll.u32 %v1384, %v1391
  %v1394 = vshrl.u32 %v1376, %v1392
  %v1395 = vor.u32 %v1393, %v1394
  %v1396 = vsub.s32 4294967266, %v1391
  %v1397 = vadd.s32 %v1396, 127
  %v1398 = vshll.u32 %v1397, 23
  %v1399 = vor.u32 4788187, %v1398
  %v1400 = vand.u32 2147483647, %v1399
  %v1402 = vcvt.s32.f32 %v1395
  %v1403 = vmul.f32 %v1402, %v1400
  %v1404 = vxor.u32 %v1403, 2147483648
  %v1405 = vsel %vm1322, %v1404, %v1403
  %v1406 = vsub.s32 4, %v1382
  %v1407 = vsel %vm1322, %v1406, %v1382
  %v1408 = vsel %vm1321, %v1216, %v1405
  %v1409 = vsel %vm1321, 0, %v1407
  %v1410 = vcosq.f32.pop %v1408
  %v1411 = vsinq.f32.pop %v1408
  %vm1412 = vweird.f32 %v1216
  %v1413 = vadd.s32 %v1409, 3
  %v1414 = vand.u32 %v1413, 3
  %vm1415 = vcmp.lt.s32.totalorder %v1414, 2
  %vm1416 = vcmp.eq.s32.totalorder %v1414, 0
  %v1417 = vxor.u32 %v1411, 2147483648
  %v1418 = vsel %vm1416, %v1410, %v1417
  %vm1419 = vcmp.eq.s32.totalorder %v1414, 2
  %v1420 = vxor.u32 %v1410, 2147483648
  %v1421 = vsel %vm1419, %v1420, %v1411
  %v1422 = vsel %vm1415, %v1418, %v1421
  %v1423 = vsel %vm1412, nan, %v1422
  %1425 = vrot.lane.b32.xlu0 %v1319, 126
  %v1426 = vpop.permute.xlu0 %1425
  %v1428 = vmul.f32 %v1213, %v1426
  %1430 = vrot.lane.b32.xlu0 %v1423, 126
  %v1431 = vpop.permute.xlu0 %1430
  %v1433 = vmul.f32 %v1215, %v1431
  %v1434 = vsub.f32 %v1428, %v1433
  %v1435 = vmul.f32 %v1215, %v1426
  %v1436 = vmul.f32 %v1213, %v1431
  %v1437 = vadd.f32 %v1435, %v1436
  %v1438 = vmul.f32 %v1437, 0.981
  %1440 = vrot.lane.b32.xlu0 %v1438, 2
  %v1441 = vpop.permute.xlu0 %1440
  %v1443 = vsub.f32 %v1205, %v1441
  %1445 = vset.pattern.permute.xlu0 0
  %1446 = vperm.xlu0 %1445, %v1434
  %v1447 = vpop.permute.xlu0 %1446
  %v1449 = vmul.f32 %v1447, %v1138
  %1451 = vset.pattern.permute.xlu0 0
  %1452 = vperm.xlu0 %1451, %v1437
  %v1453 = vpop.permute.xlu0 %1452
  %v1455 = vmul.f32 %v1453, %v1148
  %v1456 = vadd.f32 %v1449, %v1455
  %1458 = vset.pattern.permute.xlu0 2
  %1459 = vperm.xlu0 %1458, %v1443
  %v1460 = vpop.permute.xlu0 %1459
  %v1462 = vmul.f32 %v1460, %v1159
  %v1463 = vadd.f32 %v1456, %v1462
  %v1464 = vadd.f32 %v1463, %v1165
  %v1465 = vmax.f32 %v1464, 0.0
  %v1466 = vmul.f32 %v1465, %v1171
  %v1467 = vsel %vm506, %v1466, 0.0
  %1468 = vadd.xlane.f32.xlu0 %v1467
  %v1469 = vpop.xlane.xlu0 %1468
  %v1470 = vadd.f32 %v1434, %v1469
  %v1471 = vadd.f32 %v1470, %v1180
  %v1472 = vmul.f32 %v1465, %v1185
  %v1473 = vsel %vm506, %v1472, 0.0
  %1474 = vadd.xlane.f32.xlu0 %v1473
  %v1475 = vpop.xlane.xlu0 %1474
  %v1476 = vadd.f32 %v1437, %v1475
  %v1477 = vadd.f32 %v1476, %v1193
  %v1478 = vmul.f32 %v1465, %v1199
  %v1479 = vsel %vm506, %v1478, 0.0
  %1480 = vadd.xlane.f32.xlu0 %v1479
  %v1481 = vpop.xlane.xlu0 %1480
  %v1482 = vadd.f32 %v1443, %v1481
  %v1483 = vadd.f32 %v1482, %v1180
  %v1484 = vmul.f32 %v1471, %v1471
  %v1485 = vmul.f32 %v1477, %v1477
  %v1486 = vadd.f32 %v1484, %v1485
  %v1487 = vadd.f32 %v1486, 1e-30
  %v1488 = vrsqrt.pop %v1487
  %vm1489 = vcmp.gt.f32.partialorder %v1486, 0.0
  %v1490 = vmul.f32 %v1471, %v1488
  %v1491 = vsel %vm1489, %v1490, 1.0
  %v1492 = vmul.f32 %v1477, %v1488
  %v1493 = vsel %vm1489, %v1492, 0.0
  %v1494 = vmul.f32 %v1483, 0.1
  %v1495 = vand.u32 2147483647, %v1494
  %vm1496 = vcmp.le.f32.partialorder %v1495, 0.7853982
  %vm1497 = vcmp.lt.s32.totalorder %v1494, 0
  %v1498 = vand.u32 %v1494, 2139095040
  %v1499 = vshrl.u32 %v1498, 23
  %v1500 = vsub.s32 %v1499, 127
  %v1501 = vand.u32 2147483647, %v1494
  %v1502 = vand.u32 %v1501, 8388607
  %v1503 = vor.u32 %v1502, 8388608
  %v1504 = vsub.s32 0, %v1503
  %v1505 = vadd.s32 %v1500, 1
  %vm1506 = vcmp.gt.s32.totalorder %v1505, 0
  %v1507 = vsel %vm1506, %v1505, 0
  %v1508 = vshrl.u32 %v1507, 5
  %v1509 = vand.u32 %v1507, 31
  %v1510 = vsub.s32 32, %v1509
  %v1511 = vshrl.u32 683565275, %v1510
  %v1512 = vshll.u32 683565275, %v1509
  %v1513 = vshrl.u32 2475754826, %v1510
  %v1514 = vor.u32 %v1512, %v1513
  %v1515 = vshll.u32 2475754826, %v1509
  %v1516 = vshrl.u32 2131351028, %v1510
  %v1517 = vor.u32 %v1515, %v1516
  %v1518 = vshll.u32 2131351028, %v1509
  %v1519 = vshrl.u32 2102212464, %v1510
  %v1520 = vor.u32 %v1518, %v1519
  %v1521 = vshll.u32 2102212464, %v1509
  %v1522 = vshrl.u32 920167782, %v1510
  %v1523 = vor.u32 %v1521, %v1522
  %v1524 = vshll.u32 920167782, %v1509
  %v1525 = vshrl.u32 1326507024, %v1510
  %v1526 = vor.u32 %v1524, %v1525
  %vm1527 = vcmp.lt.s32.totalorder %v1508, 1
  %vm1528 = vcmp.lt.s32.totalorder %v1508, 2
  %vm1529 = vcmp.lt.s32.totalorder %v1508, 3
  %vm1530 = vcmp.lt.s32.totalorder %v1508, 4
  %v1531 = vsel %vm1527, %v1511, %v1514
  %v1532 = vsel %vm1530, %v1520, 2102212464
  %v1533 = vsel %vm1529, %v1517, %v1532
  %v1534 = vsel %vm1528, %v1531, %v1533
  %v1535 = vsel %vm1527, %v1514, %v1517
  %v1536 = vsel %vm1530, %v1523, 920167782
  %v1537 = vsel %vm1529, %v1520, %v1536
  %v1538 = vsel %vm1528, %v1535, %v1537
  %v1539 = vsel %vm1527, %v1517, %v1520
  %v1540 = vsel %vm1530, %v1526, 1326507024
  %v1541 = vsel %vm1529, %v1523, %v1540
  %v1542 = vsel %vm1528, %v1539, %v1541
  %v1543 = vshll.u32 %v1503, 8
  %v1544 = vmul.u32.u64.compose %v1543, %v1542
  %v1545 = vextract.low.u32 %v1544
  %v1546 = vextract.high.u32 %v1544
  %v1547 = vmul.u32.u64.compose %v1543, %v1538
  %v1548 = vextract.low.u32 %v1547
  %v1549 = vextract.high.u32 %v1547
  %v1550 = vmul.u32 %v1543, %v1534
  %v1551 = vadd.s32 %v1546, %v1548
  %vm1552 = vc.u32 %v1546, %v1548
  %v1553 = vadd.s32 %v1549, 1
  %v1554 = vsel %vm1552, %v1553, %v1549
  %v1555 = vadd.s32 %v1550, %v1554
  %v1556 = vadd.s32 %v1555, 536870912
  %v1557 = vshrl.u32 %v1556, 30
  %v1558 = vshll.u32 %v1557, 30
  %v1559 = vsub.s32 %v1555, %v1558
  %vm1560 = vcmp.lt.s32.totalorder %v1559, 0
  %v1561 = vsub.s32 0, %v1559
  %v1562 = vsel %vm1560, %v1561, %v1559
  %v1563 = vclz %v1562
  %v1564 = vsub.s32 %v1563, 2
  %vm1565 = vcmp.gt.s32.totalorder 0, %v1564
  %v1566 = vsel %vm1565, 0, %v1564
  %v1567 = vsub.s32 32, %v1566
  %v1568 = vshll.u32 %v1559, %v1566
  %v1569 = vshrl.u32 %v1551, %v1567
  %v1570 = vor.u32 %v1568, %v1569
  %v1571 = vsub.s32 4294967266, %v1566
  %v1572 = vadd.s32 %v1571, 127
  %v1573 = vshll.u32 %v1572, 23
  %v1574 = vor.u32 4788187, %v1573
  %v1575 = vand.u32 2147483647, %v1574
  %v1577 = vcvt.s32.f32 %v1570
  %v1578 = vmul.f32 %v1577, %v1575
  %v1579 = vxor.u32 %v1578, 2147483648
  %v1580 = vsel %vm1497, %v1579, %v1578
  %v1581 = vsub.s32 4, %v1557
  %v1582 = vsel %vm1497, %v1581, %v1557
  %v1583 = vsel %vm1496, %v1494, %v1580
  %v1584 = vsel %vm1496, 0, %v1582
  %v1585 = vcosq.f32.pop %v1583
  %v1586 = vsinq.f32.pop %v1583
  %vm1587 = vweird.f32 %v1494
  %v1588 = vand.u32 %v1584, 3
  %vm1589 = vcmp.lt.s32.totalorder %v1588, 2
  %vm1590 = vcmp.eq.s32.totalorder %v1588, 0
  %v1591 = vxor.u32 %v1586, 2147483648
  %v1592 = vsel %vm1590, %v1585, %v1591
  %vm1593 = vcmp.eq.s32.totalorder %v1588, 2
  %v1594 = vxor.u32 %v1585, 2147483648
  %v1595 = vsel %vm1593, %v1594, %v1586
  %v1596 = vsel %vm1589, %v1592, %v1595
  %v1597 = vsel %vm1587, nan, %v1596
  %v1598 = vand.u32 2147483647, %v1494
  %vm1599 = vcmp.le.f32.partialorder %v1598, 0.7853982
  %vm1600 = vcmp.lt.s32.totalorder %v1494, 0
  %v1601 = vand.u32 %v1494, 2139095040
  %v1602 = vshrl.u32 %v1601, 23
  %v1603 = vsub.s32 %v1602, 127
  %v1604 = vand.u32 2147483647, %v1494
  %v1605 = vand.u32 %v1604, 8388607
  %v1606 = vor.u32 %v1605, 8388608
  %v1607 = vsub.s32 0, %v1606
  %v1608 = vadd.s32 %v1603, 1
  %vm1609 = vcmp.gt.s32.totalorder %v1608, 0
  %v1610 = vsel %vm1609, %v1608, 0
  %v1611 = vshrl.u32 %v1610, 5
  %v1612 = vand.u32 %v1610, 31
  %v1613 = vsub.s32 32, %v1612
  %v1614 = vshrl.u32 683565275, %v1613
  %v1615 = vshll.u32 683565275, %v1612
  %v1616 = vshrl.u32 2475754826, %v1613
  %v1617 = vor.u32 %v1615, %v1616
  %v1618 = vshll.u32 2475754826, %v1612
  %v1619 = vshrl.u32 2131351028, %v1613
  %v1620 = vor.u32 %v1618, %v1619
  %v1621 = vshll.u32 2131351028, %v1612
  %v1622 = vshrl.u32 2102212464, %v1613
  %v1623 = vor.u32 %v1621, %v1622
  %v1624 = vshll.u32 2102212464, %v1612
  %v1625 = vshrl.u32 920167782, %v1613
  %v1626 = vor.u32 %v1624, %v1625
  %v1627 = vshll.u32 920167782, %v1612
  %v1628 = vshrl.u32 1326507024, %v1613
  %v1629 = vor.u32 %v1627, %v1628
  %vm1630 = vcmp.lt.s32.totalorder %v1611, 1
  %vm1631 = vcmp.lt.s32.totalorder %v1611, 2
  %vm1632 = vcmp.lt.s32.totalorder %v1611, 3
  %vm1633 = vcmp.lt.s32.totalorder %v1611, 4
  %v1634 = vsel %vm1630, %v1614, %v1617
  %v1635 = vsel %vm1633, %v1623, 2102212464
  %v1636 = vsel %vm1632, %v1620, %v1635
  %v1637 = vsel %vm1631, %v1634, %v1636
  %v1638 = vsel %vm1630, %v1617, %v1620
  %v1639 = vsel %vm1633, %v1626, 920167782
  %v1640 = vsel %vm1632, %v1623, %v1639
  %v1641 = vsel %vm1631, %v1638, %v1640
  %v1642 = vsel %vm1630, %v1620, %v1623
  %v1643 = vsel %vm1633, %v1629, 1326507024
  %v1644 = vsel %vm1632, %v1626, %v1643
  %v1645 = vsel %vm1631, %v1642, %v1644
  %v1646 = vshll.u32 %v1606, 8
  %v1647 = vmul.u32.u64.compose %v1646, %v1645
  %v1648 = vextract.low.u32 %v1647
  %v1649 = vextract.high.u32 %v1647
  %v1650 = vmul.u32.u64.compose %v1646, %v1641
  %v1651 = vextract.low.u32 %v1650
  %v1652 = vextract.high.u32 %v1650
  %v1653 = vmul.u32 %v1646, %v1637
  %v1654 = vadd.s32 %v1649, %v1651
  %vm1655 = vc.u32 %v1649, %v1651
  %v1656 = vadd.s32 %v1652, 1
  %v1657 = vsel %vm1655, %v1656, %v1652
  %v1658 = vadd.s32 %v1653, %v1657
  %v1659 = vadd.s32 %v1658, 536870912
  %v1660 = vshrl.u32 %v1659, 30
  %v1661 = vshll.u32 %v1660, 30
  %v1662 = vsub.s32 %v1658, %v1661
  %vm1663 = vcmp.lt.s32.totalorder %v1662, 0
  %v1664 = vsub.s32 0, %v1662
  %v1665 = vsel %vm1663, %v1664, %v1662
  %v1666 = vclz %v1665
  %v1667 = vsub.s32 %v1666, 2
  %vm1668 = vcmp.gt.s32.totalorder 0, %v1667
  %v1669 = vsel %vm1668, 0, %v1667
  %v1670 = vsub.s32 32, %v1669
  %v1671 = vshll.u32 %v1662, %v1669
  %v1672 = vshrl.u32 %v1654, %v1670
  %v1673 = vor.u32 %v1671, %v1672
  %v1674 = vsub.s32 4294967266, %v1669
  %v1675 = vadd.s32 %v1674, 127
  %v1676 = vshll.u32 %v1675, 23
  %v1677 = vor.u32 4788187, %v1676
  %v1678 = vand.u32 2147483647, %v1677
  %v1680 = vcvt.s32.f32 %v1673
  %v1681 = vmul.f32 %v1680, %v1678
  %v1682 = vxor.u32 %v1681, 2147483648
  %v1683 = vsel %vm1600, %v1682, %v1681
  %v1684 = vsub.s32 4, %v1660
  %v1685 = vsel %vm1600, %v1684, %v1660
  %v1686 = vsel %vm1599, %v1494, %v1683
  %v1687 = vsel %vm1599, 0, %v1685
  %v1688 = vcosq.f32.pop %v1686
  %v1689 = vsinq.f32.pop %v1686
  %vm1690 = vweird.f32 %v1494
  %v1691 = vadd.s32 %v1687, 3
  %v1692 = vand.u32 %v1691, 3
  %vm1693 = vcmp.lt.s32.totalorder %v1692, 2
  %vm1694 = vcmp.eq.s32.totalorder %v1692, 0
  %v1695 = vxor.u32 %v1689, 2147483648
  %v1696 = vsel %vm1694, %v1688, %v1695
  %vm1697 = vcmp.eq.s32.totalorder %v1692, 2
  %v1698 = vxor.u32 %v1688, 2147483648
  %v1699 = vsel %vm1697, %v1698, %v1689
  %v1700 = vsel %vm1693, %v1696, %v1699
  %v1701 = vsel %vm1690, nan, %v1700
  %1703 = vrot.lane.b32.xlu0 %v1597, 126
  %v1704 = vpop.permute.xlu0 %1703
  %v1706 = vmul.f32 %v1491, %v1704
  %1708 = vrot.lane.b32.xlu0 %v1701, 126
  %v1709 = vpop.permute.xlu0 %1708
  %v1711 = vmul.f32 %v1493, %v1709
  %v1712 = vsub.f32 %v1706, %v1711
  %v1713 = vmul.f32 %v1493, %v1704
  %v1714 = vmul.f32 %v1491, %v1709
  %v1715 = vadd.f32 %v1713, %v1714
  %v1716 = vmul.f32 %v1715, 0.981
  %1718 = vrot.lane.b32.xlu0 %v1716, 2
  %v1719 = vpop.permute.xlu0 %1718
  %v1721 = vsub.f32 %v1483, %v1719
  %1723 = vset.pattern.permute.xlu0 0
  %1724 = vperm.xlu0 %1723, %v1712
  %v1725 = vpop.permute.xlu0 %1724
  %v1727 = vmul.f32 %v1725, %v1138
  %1729 = vset.pattern.permute.xlu0 0
  %1730 = vperm.xlu0 %1729, %v1715
  %v1731 = vpop.permute.xlu0 %1730
  %v1733 = vmul.f32 %v1731, %v1148
  %v1734 = vadd.f32 %v1727, %v1733
  %1736 = vset.pattern.permute.xlu0 2
  %1737 = vperm.xlu0 %1736, %v1721
  %v1738 = vpop.permute.xlu0 %1737
  %v1740 = vmul.f32 %v1738, %v1159
  %v1741 = vadd.f32 %v1734, %v1740
  %v1742 = vadd.f32 %v1741, %v1165
  %v1743 = vmax.f32 %v1742, 0.0
  %v1744 = vmul.f32 %v1743, %v1171
  %v1745 = vsel %vm506, %v1744, 0.0
  %1746 = vadd.xlane.f32.xlu0 %v1745
  %v1747 = vpop.xlane.xlu0 %1746
  %v1748 = vadd.f32 %v1712, %v1747
  %v1749 = vadd.f32 %v1748, %v1180
  %v1750 = vmul.f32 %v1743, %v1185
  %v1751 = vsel %vm506, %v1750, 0.0
  %1752 = vadd.xlane.f32.xlu0 %v1751
  %v1753 = vpop.xlane.xlu0 %1752
  %v1754 = vadd.f32 %v1715, %v1753
  %v1755 = vadd.f32 %v1754, %v1193
  %v1756 = vmul.f32 %v1743, %v1199
  %v1757 = vsel %vm506, %v1756, 0.0
  %1758 = vadd.xlane.f32.xlu0 %v1757
  %v1759 = vpop.xlane.xlu0 %1758
  %v1760 = vadd.f32 %v1721, %v1759
  %v1761 = vadd.f32 %v1760, %v1180
  %v1762 = vmul.f32 %v1749, %v1749
  %v1763 = vmul.f32 %v1755, %v1755
  %v1764 = vadd.f32 %v1762, %v1763
  %v1765 = vadd.f32 %v1764, 1e-30
  %v1766 = vrsqrt.pop %v1765
  %vm1767 = vcmp.gt.f32.partialorder %v1764, 0.0
  %v1768 = vmul.f32 %v1749, %v1766
  %v1769 = vsel %vm1767, %v1768, 1.0
  %v1770 = vmul.f32 %v1755, %v1766
  %v1771 = vsel %vm1767, %v1770, 0.0
  %v1772 = vmul.f32 %v1761, 0.1
  %v1773 = vand.u32 2147483647, %v1772
  %vm1774 = vcmp.le.f32.partialorder %v1773, 0.7853982
  %vm1775 = vcmp.lt.s32.totalorder %v1772, 0
  %v1776 = vand.u32 %v1772, 2139095040
  %v1777 = vshrl.u32 %v1776, 23
  %v1778 = vsub.s32 %v1777, 127
  %v1779 = vand.u32 2147483647, %v1772
  %v1780 = vand.u32 %v1779, 8388607
  %v1781 = vor.u32 %v1780, 8388608
  %v1782 = vsub.s32 0, %v1781
  %v1783 = vadd.s32 %v1778, 1
  %vm1784 = vcmp.gt.s32.totalorder %v1783, 0
  %v1785 = vsel %vm1784, %v1783, 0
  %v1786 = vshrl.u32 %v1785, 5
  %v1787 = vand.u32 %v1785, 31
  %v1788 = vsub.s32 32, %v1787
  %v1789 = vshrl.u32 683565275, %v1788
  %v1790 = vshll.u32 683565275, %v1787
  %v1791 = vshrl.u32 2475754826, %v1788
  %v1792 = vor.u32 %v1790, %v1791
  %v1793 = vshll.u32 2475754826, %v1787
  %v1794 = vshrl.u32 2131351028, %v1788
  %v1795 = vor.u32 %v1793, %v1794
  %v1796 = vshll.u32 2131351028, %v1787
  %v1797 = vshrl.u32 2102212464, %v1788
  %v1798 = vor.u32 %v1796, %v1797
  %v1799 = vshll.u32 2102212464, %v1787
  %v1800 = vshrl.u32 920167782, %v1788
  %v1801 = vor.u32 %v1799, %v1800
  %v1802 = vshll.u32 920167782, %v1787
  %v1803 = vshrl.u32 1326507024, %v1788
  %v1804 = vor.u32 %v1802, %v1803
  %vm1805 = vcmp.lt.s32.totalorder %v1786, 1
  %vm1806 = vcmp.lt.s32.totalorder %v1786, 2
  %vm1807 = vcmp.lt.s32.totalorder %v1786, 3
  %vm1808 = vcmp.lt.s32.totalorder %v1786, 4
  %v1809 = vsel %vm1805, %v1789, %v1792
  %v1810 = vsel %vm1808, %v1798, 2102212464
  %v1811 = vsel %vm1807, %v1795, %v1810
  %v1812 = vsel %vm1806, %v1809, %v1811
  %v1813 = vsel %vm1805, %v1792, %v1795
  %v1814 = vsel %vm1808, %v1801, 920167782
  %v1815 = vsel %vm1807, %v1798, %v1814
  %v1816 = vsel %vm1806, %v1813, %v1815
  %v1817 = vsel %vm1805, %v1795, %v1798
  %v1818 = vsel %vm1808, %v1804, 1326507024
  %v1819 = vsel %vm1807, %v1801, %v1818
  %v1820 = vsel %vm1806, %v1817, %v1819
  %v1821 = vshll.u32 %v1781, 8
  %v1822 = vmul.u32.u64.compose %v1821, %v1820
  %v1823 = vextract.low.u32 %v1822
  %v1824 = vextract.high.u32 %v1822
  %v1825 = vmul.u32.u64.compose %v1821, %v1816
  %v1826 = vextract.low.u32 %v1825
  %v1827 = vextract.high.u32 %v1825
  %v1828 = vmul.u32 %v1821, %v1812
  %v1829 = vadd.s32 %v1824, %v1826
  %vm1830 = vc.u32 %v1824, %v1826
  %v1831 = vadd.s32 %v1827, 1
  %v1832 = vsel %vm1830, %v1831, %v1827
  %v1833 = vadd.s32 %v1828, %v1832
  %v1834 = vadd.s32 %v1833, 536870912
  %v1835 = vshrl.u32 %v1834, 30
  %v1836 = vshll.u32 %v1835, 30
  %v1837 = vsub.s32 %v1833, %v1836
  %vm1838 = vcmp.lt.s32.totalorder %v1837, 0
  %v1839 = vsub.s32 0, %v1837
  %v1840 = vsel %vm1838, %v1839, %v1837
  %v1841 = vclz %v1840
  %v1842 = vsub.s32 %v1841, 2
  %vm1843 = vcmp.gt.s32.totalorder 0, %v1842
  %v1844 = vsel %vm1843, 0, %v1842
  %v1845 = vsub.s32 32, %v1844
  %v1846 = vshll.u32 %v1837, %v1844
  %v1847 = vshrl.u32 %v1829, %v1845
  %v1848 = vor.u32 %v1846, %v1847
  %v1849 = vsub.s32 4294967266, %v1844
  %v1850 = vadd.s32 %v1849, 127
  %v1851 = vshll.u32 %v1850, 23
  %v1852 = vor.u32 4788187, %v1851
  %v1853 = vand.u32 2147483647, %v1852
  %v1855 = vcvt.s32.f32 %v1848
  %v1856 = vmul.f32 %v1855, %v1853
  %v1857 = vxor.u32 %v1856, 2147483648
  %v1858 = vsel %vm1775, %v1857, %v1856
  %v1859 = vsub.s32 4, %v1835
  %v1860 = vsel %vm1775, %v1859, %v1835
  %v1861 = vsel %vm1774, %v1772, %v1858
  %v1862 = vsel %vm1774, 0, %v1860
  %v1863 = vcosq.f32.pop %v1861
  %v1864 = vsinq.f32.pop %v1861
  %vm1865 = vweird.f32 %v1772
  %v1866 = vand.u32 %v1862, 3
  %vm1867 = vcmp.lt.s32.totalorder %v1866, 2
  %vm1868 = vcmp.eq.s32.totalorder %v1866, 0
  %v1869 = vxor.u32 %v1864, 2147483648
  %v1870 = vsel %vm1868, %v1863, %v1869
  %vm1871 = vcmp.eq.s32.totalorder %v1866, 2
  %v1872 = vxor.u32 %v1863, 2147483648
  %v1873 = vsel %vm1871, %v1872, %v1864
  %v1874 = vsel %vm1867, %v1870, %v1873
  %v1875 = vsel %vm1865, nan, %v1874
  %v1876 = vand.u32 2147483647, %v1772
  %vm1877 = vcmp.le.f32.partialorder %v1876, 0.7853982
  %vm1878 = vcmp.lt.s32.totalorder %v1772, 0
  %v1879 = vand.u32 %v1772, 2139095040
  %v1880 = vshrl.u32 %v1879, 23
  %v1881 = vsub.s32 %v1880, 127
  %v1882 = vand.u32 2147483647, %v1772
  %v1883 = vand.u32 %v1882, 8388607
  %v1884 = vor.u32 %v1883, 8388608
  %v1885 = vsub.s32 0, %v1884
  %v1886 = vadd.s32 %v1881, 1
  %vm1887 = vcmp.gt.s32.totalorder %v1886, 0
  %v1888 = vsel %vm1887, %v1886, 0
  %v1889 = vshrl.u32 %v1888, 5
  %v1890 = vand.u32 %v1888, 31
  %v1891 = vsub.s32 32, %v1890
  %v1892 = vshrl.u32 683565275, %v1891
  %v1893 = vshll.u32 683565275, %v1890
  %v1894 = vshrl.u32 2475754826, %v1891
  %v1895 = vor.u32 %v1893, %v1894
  %v1896 = vshll.u32 2475754826, %v1890
  %v1897 = vshrl.u32 2131351028, %v1891
  %v1898 = vor.u32 %v1896, %v1897
  %v1899 = vshll.u32 2131351028, %v1890
  %v1900 = vshrl.u32 2102212464, %v1891
  %v1901 = vor.u32 %v1899, %v1900
  %v1902 = vshll.u32 2102212464, %v1890
  %v1903 = vshrl.u32 920167782, %v1891
  %v1904 = vor.u32 %v1902, %v1903
  %v1905 = vshll.u32 920167782, %v1890
  %v1906 = vshrl.u32 1326507024, %v1891
  %v1907 = vor.u32 %v1905, %v1906
  %vm1908 = vcmp.lt.s32.totalorder %v1889, 1
  %vm1909 = vcmp.lt.s32.totalorder %v1889, 2
  %vm1910 = vcmp.lt.s32.totalorder %v1889, 3
  %vm1911 = vcmp.lt.s32.totalorder %v1889, 4
  %v1912 = vsel %vm1908, %v1892, %v1895
  %v1913 = vsel %vm1911, %v1901, 2102212464
  %v1914 = vsel %vm1910, %v1898, %v1913
  %v1915 = vsel %vm1909, %v1912, %v1914
  %v1916 = vsel %vm1908, %v1895, %v1898
  %v1917 = vsel %vm1911, %v1904, 920167782
  %v1918 = vsel %vm1910, %v1901, %v1917
  %v1919 = vsel %vm1909, %v1916, %v1918
  %v1920 = vsel %vm1908, %v1898, %v1901
  %v1921 = vsel %vm1911, %v1907, 1326507024
  %v1922 = vsel %vm1910, %v1904, %v1921
  %v1923 = vsel %vm1909, %v1920, %v1922
  %v1924 = vshll.u32 %v1884, 8
  %v1925 = vmul.u32.u64.compose %v1924, %v1923
  %v1926 = vextract.low.u32 %v1925
  %v1927 = vextract.high.u32 %v1925
  %v1928 = vmul.u32.u64.compose %v1924, %v1919
  %v1929 = vextract.low.u32 %v1928
  %v1930 = vextract.high.u32 %v1928
  %v1931 = vmul.u32 %v1924, %v1915
  %v1932 = vadd.s32 %v1927, %v1929
  %vm1933 = vc.u32 %v1927, %v1929
  %v1934 = vadd.s32 %v1930, 1
  %v1935 = vsel %vm1933, %v1934, %v1930
  %v1936 = vadd.s32 %v1931, %v1935
  %v1937 = vadd.s32 %v1936, 536870912
  %v1938 = vshrl.u32 %v1937, 30
  %v1939 = vshll.u32 %v1938, 30
  %v1940 = vsub.s32 %v1936, %v1939
  %vm1941 = vcmp.lt.s32.totalorder %v1940, 0
  %v1942 = vsub.s32 0, %v1940
  %v1943 = vsel %vm1941, %v1942, %v1940
  %v1944 = vclz %v1943
  %v1945 = vsub.s32 %v1944, 2
  %vm1946 = vcmp.gt.s32.totalorder 0, %v1945
  %v1947 = vsel %vm1946, 0, %v1945
  %v1948 = vsub.s32 32, %v1947
  %v1949 = vshll.u32 %v1940, %v1947
  %v1950 = vshrl.u32 %v1932, %v1948
  %v1951 = vor.u32 %v1949, %v1950
  %v1952 = vsub.s32 4294967266, %v1947
  %v1953 = vadd.s32 %v1952, 127
  %v1954 = vshll.u32 %v1953, 23
  %v1955 = vor.u32 4788187, %v1954
  %v1956 = vand.u32 2147483647, %v1955
  %v1958 = vcvt.s32.f32 %v1951
  %v1959 = vmul.f32 %v1958, %v1956
  %v1960 = vxor.u32 %v1959, 2147483648
  %v1961 = vsel %vm1878, %v1960, %v1959
  %v1962 = vsub.s32 4, %v1938
  %v1963 = vsel %vm1878, %v1962, %v1938
  %v1964 = vsel %vm1877, %v1772, %v1961
  %v1965 = vsel %vm1877, 0, %v1963
  %v1966 = vcosq.f32.pop %v1964
  %v1967 = vsinq.f32.pop %v1964
  %vm1968 = vweird.f32 %v1772
  %v1969 = vadd.s32 %v1965, 3
  %v1970 = vand.u32 %v1969, 3
  %vm1971 = vcmp.lt.s32.totalorder %v1970, 2
  %vm1972 = vcmp.eq.s32.totalorder %v1970, 0
  %v1973 = vxor.u32 %v1967, 2147483648
  %v1974 = vsel %vm1972, %v1966, %v1973
  %vm1975 = vcmp.eq.s32.totalorder %v1970, 2
  %v1976 = vxor.u32 %v1966, 2147483648
  %v1977 = vsel %vm1975, %v1976, %v1967
  %v1978 = vsel %vm1971, %v1974, %v1977
  %v1979 = vsel %vm1968, nan, %v1978
  %1981 = vrot.lane.b32.xlu0 %v1875, 126
  %v1982 = vpop.permute.xlu0 %1981
  %v1984 = vmul.f32 %v1769, %v1982
  %1986 = vrot.lane.b32.xlu0 %v1979, 126
  %v1987 = vpop.permute.xlu0 %1986
  %v1989 = vmul.f32 %v1771, %v1987
  %v1990 = vsub.f32 %v1984, %v1989
  %v1991 = vmul.f32 %v1771, %v1982
  %v1992 = vmul.f32 %v1769, %v1987
  %v1993 = vadd.f32 %v1991, %v1992
  %v1994 = vmul.f32 %v1993, 0.981
  %1996 = vrot.lane.b32.xlu0 %v1994, 2
  %v1997 = vpop.permute.xlu0 %1996
  %v1999 = vsub.f32 %v1761, %v1997
  %2001 = vset.pattern.permute.xlu0 0
  %2002 = vperm.xlu0 %2001, %v1990
  %v2003 = vpop.permute.xlu0 %2002
  %v2005 = vmul.f32 %v2003, %v1138
  %2007 = vset.pattern.permute.xlu0 0
  %2008 = vperm.xlu0 %2007, %v1993
  %v2009 = vpop.permute.xlu0 %2008
  %v2011 = vmul.f32 %v2009, %v1148
  %v2012 = vadd.f32 %v2005, %v2011
  %2014 = vset.pattern.permute.xlu0 2
  %2015 = vperm.xlu0 %2014, %v1999
  %v2016 = vpop.permute.xlu0 %2015
  %v2018 = vmul.f32 %v2016, %v1159
  %v2019 = vadd.f32 %v2012, %v2018
  %v2020 = vadd.f32 %v2019, %v1165
  %v2021 = vmax.f32 %v2020, 0.0
  %v2022 = vmul.f32 %v2021, %v1171
  %v2023 = vsel %vm506, %v2022, 0.0
  %2024 = vadd.xlane.f32.xlu0 %v2023
  %v2025 = vpop.xlane.xlu0 %2024
  %v2026 = vadd.f32 %v1990, %v2025
  %v2027 = vadd.f32 %v2026, %v1180
  %v2028 = vmul.f32 %v2021, %v1185
  %v2029 = vsel %vm506, %v2028, 0.0
  %2030 = vadd.xlane.f32.xlu0 %v2029
  %v2031 = vpop.xlane.xlu0 %2030
  %v2032 = vadd.f32 %v1993, %v2031
  %v2033 = vadd.f32 %v2032, %v1193
  %v2034 = vmul.f32 %v2021, %v1199
  %v2035 = vsel %vm506, %v2034, 0.0
  %2036 = vadd.xlane.f32.xlu0 %v2035
  %v2037 = vpop.xlane.xlu0 %2036
  %v2038 = vadd.f32 %v1999, %v2037
  %v2039 = vadd.f32 %v2038, %v1180
  %v2040 = vmul.f32 %v2027, %v2027
  %v2041 = vmul.f32 %v2033, %v2033
  %v2042 = vadd.f32 %v2040, %v2041
  %v2043 = vadd.f32 %v2042, 1e-30
  %v2044 = vrsqrt.pop %v2043
  %vm2045 = vcmp.gt.f32.partialorder %v2042, 0.0
  %v2046 = vmul.f32 %v2027, %v2044
  %v2047 = vsel %vm2045, %v2046, 1.0
  %v2048 = vmul.f32 %v2033, %v2044
  %v2049 = vsel %vm2045, %v2048, 0.0
  %v2050 = vmul.f32 %v2039, 0.1
  %v2051 = vand.u32 2147483647, %v2050
  %vm2052 = vcmp.le.f32.partialorder %v2051, 0.7853982
  %vm2053 = vcmp.lt.s32.totalorder %v2050, 0
  %v2054 = vand.u32 %v2050, 2139095040
  %v2055 = vshrl.u32 %v2054, 23
  %v2056 = vsub.s32 %v2055, 127
  %v2057 = vand.u32 2147483647, %v2050
  %v2058 = vand.u32 %v2057, 8388607
  %v2059 = vor.u32 %v2058, 8388608
  %v2060 = vsub.s32 0, %v2059
  %v2061 = vadd.s32 %v2056, 1
  %vm2062 = vcmp.gt.s32.totalorder %v2061, 0
  %v2063 = vsel %vm2062, %v2061, 0
  %v2064 = vshrl.u32 %v2063, 5
  %v2065 = vand.u32 %v2063, 31
  %v2066 = vsub.s32 32, %v2065
  %v2067 = vshrl.u32 683565275, %v2066
  %v2068 = vshll.u32 683565275, %v2065
  %v2069 = vshrl.u32 2475754826, %v2066
  %v2070 = vor.u32 %v2068, %v2069
  %v2071 = vshll.u32 2475754826, %v2065
  %v2072 = vshrl.u32 2131351028, %v2066
  %v2073 = vor.u32 %v2071, %v2072
  %v2074 = vshll.u32 2131351028, %v2065
  %v2075 = vshrl.u32 2102212464, %v2066
  %v2076 = vor.u32 %v2074, %v2075
  %v2077 = vshll.u32 2102212464, %v2065
  %v2078 = vshrl.u32 920167782, %v2066
  %v2079 = vor.u32 %v2077, %v2078
  %v2080 = vshll.u32 920167782, %v2065
  %v2081 = vshrl.u32 1326507024, %v2066
  %v2082 = vor.u32 %v2080, %v2081
  %vm2083 = vcmp.lt.s32.totalorder %v2064, 1
  %vm2084 = vcmp.lt.s32.totalorder %v2064, 2
  %vm2085 = vcmp.lt.s32.totalorder %v2064, 3
  %vm2086 = vcmp.lt.s32.totalorder %v2064, 4
  %v2087 = vsel %vm2083, %v2067, %v2070
  %v2088 = vsel %vm2086, %v2076, 2102212464
  %v2089 = vsel %vm2085, %v2073, %v2088
  %v2090 = vsel %vm2084, %v2087, %v2089
  %v2091 = vsel %vm2083, %v2070, %v2073
  %v2092 = vsel %vm2086, %v2079, 920167782
  %v2093 = vsel %vm2085, %v2076, %v2092
  %v2094 = vsel %vm2084, %v2091, %v2093
  %v2095 = vsel %vm2083, %v2073, %v2076
  %v2096 = vsel %vm2086, %v2082, 1326507024
  %v2097 = vsel %vm2085, %v2079, %v2096
  %v2098 = vsel %vm2084, %v2095, %v2097
  %v2099 = vshll.u32 %v2059, 8
  %v2100 = vmul.u32.u64.compose %v2099, %v2098
  %v2101 = vextract.low.u32 %v2100
  %v2102 = vextract.high.u32 %v2100
  %v2103 = vmul.u32.u64.compose %v2099, %v2094
  %v2104 = vextract.low.u32 %v2103
  %v2105 = vextract.high.u32 %v2103
  %v2106 = vmul.u32 %v2099, %v2090
  %v2107 = vadd.s32 %v2102, %v2104
  %vm2108 = vc.u32 %v2102, %v2104
  %v2109 = vadd.s32 %v2105, 1
  %v2110 = vsel %vm2108, %v2109, %v2105
  %v2111 = vadd.s32 %v2106, %v2110
  %v2112 = vadd.s32 %v2111, 536870912
  %v2113 = vshrl.u32 %v2112, 30
  %v2114 = vshll.u32 %v2113, 30
  %v2115 = vsub.s32 %v2111, %v2114
  %vm2116 = vcmp.lt.s32.totalorder %v2115, 0
  %v2117 = vsub.s32 0, %v2115
  %v2118 = vsel %vm2116, %v2117, %v2115
  %v2119 = vclz %v2118
  %v2120 = vsub.s32 %v2119, 2
  %vm2121 = vcmp.gt.s32.totalorder 0, %v2120
  %v2122 = vsel %vm2121, 0, %v2120
  %v2123 = vsub.s32 32, %v2122
  %v2124 = vshll.u32 %v2115, %v2122
  %v2125 = vshrl.u32 %v2107, %v2123
  %v2126 = vor.u32 %v2124, %v2125
  %v2127 = vsub.s32 4294967266, %v2122
  %v2128 = vadd.s32 %v2127, 127
  %v2129 = vshll.u32 %v2128, 23
  %v2130 = vor.u32 4788187, %v2129
  %v2131 = vand.u32 2147483647, %v2130
  %v2133 = vcvt.s32.f32 %v2126
  %v2134 = vmul.f32 %v2133, %v2131
  %v2135 = vxor.u32 %v2134, 2147483648
  %v2136 = vsel %vm2053, %v2135, %v2134
  %v2137 = vsub.s32 4, %v2113
  %v2138 = vsel %vm2053, %v2137, %v2113
  %v2139 = vsel %vm2052, %v2050, %v2136
  %v2140 = vsel %vm2052, 0, %v2138
  %v2141 = vcosq.f32.pop %v2139
  %v2142 = vsinq.f32.pop %v2139
  %vm2143 = vweird.f32 %v2050
  %v2144 = vand.u32 %v2140, 3
  %vm2145 = vcmp.lt.s32.totalorder %v2144, 2
  %vm2146 = vcmp.eq.s32.totalorder %v2144, 0
  %v2147 = vxor.u32 %v2142, 2147483648
  %v2148 = vsel %vm2146, %v2141, %v2147
  %vm2149 = vcmp.eq.s32.totalorder %v2144, 2
  %v2150 = vxor.u32 %v2141, 2147483648
  %v2151 = vsel %vm2149, %v2150, %v2142
  %v2152 = vsel %vm2145, %v2148, %v2151
  %v2153 = vsel %vm2143, nan, %v2152
  %v2154 = vand.u32 2147483647, %v2050
  %vm2155 = vcmp.le.f32.partialorder %v2154, 0.7853982
  %vm2156 = vcmp.lt.s32.totalorder %v2050, 0
  %v2157 = vand.u32 %v2050, 2139095040
  %v2158 = vshrl.u32 %v2157, 23
  %v2159 = vsub.s32 %v2158, 127
  %v2160 = vand.u32 2147483647, %v2050
  %v2161 = vand.u32 %v2160, 8388607
  %v2162 = vor.u32 %v2161, 8388608
  %v2163 = vsub.s32 0, %v2162
  %v2164 = vadd.s32 %v2159, 1
  %vm2165 = vcmp.gt.s32.totalorder %v2164, 0
  %v2166 = vsel %vm2165, %v2164, 0
  %v2167 = vshrl.u32 %v2166, 5
  %v2168 = vand.u32 %v2166, 31
  %v2169 = vsub.s32 32, %v2168
  %v2170 = vshrl.u32 683565275, %v2169
  %v2171 = vshll.u32 683565275, %v2168
  %v2172 = vshrl.u32 2475754826, %v2169
  %v2173 = vor.u32 %v2171, %v2172
  %v2174 = vshll.u32 2475754826, %v2168
  %v2175 = vshrl.u32 2131351028, %v2169
  %v2176 = vor.u32 %v2174, %v2175
  %v2177 = vshll.u32 2131351028, %v2168
  %v2178 = vshrl.u32 2102212464, %v2169
  %v2179 = vor.u32 %v2177, %v2178
  %v2180 = vshll.u32 2102212464, %v2168
  %v2181 = vshrl.u32 920167782, %v2169
  %v2182 = vor.u32 %v2180, %v2181
  %v2183 = vshll.u32 920167782, %v2168
  %v2184 = vshrl.u32 1326507024, %v2169
  %v2185 = vor.u32 %v2183, %v2184
  %vm2186 = vcmp.lt.s32.totalorder %v2167, 1
  %vm2187 = vcmp.lt.s32.totalorder %v2167, 2
  %vm2188 = vcmp.lt.s32.totalorder %v2167, 3
  %vm2189 = vcmp.lt.s32.totalorder %v2167, 4
  %v2190 = vsel %vm2186, %v2170, %v2173
  %v2191 = vsel %vm2189, %v2179, 2102212464
  %v2192 = vsel %vm2188, %v2176, %v2191
  %v2193 = vsel %vm2187, %v2190, %v2192
  %v2194 = vsel %vm2186, %v2173, %v2176
  %v2195 = vsel %vm2189, %v2182, 920167782
  %v2196 = vsel %vm2188, %v2179, %v2195
  %v2197 = vsel %vm2187, %v2194, %v2196
  %v2198 = vsel %vm2186, %v2176, %v2179
  %v2199 = vsel %vm2189, %v2185, 1326507024
  %v2200 = vsel %vm2188, %v2182, %v2199
  %v2201 = vsel %vm2187, %v2198, %v2200
  %v2202 = vshll.u32 %v2162, 8
  %v2203 = vmul.u32.u64.compose %v2202, %v2201
  %v2204 = vextract.low.u32 %v2203
  %v2205 = vextract.high.u32 %v2203
  %v2206 = vmul.u32.u64.compose %v2202, %v2197
  %v2207 = vextract.low.u32 %v2206
  %v2208 = vextract.high.u32 %v2206
  %v2209 = vmul.u32 %v2202, %v2193
  %v2210 = vadd.s32 %v2205, %v2207
  %vm2211 = vc.u32 %v2205, %v2207
  %v2212 = vadd.s32 %v2208, 1
  %v2213 = vsel %vm2211, %v2212, %v2208
  %v2214 = vadd.s32 %v2209, %v2213
  %v2215 = vadd.s32 %v2214, 536870912
  %v2216 = vshrl.u32 %v2215, 30
  %v2217 = vshll.u32 %v2216, 30
  %v2218 = vsub.s32 %v2214, %v2217
  %vm2219 = vcmp.lt.s32.totalorder %v2218, 0
  %v2220 = vsub.s32 0, %v2218
  %v2221 = vsel %vm2219, %v2220, %v2218
  %v2222 = vclz %v2221
  %v2223 = vsub.s32 %v2222, 2
  %vm2224 = vcmp.gt.s32.totalorder 0, %v2223
  %v2225 = vsel %vm2224, 0, %v2223
  %v2226 = vsub.s32 32, %v2225
  %v2227 = vshll.u32 %v2218, %v2225
  %v2228 = vshrl.u32 %v2210, %v2226
  %v2229 = vor.u32 %v2227, %v2228
  %v2230 = vsub.s32 4294967266, %v2225
  %v2231 = vadd.s32 %v2230, 127
  %v2232 = vshll.u32 %v2231, 23
  %v2233 = vor.u32 4788187, %v2232
  %v2234 = vand.u32 2147483647, %v2233
  %v2236 = vcvt.s32.f32 %v2229
  %v2237 = vmul.f32 %v2236, %v2234
  %v2238 = vxor.u32 %v2237, 2147483648
  %v2239 = vsel %vm2156, %v2238, %v2237
  %v2240 = vsub.s32 4, %v2216
  %v2241 = vsel %vm2156, %v2240, %v2216
  %v2242 = vsel %vm2155, %v2050, %v2239
  %v2243 = vsel %vm2155, 0, %v2241
  %v2244 = vcosq.f32.pop %v2242
  %v2245 = vsinq.f32.pop %v2242
  %vm2246 = vweird.f32 %v2050
  %v2247 = vadd.s32 %v2243, 3
  %v2248 = vand.u32 %v2247, 3
  %vm2249 = vcmp.lt.s32.totalorder %v2248, 2
  %vm2250 = vcmp.eq.s32.totalorder %v2248, 0
  %v2251 = vxor.u32 %v2245, 2147483648
  %v2252 = vsel %vm2250, %v2244, %v2251
  %vm2253 = vcmp.eq.s32.totalorder %v2248, 2
  %v2254 = vxor.u32 %v2244, 2147483648
  %v2255 = vsel %vm2253, %v2254, %v2245
  %v2256 = vsel %vm2249, %v2252, %v2255
  %v2257 = vsel %vm2246, nan, %v2256
  %2259 = vrot.lane.b32.xlu0 %v2153, 126
  %v2260 = vpop.permute.xlu0 %2259
  %v2262 = vmul.f32 %v2047, %v2260
  %2264 = vrot.lane.b32.xlu0 %v2257, 126
  %v2265 = vpop.permute.xlu0 %2264
  %v2267 = vmul.f32 %v2049, %v2265
  %v2268 = vsub.f32 %v2262, %v2267
  %v2269 = vmul.f32 %v2049, %v2260
  %v2270 = vmul.f32 %v2047, %v2265
  %v2271 = vadd.f32 %v2269, %v2270
  %v2272 = vmul.f32 %v2271, 0.981
  %2274 = vrot.lane.b32.xlu0 %v2272, 2
  %v2275 = vpop.permute.xlu0 %2274
  %v2277 = vsub.f32 %v2039, %v2275
  %2279 = vset.pattern.permute.xlu0 0
  %2280 = vperm.xlu0 %2279, %v2268
  %v2281 = vpop.permute.xlu0 %2280
  %v2283 = vmul.f32 %v2281, %v1138
  %2285 = vset.pattern.permute.xlu0 0
  %2286 = vperm.xlu0 %2285, %v2271
  %v2287 = vpop.permute.xlu0 %2286
  %v2289 = vmul.f32 %v2287, %v1148
  %v2290 = vadd.f32 %v2283, %v2289
  %2292 = vset.pattern.permute.xlu0 2
  %2293 = vperm.xlu0 %2292, %v2277
  %v2294 = vpop.permute.xlu0 %2293
  %v2296 = vmul.f32 %v2294, %v1159
  %v2297 = vadd.f32 %v2290, %v2296
  %v2298 = vadd.f32 %v2297, %v1165
  %v2299 = vmax.f32 %v2298, 0.0
  %v2300 = vmul.f32 %v2299, %v1171
  %v2301 = vsel %vm506, %v2300, 0.0
  %2302 = vadd.xlane.f32.xlu0 %v2301
  %v2303 = vpop.xlane.xlu0 %2302
  %v2304 = vadd.f32 %v2268, %v2303
  %v2305 = vadd.f32 %v2304, %v1180
  %v2306 = vmul.f32 %v2299, %v1185
  %v2307 = vsel %vm506, %v2306, 0.0
  %2308 = vadd.xlane.f32.xlu0 %v2307
  %v2309 = vpop.xlane.xlu0 %2308
  %v2310 = vadd.f32 %v2271, %v2309
  %v2311 = vadd.f32 %v2310, %v1193
  %v2312 = vmul.f32 %v2299, %v1199
  %v2313 = vsel %vm506, %v2312, 0.0
  %2314 = vadd.xlane.f32.xlu0 %v2313
  %v2315 = vpop.xlane.xlu0 %2314
  %v2316 = vadd.f32 %v2277, %v2315
  %v2317 = vadd.f32 %v2316, %v1180
  %v2318 = vmul.f32 %v2305, %v2305
  %v2319 = vmul.f32 %v2311, %v2311
  %v2320 = vadd.f32 %v2318, %v2319
  %v2321 = vadd.f32 %v2320, 1e-30
  %v2322 = vrsqrt.pop %v2321
  %vm2323 = vcmp.gt.f32.partialorder %v2320, 0.0
  %v2324 = vmul.f32 %v2305, %v2322
  %v2325 = vsel %vm2323, %v2324, 1.0
  %v2326 = vmul.f32 %v2311, %v2322
  %v2327 = vsel %vm2323, %v2326, 0.0
  %v2328 = vmul.f32 %v2317, 0.1
  %v2329 = vand.u32 2147483647, %v2328
  %vm2330 = vcmp.le.f32.partialorder %v2329, 0.7853982
  %vm2331 = vcmp.lt.s32.totalorder %v2328, 0
  %v2332 = vand.u32 %v2328, 2139095040
  %v2333 = vshrl.u32 %v2332, 23
  %v2334 = vsub.s32 %v2333, 127
  %v2335 = vand.u32 2147483647, %v2328
  %v2336 = vand.u32 %v2335, 8388607
  %v2337 = vor.u32 %v2336, 8388608
  %v2338 = vsub.s32 0, %v2337
  %v2339 = vadd.s32 %v2334, 1
  %vm2340 = vcmp.gt.s32.totalorder %v2339, 0
  %v2341 = vsel %vm2340, %v2339, 0
  %v2342 = vshrl.u32 %v2341, 5
  %v2343 = vand.u32 %v2341, 31
  %v2344 = vsub.s32 32, %v2343
  %v2345 = vshrl.u32 683565275, %v2344
  %v2346 = vshll.u32 683565275, %v2343
  %v2347 = vshrl.u32 2475754826, %v2344
  %v2348 = vor.u32 %v2346, %v2347
  %v2349 = vshll.u32 2475754826, %v2343
  %v2350 = vshrl.u32 2131351028, %v2344
  %v2351 = vor.u32 %v2349, %v2350
  %v2352 = vshll.u32 2131351028, %v2343
  %v2353 = vshrl.u32 2102212464, %v2344
  %v2354 = vor.u32 %v2352, %v2353
  %v2355 = vshll.u32 2102212464, %v2343
  %v2356 = vshrl.u32 920167782, %v2344
  %v2357 = vor.u32 %v2355, %v2356
  %v2358 = vshll.u32 920167782, %v2343
  %v2359 = vshrl.u32 1326507024, %v2344
  %v2360 = vor.u32 %v2358, %v2359
  %vm2361 = vcmp.lt.s32.totalorder %v2342, 1
  %vm2362 = vcmp.lt.s32.totalorder %v2342, 2
  %vm2363 = vcmp.lt.s32.totalorder %v2342, 3
  %vm2364 = vcmp.lt.s32.totalorder %v2342, 4
  %v2365 = vsel %vm2361, %v2345, %v2348
  %v2366 = vsel %vm2364, %v2354, 2102212464
  %v2367 = vsel %vm2363, %v2351, %v2366
  %v2368 = vsel %vm2362, %v2365, %v2367
  %v2369 = vsel %vm2361, %v2348, %v2351
  %v2370 = vsel %vm2364, %v2357, 920167782
  %v2371 = vsel %vm2363, %v2354, %v2370
  %v2372 = vsel %vm2362, %v2369, %v2371
  %v2373 = vsel %vm2361, %v2351, %v2354
  %v2374 = vsel %vm2364, %v2360, 1326507024
  %v2375 = vsel %vm2363, %v2357, %v2374
  %v2376 = vsel %vm2362, %v2373, %v2375
  %v2377 = vshll.u32 %v2337, 8
  %v2378 = vmul.u32.u64.compose %v2377, %v2376
  %v2379 = vextract.low.u32 %v2378
  %v2380 = vextract.high.u32 %v2378
  %v2381 = vmul.u32.u64.compose %v2377, %v2372
  %v2382 = vextract.low.u32 %v2381
  %v2383 = vextract.high.u32 %v2381
  %v2384 = vmul.u32 %v2377, %v2368
  %v2385 = vadd.s32 %v2380, %v2382
  %vm2386 = vc.u32 %v2380, %v2382
  %v2387 = vadd.s32 %v2383, 1
  %v2388 = vsel %vm2386, %v2387, %v2383
  %v2389 = vadd.s32 %v2384, %v2388
  %v2390 = vadd.s32 %v2389, 536870912
  %v2391 = vshrl.u32 %v2390, 30
  %v2392 = vshll.u32 %v2391, 30
  %v2393 = vsub.s32 %v2389, %v2392
  %vm2394 = vcmp.lt.s32.totalorder %v2393, 0
  %v2395 = vsub.s32 0, %v2393
  %v2396 = vsel %vm2394, %v2395, %v2393
  %v2397 = vclz %v2396
  %v2398 = vsub.s32 %v2397, 2
  %vm2399 = vcmp.gt.s32.totalorder 0, %v2398
  %v2400 = vsel %vm2399, 0, %v2398
  %v2401 = vsub.s32 32, %v2400
  %v2402 = vshll.u32 %v2393, %v2400
  %v2403 = vshrl.u32 %v2385, %v2401
  %v2404 = vor.u32 %v2402, %v2403
  %v2405 = vsub.s32 4294967266, %v2400
  %v2406 = vadd.s32 %v2405, 127
  %v2407 = vshll.u32 %v2406, 23
  %v2408 = vor.u32 4788187, %v2407
  %v2409 = vand.u32 2147483647, %v2408
  %v2411 = vcvt.s32.f32 %v2404
  %v2412 = vmul.f32 %v2411, %v2409
  %v2413 = vxor.u32 %v2412, 2147483648
  %v2414 = vsel %vm2331, %v2413, %v2412
  %v2415 = vsub.s32 4, %v2391
  %v2416 = vsel %vm2331, %v2415, %v2391
  %v2417 = vsel %vm2330, %v2328, %v2414
  %v2418 = vsel %vm2330, 0, %v2416
  %v2419 = vcosq.f32.pop %v2417
  %v2420 = vsinq.f32.pop %v2417
  %vm2421 = vweird.f32 %v2328
  %v2422 = vand.u32 %v2418, 3
  %vm2423 = vcmp.lt.s32.totalorder %v2422, 2
  %vm2424 = vcmp.eq.s32.totalorder %v2422, 0
  %v2425 = vxor.u32 %v2420, 2147483648
  %v2426 = vsel %vm2424, %v2419, %v2425
  %vm2427 = vcmp.eq.s32.totalorder %v2422, 2
  %v2428 = vxor.u32 %v2419, 2147483648
  %v2429 = vsel %vm2427, %v2428, %v2420
  %v2430 = vsel %vm2423, %v2426, %v2429
  %v2431 = vsel %vm2421, nan, %v2430
  %v2432 = vand.u32 2147483647, %v2328
  %vm2433 = vcmp.le.f32.partialorder %v2432, 0.7853982
  %vm2434 = vcmp.lt.s32.totalorder %v2328, 0
  %v2435 = vand.u32 %v2328, 2139095040
  %v2436 = vshrl.u32 %v2435, 23
  %v2437 = vsub.s32 %v2436, 127
  %v2438 = vand.u32 2147483647, %v2328
  %v2439 = vand.u32 %v2438, 8388607
  %v2440 = vor.u32 %v2439, 8388608
  %v2441 = vsub.s32 0, %v2440
  %v2442 = vadd.s32 %v2437, 1
  %vm2443 = vcmp.gt.s32.totalorder %v2442, 0
  %v2444 = vsel %vm2443, %v2442, 0
  %v2445 = vshrl.u32 %v2444, 5
  %v2446 = vand.u32 %v2444, 31
  %v2447 = vsub.s32 32, %v2446
  %v2448 = vshrl.u32 683565275, %v2447
  %v2449 = vshll.u32 683565275, %v2446
  %v2450 = vshrl.u32 2475754826, %v2447
  %v2451 = vor.u32 %v2449, %v2450
  %v2452 = vshll.u32 2475754826, %v2446
  %v2453 = vshrl.u32 2131351028, %v2447
  %v2454 = vor.u32 %v2452, %v2453
  %v2455 = vshll.u32 2131351028, %v2446
  %v2456 = vshrl.u32 2102212464, %v2447
  %v2457 = vor.u32 %v2455, %v2456
  %v2458 = vshll.u32 2102212464, %v2446
  %v2459 = vshrl.u32 920167782, %v2447
  %v2460 = vor.u32 %v2458, %v2459
  %v2461 = vshll.u32 920167782, %v2446
  %v2462 = vshrl.u32 1326507024, %v2447
  %v2463 = vor.u32 %v2461, %v2462
  %vm2464 = vcmp.lt.s32.totalorder %v2445, 1
  %vm2465 = vcmp.lt.s32.totalorder %v2445, 2
  %vm2466 = vcmp.lt.s32.totalorder %v2445, 3
  %vm2467 = vcmp.lt.s32.totalorder %v2445, 4
  %v2468 = vsel %vm2464, %v2448, %v2451
  %v2469 = vsel %vm2467, %v2457, 2102212464
  %v2470 = vsel %vm2466, %v2454, %v2469
  %v2471 = vsel %vm2465, %v2468, %v2470
  %v2472 = vsel %vm2464, %v2451, %v2454
  %v2473 = vsel %vm2467, %v2460, 920167782
  %v2474 = vsel %vm2466, %v2457, %v2473
  %v2475 = vsel %vm2465, %v2472, %v2474
  %v2476 = vsel %vm2464, %v2454, %v2457
  %v2477 = vsel %vm2467, %v2463, 1326507024
  %v2478 = vsel %vm2466, %v2460, %v2477
  %v2479 = vsel %vm2465, %v2476, %v2478
  %v2480 = vshll.u32 %v2440, 8
  %v2481 = vmul.u32.u64.compose %v2480, %v2479
  %v2482 = vextract.low.u32 %v2481
  %v2483 = vextract.high.u32 %v2481
  %v2484 = vmul.u32.u64.compose %v2480, %v2475
  %v2485 = vextract.low.u32 %v2484
  %v2486 = vextract.high.u32 %v2484
  %v2487 = vmul.u32 %v2480, %v2471
  %v2488 = vadd.s32 %v2483, %v2485
  %vm2489 = vc.u32 %v2483, %v2485
  %v2490 = vadd.s32 %v2486, 1
  %v2491 = vsel %vm2489, %v2490, %v2486
  %v2492 = vadd.s32 %v2487, %v2491
  %v2493 = vadd.s32 %v2492, 536870912
  %v2494 = vshrl.u32 %v2493, 30
  %v2495 = vshll.u32 %v2494, 30
  %v2496 = vsub.s32 %v2492, %v2495
  %vm2497 = vcmp.lt.s32.totalorder %v2496, 0
  %v2498 = vsub.s32 0, %v2496
  %v2499 = vsel %vm2497, %v2498, %v2496
  %v2500 = vclz %v2499
  %v2501 = vsub.s32 %v2500, 2
  %vm2502 = vcmp.gt.s32.totalorder 0, %v2501
  %v2503 = vsel %vm2502, 0, %v2501
  %v2504 = vsub.s32 32, %v2503
  %v2505 = vshll.u32 %v2496, %v2503
  %v2506 = vshrl.u32 %v2488, %v2504
  %v2507 = vor.u32 %v2505, %v2506
  %v2508 = vsub.s32 4294967266, %v2503
  %v2509 = vadd.s32 %v2508, 127
  %v2510 = vshll.u32 %v2509, 23
  %v2511 = vor.u32 4788187, %v2510
  %v2512 = vand.u32 2147483647, %v2511
  %v2514 = vcvt.s32.f32 %v2507
  %v2515 = vmul.f32 %v2514, %v2512
  %v2516 = vxor.u32 %v2515, 2147483648
  %v2517 = vsel %vm2434, %v2516, %v2515
  %v2518 = vsub.s32 4, %v2494
  %v2519 = vsel %vm2434, %v2518, %v2494
  %v2520 = vsel %vm2433, %v2328, %v2517
  %v2521 = vsel %vm2433, 0, %v2519
  %v2522 = vcosq.f32.pop %v2520
  %v2523 = vsinq.f32.pop %v2520
  %vm2524 = vweird.f32 %v2328
  %v2525 = vadd.s32 %v2521, 3
  %v2526 = vand.u32 %v2525, 3
  %vm2527 = vcmp.lt.s32.totalorder %v2526, 2
  %vm2528 = vcmp.eq.s32.totalorder %v2526, 0
  %v2529 = vxor.u32 %v2523, 2147483648
  %v2530 = vsel %vm2528, %v2522, %v2529
  %vm2531 = vcmp.eq.s32.totalorder %v2526, 2
  %v2532 = vxor.u32 %v2522, 2147483648
  %v2533 = vsel %vm2531, %v2532, %v2523
  %v2534 = vsel %vm2527, %v2530, %v2533
  %v2535 = vsel %vm2524, nan, %v2534
  %2537 = vrot.lane.b32.xlu0 %v2431, 126
  %v2538 = vpop.permute.xlu0 %2537
  %v2540 = vmul.f32 %v2325, %v2538
  %2542 = vrot.lane.b32.xlu0 %v2535, 126
  %v2543 = vpop.permute.xlu0 %2542
  %v2545 = vmul.f32 %v2327, %v2543
  %v2546 = vsub.f32 %v2540, %v2545
  %v2547 = vmul.f32 %v2327, %v2538
  %v2548 = vmul.f32 %v2325, %v2543
  %v2549 = vadd.f32 %v2547, %v2548
  %v2550 = vmul.f32 %v2549, 0.981
  %2552 = vrot.lane.b32.xlu0 %v2550, 2
  %v2553 = vpop.permute.xlu0 %2552
  %v2555 = vsub.f32 %v2317, %v2553
  %2557 = vset.pattern.permute.xlu0 0
  %2558 = vperm.xlu0 %2557, %v2546
  %v2559 = vpop.permute.xlu0 %2558
  %v2561 = vmul.f32 %v2559, %v1138
  %2563 = vset.pattern.permute.xlu0 0
  %2564 = vperm.xlu0 %2563, %v2549
  %v2565 = vpop.permute.xlu0 %2564
  %v2567 = vmul.f32 %v2565, %v1148
  %v2568 = vadd.f32 %v2561, %v2567
  %2570 = vset.pattern.permute.xlu0 2
  %2571 = vperm.xlu0 %2570, %v2555
  %v2572 = vpop.permute.xlu0 %2571
  %v2574 = vmul.f32 %v2572, %v1159
  %v2575 = vadd.f32 %v2568, %v2574
  %v2576 = vadd.f32 %v2575, %v1165
  %v2577 = vmax.f32 %v2576, 0.0
  %v2578 = vmul.f32 %v2577, %v1171
  %v2579 = vsel %vm506, %v2578, 0.0
  %2580 = vadd.xlane.f32.xlu0 %v2579
  %v2581 = vpop.xlane.xlu0 %2580
  %v2582 = vadd.f32 %v2546, %v2581
  %v2583 = vadd.f32 %v2582, %v1180
  %v2584 = vmul.f32 %v2577, %v1185
  %v2585 = vsel %vm506, %v2584, 0.0
  %2586 = vadd.xlane.f32.xlu0 %v2585
  %v2587 = vpop.xlane.xlu0 %2586
  %v2588 = vadd.f32 %v2549, %v2587
  %v2589 = vadd.f32 %v2588, %v1193
  %v2590 = vmul.f32 %v2577, %v1199
  %v2591 = vsel %vm506, %v2590, 0.0
  %2592 = vadd.xlane.f32.xlu0 %v2591
  %v2593 = vpop.xlane.xlu0 %2592
  %v2594 = vadd.f32 %v2555, %v2593
  %v2595 = vadd.f32 %v2594, %v1180
  %v2596 = vmul.f32 %v2583, %v2583
  %v2597 = vmul.f32 %v2589, %v2589
  %v2598 = vadd.f32 %v2596, %v2597
  %v2599 = vadd.f32 %v2598, 1e-30
  %v2600 = vrsqrt.pop %v2599
  %vm2601 = vcmp.gt.f32.partialorder %v2598, 0.0
  %v2602 = vmul.f32 %v2583, %v2600
  %v2603 = vsel %vm2601, %v2602, 1.0
  %v2604 = vmul.f32 %v2589, %v2600
  %v2605 = vsel %vm2601, %v2604, 0.0
  %v2606 = vmul.f32 %v2595, 0.1
  %v2607 = vand.u32 2147483647, %v2606
  %vm2608 = vcmp.le.f32.partialorder %v2607, 0.7853982
  %vm2609 = vcmp.lt.s32.totalorder %v2606, 0
  %v2610 = vand.u32 %v2606, 2139095040
  %v2611 = vshrl.u32 %v2610, 23
  %v2612 = vsub.s32 %v2611, 127
  %v2613 = vand.u32 2147483647, %v2606
  %v2614 = vand.u32 %v2613, 8388607
  %v2615 = vor.u32 %v2614, 8388608
  %v2616 = vsub.s32 0, %v2615
  %v2617 = vadd.s32 %v2612, 1
  %vm2618 = vcmp.gt.s32.totalorder %v2617, 0
  %v2619 = vsel %vm2618, %v2617, 0
  %v2620 = vshrl.u32 %v2619, 5
  %v2621 = vand.u32 %v2619, 31
  %v2622 = vsub.s32 32, %v2621
  %v2623 = vshrl.u32 683565275, %v2622
  %v2624 = vshll.u32 683565275, %v2621
  %v2625 = vshrl.u32 2475754826, %v2622
  %v2626 = vor.u32 %v2624, %v2625
  %v2627 = vshll.u32 2475754826, %v2621
  %v2628 = vshrl.u32 2131351028, %v2622
  %v2629 = vor.u32 %v2627, %v2628
  %v2630 = vshll.u32 2131351028, %v2621
  %v2631 = vshrl.u32 2102212464, %v2622
  %v2632 = vor.u32 %v2630, %v2631
  %v2633 = vshll.u32 2102212464, %v2621
  %v2634 = vshrl.u32 920167782, %v2622
  %v2635 = vor.u32 %v2633, %v2634
  %v2636 = vshll.u32 920167782, %v2621
  %v2637 = vshrl.u32 1326507024, %v2622
  %v2638 = vor.u32 %v2636, %v2637
  %vm2639 = vcmp.lt.s32.totalorder %v2620, 1
  %vm2640 = vcmp.lt.s32.totalorder %v2620, 2
  %vm2641 = vcmp.lt.s32.totalorder %v2620, 3
  %vm2642 = vcmp.lt.s32.totalorder %v2620, 4
  %v2643 = vsel %vm2639, %v2623, %v2626
  %v2644 = vsel %vm2642, %v2632, 2102212464
  %v2645 = vsel %vm2641, %v2629, %v2644
  %v2646 = vsel %vm2640, %v2643, %v2645
  %v2647 = vsel %vm2639, %v2626, %v2629
  %v2648 = vsel %vm2642, %v2635, 920167782
  %v2649 = vsel %vm2641, %v2632, %v2648
  %v2650 = vsel %vm2640, %v2647, %v2649
  %v2651 = vsel %vm2639, %v2629, %v2632
  %v2652 = vsel %vm2642, %v2638, 1326507024
  %v2653 = vsel %vm2641, %v2635, %v2652
  %v2654 = vsel %vm2640, %v2651, %v2653
  %v2655 = vshll.u32 %v2615, 8
  %v2656 = vmul.u32.u64.compose %v2655, %v2654
  %v2657 = vextract.low.u32 %v2656
  %v2658 = vextract.high.u32 %v2656
  %v2659 = vmul.u32.u64.compose %v2655, %v2650
  %v2660 = vextract.low.u32 %v2659
  %v2661 = vextract.high.u32 %v2659
  %v2662 = vmul.u32 %v2655, %v2646
  %v2663 = vadd.s32 %v2658, %v2660
  %vm2664 = vc.u32 %v2658, %v2660
  %v2665 = vadd.s32 %v2661, 1
  %v2666 = vsel %vm2664, %v2665, %v2661
  %v2667 = vadd.s32 %v2662, %v2666
  %v2668 = vadd.s32 %v2667, 536870912
  %v2669 = vshrl.u32 %v2668, 30
  %v2670 = vshll.u32 %v2669, 30
  %v2671 = vsub.s32 %v2667, %v2670
  %vm2672 = vcmp.lt.s32.totalorder %v2671, 0
  %v2673 = vsub.s32 0, %v2671
  %v2674 = vsel %vm2672, %v2673, %v2671
  %v2675 = vclz %v2674
  %v2676 = vsub.s32 %v2675, 2
  %vm2677 = vcmp.gt.s32.totalorder 0, %v2676
  %v2678 = vsel %vm2677, 0, %v2676
  %v2679 = vsub.s32 32, %v2678
  %v2680 = vshll.u32 %v2671, %v2678
  %v2681 = vshrl.u32 %v2663, %v2679
  %v2682 = vor.u32 %v2680, %v2681
  %v2683 = vsub.s32 4294967266, %v2678
  %v2684 = vadd.s32 %v2683, 127
  %v2685 = vshll.u32 %v2684, 23
  %v2686 = vor.u32 4788187, %v2685
  %v2687 = vand.u32 2147483647, %v2686
  %v2689 = vcvt.s32.f32 %v2682
  %v2690 = vmul.f32 %v2689, %v2687
  %v2691 = vxor.u32 %v2690, 2147483648
  %v2692 = vsel %vm2609, %v2691, %v2690
  %v2693 = vsub.s32 4, %v2669
  %v2694 = vsel %vm2609, %v2693, %v2669
  %v2695 = vsel %vm2608, %v2606, %v2692
  %v2696 = vsel %vm2608, 0, %v2694
  %v2697 = vcosq.f32.pop %v2695
  %v2698 = vsinq.f32.pop %v2695
  %vm2699 = vweird.f32 %v2606
  %v2700 = vand.u32 %v2696, 3
  %vm2701 = vcmp.lt.s32.totalorder %v2700, 2
  %vm2702 = vcmp.eq.s32.totalorder %v2700, 0
  %v2703 = vxor.u32 %v2698, 2147483648
  %v2704 = vsel %vm2702, %v2697, %v2703
  %vm2705 = vcmp.eq.s32.totalorder %v2700, 2
  %v2706 = vxor.u32 %v2697, 2147483648
  %v2707 = vsel %vm2705, %v2706, %v2698
  %v2708 = vsel %vm2701, %v2704, %v2707
  %v2709 = vsel %vm2699, nan, %v2708
  %v2710 = vand.u32 2147483647, %v2606
  %vm2711 = vcmp.le.f32.partialorder %v2710, 0.7853982
  %vm2712 = vcmp.lt.s32.totalorder %v2606, 0
  %v2713 = vand.u32 %v2606, 2139095040
  %v2714 = vshrl.u32 %v2713, 23
  %v2715 = vsub.s32 %v2714, 127
  %v2716 = vand.u32 2147483647, %v2606
  %v2717 = vand.u32 %v2716, 8388607
  %v2718 = vor.u32 %v2717, 8388608
  %v2719 = vsub.s32 0, %v2718
  %v2720 = vadd.s32 %v2715, 1
  %vm2721 = vcmp.gt.s32.totalorder %v2720, 0
  %v2722 = vsel %vm2721, %v2720, 0
  %v2723 = vshrl.u32 %v2722, 5
  %v2724 = vand.u32 %v2722, 31
  %v2725 = vsub.s32 32, %v2724
  %v2726 = vshrl.u32 683565275, %v2725
  %v2727 = vshll.u32 683565275, %v2724
  %v2728 = vshrl.u32 2475754826, %v2725
  %v2729 = vor.u32 %v2727, %v2728
  %v2730 = vshll.u32 2475754826, %v2724
  %v2731 = vshrl.u32 2131351028, %v2725
  %v2732 = vor.u32 %v2730, %v2731
  %v2733 = vshll.u32 2131351028, %v2724
  %v2734 = vshrl.u32 2102212464, %v2725
  %v2735 = vor.u32 %v2733, %v2734
  %v2736 = vshll.u32 2102212464, %v2724
  %v2737 = vshrl.u32 920167782, %v2725
  %v2738 = vor.u32 %v2736, %v2737
  %v2739 = vshll.u32 920167782, %v2724
  %v2740 = vshrl.u32 1326507024, %v2725
  %v2741 = vor.u32 %v2739, %v2740
  %vm2742 = vcmp.lt.s32.totalorder %v2723, 1
  %vm2743 = vcmp.lt.s32.totalorder %v2723, 2
  %vm2744 = vcmp.lt.s32.totalorder %v2723, 3
  %vm2745 = vcmp.lt.s32.totalorder %v2723, 4
  %v2746 = vsel %vm2742, %v2726, %v2729
  %v2747 = vsel %vm2745, %v2735, 2102212464
  %v2748 = vsel %vm2744, %v2732, %v2747
  %v2749 = vsel %vm2743, %v2746, %v2748
  %v2750 = vsel %vm2742, %v2729, %v2732
  %v2751 = vsel %vm2745, %v2738, 920167782
  %v2752 = vsel %vm2744, %v2735, %v2751
  %v2753 = vsel %vm2743, %v2750, %v2752
  %v2754 = vsel %vm2742, %v2732, %v2735
  %v2755 = vsel %vm2745, %v2741, 1326507024
  %v2756 = vsel %vm2744, %v2738, %v2755
  %v2757 = vsel %vm2743, %v2754, %v2756
  %v2758 = vshll.u32 %v2718, 8
  %v2759 = vmul.u32.u64.compose %v2758, %v2757
  %v2760 = vextract.low.u32 %v2759
  %v2761 = vextract.high.u32 %v2759
  %v2762 = vmul.u32.u64.compose %v2758, %v2753
  %v2763 = vextract.low.u32 %v2762
  %v2764 = vextract.high.u32 %v2762
  %v2765 = vmul.u32 %v2758, %v2749
  %v2766 = vadd.s32 %v2761, %v2763
  %vm2767 = vc.u32 %v2761, %v2763
  %v2768 = vadd.s32 %v2764, 1
  %v2769 = vsel %vm2767, %v2768, %v2764
  %v2770 = vadd.s32 %v2765, %v2769
  %v2771 = vadd.s32 %v2770, 536870912
  %v2772 = vshrl.u32 %v2771, 30
  %v2773 = vshll.u32 %v2772, 30
  %v2774 = vsub.s32 %v2770, %v2773
  %vm2775 = vcmp.lt.s32.totalorder %v2774, 0
  %v2776 = vsub.s32 0, %v2774
  %v2777 = vsel %vm2775, %v2776, %v2774
  %v2778 = vclz %v2777
  %v2779 = vsub.s32 %v2778, 2
  %vm2780 = vcmp.gt.s32.totalorder 0, %v2779
  %v2781 = vsel %vm2780, 0, %v2779
  %v2782 = vsub.s32 32, %v2781
  %v2783 = vshll.u32 %v2774, %v2781
  %v2784 = vshrl.u32 %v2766, %v2782
  %v2785 = vor.u32 %v2783, %v2784
  %v2786 = vsub.s32 4294967266, %v2781
  %v2787 = vadd.s32 %v2786, 127
  %v2788 = vshll.u32 %v2787, 23
  %v2789 = vor.u32 4788187, %v2788
  %v2790 = vand.u32 2147483647, %v2789
  %v2792 = vcvt.s32.f32 %v2785
  %v2793 = vmul.f32 %v2792, %v2790
  %v2794 = vxor.u32 %v2793, 2147483648
  %v2795 = vsel %vm2712, %v2794, %v2793
  %v2796 = vsub.s32 4, %v2772
  %v2797 = vsel %vm2712, %v2796, %v2772
  %v2798 = vsel %vm2711, %v2606, %v2795
  %v2799 = vsel %vm2711, 0, %v2797
  %v2800 = vcosq.f32.pop %v2798
  %v2801 = vsinq.f32.pop %v2798
  %vm2802 = vweird.f32 %v2606
  %v2803 = vadd.s32 %v2799, 3
  %v2804 = vand.u32 %v2803, 3
  %vm2805 = vcmp.lt.s32.totalorder %v2804, 2
  %vm2806 = vcmp.eq.s32.totalorder %v2804, 0
  %v2807 = vxor.u32 %v2801, 2147483648
  %v2808 = vsel %vm2806, %v2800, %v2807
  %vm2809 = vcmp.eq.s32.totalorder %v2804, 2
  %v2810 = vxor.u32 %v2800, 2147483648
  %v2811 = vsel %vm2809, %v2810, %v2801
  %v2812 = vsel %vm2805, %v2808, %v2811
  %v2813 = vsel %vm2802, nan, %v2812
  %2815 = vrot.lane.b32.xlu0 %v2709, 126
  %v2816 = vpop.permute.xlu0 %2815
  %v2818 = vmul.f32 %v2603, %v2816
  %2820 = vrot.lane.b32.xlu0 %v2813, 126
  %v2821 = vpop.permute.xlu0 %2820
  %v2823 = vmul.f32 %v2605, %v2821
  %v2824 = vsub.f32 %v2818, %v2823
  %v2825 = vmul.f32 %v2605, %v2816
  %v2826 = vmul.f32 %v2603, %v2821
  %v2827 = vadd.f32 %v2825, %v2826
  %v2828 = vmul.f32 %v2827, 0.981
  %2830 = vrot.lane.b32.xlu0 %v2828, 2
  %v2831 = vpop.permute.xlu0 %2830
  %v2833 = vsub.f32 %v2595, %v2831
  %2835 = vset.pattern.permute.xlu0 0
  %2836 = vperm.xlu0 %2835, %v2824
  %v2837 = vpop.permute.xlu0 %2836
  %v2839 = vmul.f32 %v2837, %v1138
  %2841 = vset.pattern.permute.xlu0 0
  %2842 = vperm.xlu0 %2841, %v2827
  %v2843 = vpop.permute.xlu0 %2842
  %v2845 = vmul.f32 %v2843, %v1148
  %v2846 = vadd.f32 %v2839, %v2845
  %2848 = vset.pattern.permute.xlu0 2
  %2849 = vperm.xlu0 %2848, %v2833
  %v2850 = vpop.permute.xlu0 %2849
  %v2852 = vmul.f32 %v2850, %v1159
  %v2853 = vadd.f32 %v2846, %v2852
  %v2854 = vadd.f32 %v2853, %v1165
  %v2855 = vmax.f32 %v2854, 0.0
  %v2856 = vmul.f32 %v2855, %v1171
  %v2857 = vsel %vm506, %v2856, 0.0
  %2858 = vadd.xlane.f32.xlu0 %v2857
  %v2859 = vpop.xlane.xlu0 %2858
  %v2860 = vadd.f32 %v2824, %v2859
  %v2861 = vadd.f32 %v2860, %v1180
  %v2862 = vmul.f32 %v2855, %v1185
  %v2863 = vsel %vm506, %v2862, 0.0
  %2864 = vadd.xlane.f32.xlu0 %v2863
  %v2865 = vpop.xlane.xlu0 %2864
  %v2866 = vadd.f32 %v2827, %v2865
  %v2867 = vadd.f32 %v2866, %v1193
  %v2868 = vmul.f32 %v2855, %v1199
  %v2869 = vsel %vm506, %v2868, 0.0
  %2870 = vadd.xlane.f32.xlu0 %v2869
  %v2871 = vpop.xlane.xlu0 %2870
  %v2872 = vadd.f32 %v2833, %v2871
  %v2873 = vadd.f32 %v2872, %v1180
  %v2874 = vmul.f32 %v2861, %v2861
  %v2875 = vmul.f32 %v2867, %v2867
  %v2876 = vadd.f32 %v2874, %v2875
  %v2877 = vadd.f32 %v2876, 1e-30
  %v2878 = vrsqrt.pop %v2877
  %vm2879 = vcmp.gt.f32.partialorder %v2876, 0.0
  %v2880 = vmul.f32 %v2861, %v2878
  %v2881 = vsel %vm2879, %v2880, 1.0
  %v2882 = vmul.f32 %v2867, %v2878
  %v2883 = vsel %vm2879, %v2882, 0.0
  %v2884 = vmul.f32 %v2873, 0.1
  %v2885 = vand.u32 2147483647, %v2884
  %vm2886 = vcmp.le.f32.partialorder %v2885, 0.7853982
  %vm2887 = vcmp.lt.s32.totalorder %v2884, 0
  %v2888 = vand.u32 %v2884, 2139095040
  %v2889 = vshrl.u32 %v2888, 23
  %v2890 = vsub.s32 %v2889, 127
  %v2891 = vand.u32 2147483647, %v2884
  %v2892 = vand.u32 %v2891, 8388607
  %v2893 = vor.u32 %v2892, 8388608
  %v2894 = vsub.s32 0, %v2893
  %v2895 = vadd.s32 %v2890, 1
  %vm2896 = vcmp.gt.s32.totalorder %v2895, 0
  %v2897 = vsel %vm2896, %v2895, 0
  %v2898 = vshrl.u32 %v2897, 5
  %v2899 = vand.u32 %v2897, 31
  %v2900 = vsub.s32 32, %v2899
  %v2901 = vshrl.u32 683565275, %v2900
  %v2902 = vshll.u32 683565275, %v2899
  %v2903 = vshrl.u32 2475754826, %v2900
  %v2904 = vor.u32 %v2902, %v2903
  %v2905 = vshll.u32 2475754826, %v2899
  %v2906 = vshrl.u32 2131351028, %v2900
  %v2907 = vor.u32 %v2905, %v2906
  %v2908 = vshll.u32 2131351028, %v2899
  %v2909 = vshrl.u32 2102212464, %v2900
  %v2910 = vor.u32 %v2908, %v2909
  %v2911 = vshll.u32 2102212464, %v2899
  %v2912 = vshrl.u32 920167782, %v2900
  %v2913 = vor.u32 %v2911, %v2912
  %v2914 = vshll.u32 920167782, %v2899
  %v2915 = vshrl.u32 1326507024, %v2900
  %v2916 = vor.u32 %v2914, %v2915
  %vm2917 = vcmp.lt.s32.totalorder %v2898, 1
  %vm2918 = vcmp.lt.s32.totalorder %v2898, 2
  %vm2919 = vcmp.lt.s32.totalorder %v2898, 3
  %vm2920 = vcmp.lt.s32.totalorder %v2898, 4
  %v2921 = vsel %vm2917, %v2901, %v2904
  %v2922 = vsel %vm2920, %v2910, 2102212464
  %v2923 = vsel %vm2919, %v2907, %v2922
  %v2924 = vsel %vm2918, %v2921, %v2923
  %v2925 = vsel %vm2917, %v2904, %v2907
  %v2926 = vsel %vm2920, %v2913, 920167782
  %v2927 = vsel %vm2919, %v2910, %v2926
  %v2928 = vsel %vm2918, %v2925, %v2927
  %v2929 = vsel %vm2917, %v2907, %v2910
  %v2930 = vsel %vm2920, %v2916, 1326507024
  %v2931 = vsel %vm2919, %v2913, %v2930
  %v2932 = vsel %vm2918, %v2929, %v2931
  %v2933 = vshll.u32 %v2893, 8
  %v2934 = vmul.u32.u64.compose %v2933, %v2932
  %v2935 = vextract.low.u32 %v2934
  %v2936 = vextract.high.u32 %v2934
  %v2937 = vmul.u32.u64.compose %v2933, %v2928
  %v2938 = vextract.low.u32 %v2937
  %v2939 = vextract.high.u32 %v2937
  %v2940 = vmul.u32 %v2933, %v2924
  %v2941 = vadd.s32 %v2936, %v2938
  %vm2942 = vc.u32 %v2936, %v2938
  %v2943 = vadd.s32 %v2939, 1
  %v2944 = vsel %vm2942, %v2943, %v2939
  %v2945 = vadd.s32 %v2940, %v2944
  %v2946 = vadd.s32 %v2945, 536870912
  %v2947 = vshrl.u32 %v2946, 30
  %v2948 = vshll.u32 %v2947, 30
  %v2949 = vsub.s32 %v2945, %v2948
  %vm2950 = vcmp.lt.s32.totalorder %v2949, 0
  %v2951 = vsub.s32 0, %v2949
  %v2952 = vsel %vm2950, %v2951, %v2949
  %v2953 = vclz %v2952
  %v2954 = vsub.s32 %v2953, 2
  %vm2955 = vcmp.gt.s32.totalorder 0, %v2954
  %v2956 = vsel %vm2955, 0, %v2954
  %v2957 = vsub.s32 32, %v2956
  %v2958 = vshll.u32 %v2949, %v2956
  %v2959 = vshrl.u32 %v2941, %v2957
  %v2960 = vor.u32 %v2958, %v2959
  %v2961 = vsub.s32 4294967266, %v2956
  %v2962 = vadd.s32 %v2961, 127
  %v2963 = vshll.u32 %v2962, 23
  %v2964 = vor.u32 4788187, %v2963
  %v2965 = vand.u32 2147483647, %v2964
  %v2967 = vcvt.s32.f32 %v2960
  %v2968 = vmul.f32 %v2967, %v2965
  %v2969 = vxor.u32 %v2968, 2147483648
  %v2970 = vsel %vm2887, %v2969, %v2968
  %v2971 = vsub.s32 4, %v2947
  %v2972 = vsel %vm2887, %v2971, %v2947
  %v2973 = vsel %vm2886, %v2884, %v2970
  %v2974 = vsel %vm2886, 0, %v2972
  %v2975 = vcosq.f32.pop %v2973
  %v2976 = vsinq.f32.pop %v2973
  %vm2977 = vweird.f32 %v2884
  %v2978 = vand.u32 %v2974, 3
  %vm2979 = vcmp.lt.s32.totalorder %v2978, 2
  %vm2980 = vcmp.eq.s32.totalorder %v2978, 0
  %v2981 = vxor.u32 %v2976, 2147483648
  %v2982 = vsel %vm2980, %v2975, %v2981
  %vm2983 = vcmp.eq.s32.totalorder %v2978, 2
  %v2984 = vxor.u32 %v2975, 2147483648
  %v2985 = vsel %vm2983, %v2984, %v2976
  %v2986 = vsel %vm2979, %v2982, %v2985
  %v2987 = vsel %vm2977, nan, %v2986
  %v2988 = vand.u32 2147483647, %v2884
  %vm2989 = vcmp.le.f32.partialorder %v2988, 0.7853982
  %vm2990 = vcmp.lt.s32.totalorder %v2884, 0
  %v2991 = vand.u32 %v2884, 2139095040
  %v2992 = vshrl.u32 %v2991, 23
  %v2993 = vsub.s32 %v2992, 127
  %v2994 = vand.u32 2147483647, %v2884
  %v2995 = vand.u32 %v2994, 8388607
  %v2996 = vor.u32 %v2995, 8388608
  %v2997 = vsub.s32 0, %v2996
  %v2998 = vadd.s32 %v2993, 1
  %vm2999 = vcmp.gt.s32.totalorder %v2998, 0
  %v3000 = vsel %vm2999, %v2998, 0
  %v3001 = vshrl.u32 %v3000, 5
  %v3002 = vand.u32 %v3000, 31
  %v3003 = vsub.s32 32, %v3002
  %v3004 = vshrl.u32 683565275, %v3003
  %v3005 = vshll.u32 683565275, %v3002
  %v3006 = vshrl.u32 2475754826, %v3003
  %v3007 = vor.u32 %v3005, %v3006
  %v3008 = vshll.u32 2475754826, %v3002
  %v3009 = vshrl.u32 2131351028, %v3003
  %v3010 = vor.u32 %v3008, %v3009
  %v3011 = vshll.u32 2131351028, %v3002
  %v3012 = vshrl.u32 2102212464, %v3003
  %v3013 = vor.u32 %v3011, %v3012
  %v3014 = vshll.u32 2102212464, %v3002
  %v3015 = vshrl.u32 920167782, %v3003
  %v3016 = vor.u32 %v3014, %v3015
  %v3017 = vshll.u32 920167782, %v3002
  %v3018 = vshrl.u32 1326507024, %v3003
  %v3019 = vor.u32 %v3017, %v3018
  %vm3020 = vcmp.lt.s32.totalorder %v3001, 1
  %vm3021 = vcmp.lt.s32.totalorder %v3001, 2
  %vm3022 = vcmp.lt.s32.totalorder %v3001, 3
  %vm3023 = vcmp.lt.s32.totalorder %v3001, 4
  %v3024 = vsel %vm3020, %v3004, %v3007
  %v3025 = vsel %vm3023, %v3013, 2102212464
  %v3026 = vsel %vm3022, %v3010, %v3025
  %v3027 = vsel %vm3021, %v3024, %v3026
  %v3028 = vsel %vm3020, %v3007, %v3010
  %v3029 = vsel %vm3023, %v3016, 920167782
  %v3030 = vsel %vm3022, %v3013, %v3029
  %v3031 = vsel %vm3021, %v3028, %v3030
  %v3032 = vsel %vm3020, %v3010, %v3013
  %v3033 = vsel %vm3023, %v3019, 1326507024
  %v3034 = vsel %vm3022, %v3016, %v3033
  %v3035 = vsel %vm3021, %v3032, %v3034
  %v3036 = vshll.u32 %v2996, 8
  %v3037 = vmul.u32.u64.compose %v3036, %v3035
  %v3038 = vextract.low.u32 %v3037
  %v3039 = vextract.high.u32 %v3037
  %v3040 = vmul.u32.u64.compose %v3036, %v3031
  %v3041 = vextract.low.u32 %v3040
  %v3042 = vextract.high.u32 %v3040
  %v3043 = vmul.u32 %v3036, %v3027
  %v3044 = vadd.s32 %v3039, %v3041
  %vm3045 = vc.u32 %v3039, %v3041
  %v3046 = vadd.s32 %v3042, 1
  %v3047 = vsel %vm3045, %v3046, %v3042
  %v3048 = vadd.s32 %v3043, %v3047
  %v3049 = vadd.s32 %v3048, 536870912
  %v3050 = vshrl.u32 %v3049, 30
  %v3051 = vshll.u32 %v3050, 30
  %v3052 = vsub.s32 %v3048, %v3051
  %vm3053 = vcmp.lt.s32.totalorder %v3052, 0
  %v3054 = vsub.s32 0, %v3052
  %v3055 = vsel %vm3053, %v3054, %v3052
  %v3056 = vclz %v3055
  %v3057 = vsub.s32 %v3056, 2
  %vm3058 = vcmp.gt.s32.totalorder 0, %v3057
  %v3059 = vsel %vm3058, 0, %v3057
  %v3060 = vsub.s32 32, %v3059
  %v3061 = vshll.u32 %v3052, %v3059
  %v3062 = vshrl.u32 %v3044, %v3060
  %v3063 = vor.u32 %v3061, %v3062
  %v3064 = vsub.s32 4294967266, %v3059
  %v3065 = vadd.s32 %v3064, 127
  %v3066 = vshll.u32 %v3065, 23
  %v3067 = vor.u32 4788187, %v3066
  %v3068 = vand.u32 2147483647, %v3067
  %v3070 = vcvt.s32.f32 %v3063
  %v3071 = vmul.f32 %v3070, %v3068
  %v3072 = vxor.u32 %v3071, 2147483648
  %v3073 = vsel %vm2990, %v3072, %v3071
  %v3074 = vsub.s32 4, %v3050
  %v3075 = vsel %vm2990, %v3074, %v3050
  %v3076 = vsel %vm2989, %v2884, %v3073
  %v3077 = vsel %vm2989, 0, %v3075
  %v3078 = vcosq.f32.pop %v3076
  %v3079 = vsinq.f32.pop %v3076
  %vm3080 = vweird.f32 %v2884
  %v3081 = vadd.s32 %v3077, 3
  %v3082 = vand.u32 %v3081, 3
  %vm3083 = vcmp.lt.s32.totalorder %v3082, 2
  %vm3084 = vcmp.eq.s32.totalorder %v3082, 0
  %v3085 = vxor.u32 %v3079, 2147483648
  %v3086 = vsel %vm3084, %v3078, %v3085
  %vm3087 = vcmp.eq.s32.totalorder %v3082, 2
  %v3088 = vxor.u32 %v3078, 2147483648
  %v3089 = vsel %vm3087, %v3088, %v3079
  %v3090 = vsel %vm3083, %v3086, %v3089
  %v3091 = vsel %vm3080, nan, %v3090
  %3093 = vrot.lane.b32.xlu0 %v2987, 126
  %v3094 = vpop.permute.xlu0 %3093
  %v3096 = vmul.f32 %v2881, %v3094
  %3098 = vrot.lane.b32.xlu0 %v3091, 126
  %v3099 = vpop.permute.xlu0 %3098
  %v3101 = vmul.f32 %v2883, %v3099
  %v3102 = vsub.f32 %v3096, %v3101
  %v3103 = vmul.f32 %v2883, %v3094
  %v3104 = vmul.f32 %v2881, %v3099
  %v3105 = vadd.f32 %v3103, %v3104
  %v3106 = vmul.f32 %v3105, 0.981
  %3108 = vrot.lane.b32.xlu0 %v3106, 2
  %v3109 = vpop.permute.xlu0 %3108
  %v3111 = vsub.f32 %v2873, %v3109
  %3113 = vset.pattern.permute.xlu0 0
  %3114 = vperm.xlu0 %3113, %v3102
  %v3115 = vpop.permute.xlu0 %3114
  %v3117 = vmul.f32 %v3115, %v1138
  %3119 = vset.pattern.permute.xlu0 0
  %3120 = vperm.xlu0 %3119, %v3105
  %v3121 = vpop.permute.xlu0 %3120
  %v3123 = vmul.f32 %v3121, %v1148
  %v3124 = vadd.f32 %v3117, %v3123
  %3126 = vset.pattern.permute.xlu0 2
  %3127 = vperm.xlu0 %3126, %v3111
  %v3128 = vpop.permute.xlu0 %3127
  %v3130 = vmul.f32 %v3128, %v1159
  %v3131 = vadd.f32 %v3124, %v3130
  %v3132 = vadd.f32 %v3131, %v1165
  %v3133 = vmax.f32 %v3132, 0.0
  %v3134 = vmul.f32 %v3133, %v1171
  %v3135 = vsel %vm506, %v3134, 0.0
  %3136 = vadd.xlane.f32.xlu0 %v3135
  %v3137 = vpop.xlane.xlu0 %3136
  %v3138 = vadd.f32 %v3102, %v3137
  %v3139 = vadd.f32 %v3138, %v1180
  %v3140 = vmul.f32 %v3133, %v1185
  %v3141 = vsel %vm506, %v3140, 0.0
  %3142 = vadd.xlane.f32.xlu0 %v3141
  %v3143 = vpop.xlane.xlu0 %3142
  %v3144 = vadd.f32 %v3105, %v3143
  %v3145 = vadd.f32 %v3144, %v1193
  %v3146 = vmul.f32 %v3133, %v1199
  %v3147 = vsel %vm506, %v3146, 0.0
  %3148 = vadd.xlane.f32.xlu0 %v3147
  %v3149 = vpop.xlane.xlu0 %3148
  %v3150 = vadd.f32 %v3111, %v3149
  %v3151 = vadd.f32 %v3150, %v1180
  %3153 = vrot.lane.b32.xlu0 %v1195, 1
  %v3154 = vpop.permute.xlu0 %3153
  %3157 = vrot.lane.b32.xlu0 %v1471, 3
  %v3158 = vpop.permute.xlu0 %3157
  %3161 = vrot.lane.b32.xlu0 %v1477, 4
  %v3162 = vpop.permute.xlu0 %3161
  %3165 = vrot.lane.b32.xlu0 %v1483, 3
  %v3166 = vpop.permute.xlu0 %3165
  %3169 = vrot.lane.b32.xlu0 %v1749, 6
  %v3170 = vpop.permute.xlu0 %3169
  %3173 = vrot.lane.b32.xlu0 %v1755, 7
  %v3174 = vpop.permute.xlu0 %3173
  %3177 = vrot.lane.b32.xlu0 %v1761, 6
  %v3178 = vpop.permute.xlu0 %3177
  %3181 = vrot.lane.b32.xlu0 %v2027, 9
  %v3182 = vpop.permute.xlu0 %3181
  %3185 = vrot.lane.b32.xlu0 %v2033, 10
  %v3186 = vpop.permute.xlu0 %3185
  %3189 = vrot.lane.b32.xlu0 %v2039, 9
  %v3190 = vpop.permute.xlu0 %3189
  %3193 = vrot.lane.b32.xlu0 %v2305, 12
  %v3194 = vpop.permute.xlu0 %3193
  %3197 = vrot.lane.b32.xlu0 %v2311, 13
  %v3198 = vpop.permute.xlu0 %3197
  %3201 = vrot.lane.b32.xlu0 %v2317, 12
  %v3202 = vpop.permute.xlu0 %3201
  %3205 = vrot.lane.b32.xlu0 %v2583, 15
  %v3206 = vpop.permute.xlu0 %3205
  %v3208 = vsel %vm776, %v1181, %v3154
  %v3209 = vsel %vm786, %v3208, %v1205
  %vm3210 = vcmask 23552
  %v3211 = vsel %vm3210, %v3209, %v3158
  %vm3212 = vcmask 31744
  %v3213 = vsel %vm3212, %v3211, %v3162
  %vm3214 = vcmask 39936
  %v3215 = vsel %vm3214, %v3213, %v3166
  %vm3216 = vcmask 48128
  %v3217 = vsel %vm3216, %v3215, %v3170
  %vm3218 = vcmask 56320
  %v3219 = vsel %vm3218, %v3217, %v3174
  %vm3220 = vcmask 64512
  %v3221 = vsel %vm3220, %v3219, %v3178
  %vm3222 = vcmask 72704
  %v3223 = vsel %vm3222, %v3221, %v3182
  %vm3224 = vcmask 80896
  %v3225 = vsel %vm3224, %v3223, %v3186
  %vm3226 = vcmask 89088
  %v3227 = vsel %vm3226, %v3225, %v3190
  %v3228 = vsel %vm326, %v3227, %v3194
  %vm3229 = vcmask 105472
  %v3230 = vsel %vm3229, %v3228, %v3198
  %vm3231 = vcmask 113664
  %v3232 = vsel %vm3231, %v3230, %v3202
  %vm3233 = vcmask 121856
  %v3234 = vsel %vm3233, %v3232, %v3206
  %3236 = vrot.lane.b32.xlu0 %v2595, 127
  %v3237 = vpop.permute.xlu0 %3236
  %3240 = vrot.lane.b32.xlu0 %v2861, 2
  %v3241 = vpop.permute.xlu0 %3240
  %3244 = vrot.lane.b32.xlu0 %v2867, 3
  %v3245 = vpop.permute.xlu0 %3244
  %3248 = vrot.lane.b32.xlu0 %v2873, 2
  %v3249 = vpop.permute.xlu0 %3248
  %3252 = vrot.lane.b32.xlu0 %v3139, 5
  %v3253 = vpop.permute.xlu0 %3252
  %3256 = vrot.lane.b32.xlu0 %v3145, 6
  %v3257 = vpop.permute.xlu0 %3256
  %3260 = vrot.lane.b32.xlu0 %v3151, 5
  %v3261 = vpop.permute.xlu0 %3260
  %v3263 = vsel %vm776, %v2589, %v3237
  %v3264 = vsel %vm786, %v3263, %v3241
  %v3265 = vsel %vm3210, %v3264, %v3245
  %v3266 = vsel %vm3212, %v3265, %v3249
  %v3267 = vsel %vm3214, %v3266, %v3253
  %v3268 = vsel %vm3216, %v3267, %v3257
  %v3269 = vsel %vm3218, %v3268, %v3261
  %3271 = vrot.lane.b32.xlu0 %v3269, 16
  %v3272 = vpop.permute.xlu0 %3271
  %vm3274 = vcmask 130048
  %v3275 = vsel %vm3274, %v3234, %v3272
  %v3276 = vld [vmem:[%s2 + $0xf0] sm:$0xff]
  %v3277 = vld [vmem:[%s2 + $0xf8] sm:$0xff]
  %v3278 = vld [vmem:[%s2 + $0x100] sm:$0xff]
  %vm3279 = vcmask 195584
  %v3281 = vsel %vm3279, %v3275, 0
  %3283 = vmatprep.subr.mxu0 0.0
  %3284 = vmatpush1.msra.mxu0 %v3276
  %3285 = vmatprep.subr.mxu0 0.0
  %3286 = vmatpush1.msra.mxu0 %v3277
  %3287 = vmatprep.subr.mxu0 0.0
  %3288 = vmatpush1.msra.mxu0 %v3278
  %3289 = vmatprep.subr.mxu0 0.0
  %3290 = vmatpush1.msra.mxu0 0.0
  %3291 = vmatprep.subr.mxu0 0.0
  %3292 = vmatpush1.msra.mxu0 0.0
  %3293 = vmatprep.subr.mxu0 0.0
  %3294 = vmatpush1.msra.mxu0 0.0
  %3295 = vmatprep.subr.mxu0 0.0
  %3296 = vmatpush1.msra.mxu0 0.0
  %3297 = vmatprep.subr.mxu0 0.0
  %3298 = vmatpush1.msra.mxu0 0.0
  %3299 = vmatprep.subr.mxu0 0.0
  %3300 = vmatpush1.msra.mxu0 0.0
  %3301 = vmatprep.subr.mxu0 0.0
  %3302 = vmatpush1.msra.mxu0 0.0
  %3303 = vmatprep.subr.mxu0 0.0
  %3304 = vmatpush1.msra.mxu0 0.0
  %3305 = vmatprep.subr.mxu0 0.0
  %3306 = vmatpush1.msra.mxu0 0.0
  %3307 = vmatprep.subr.mxu0 0.0
  %3308 = vmatpush1.msra.mxu0 0.0
  %3309 = vmatprep.subr.mxu0 0.0
  %3310 = vmatpush1.msra.mxu0 0.0
  %3311 = vmatprep.subr.mxu0 0.0
  %3312 = vmatpush1.msra.mxu0 0.0
  %3313 = vmatprep.subr.mxu0 0.0
  %3314 = vmatpush1.msra.mxu0 0.0
  %3315 = vmatprep.subr.mxu0 0.0
  %3316 = vmatpush1.msra.mxu0 0.0
  %3317 = vmatprep.subr.mxu0 0.0
  %3318 = vmatpush1.msra.mxu0 0.0
  %3319 = vmatprep.subr.mxu0 0.0
  %3320 = vmatpush1.msra.mxu0 0.0
  %3321 = vmatprep.subr.mxu0 0.0
  %3322 = vmatpush1.msra.mxu0 0.0
  %3323 = vmatprep.subr.mxu0 0.0
  %3324 = vmatpush1.msra.mxu0 0.0
  %3325 = vmatprep.subr.mxu0 0.0
  %3326 = vmatpush1.msra.mxu0 0.0
  %3327 = vmatprep.subr.mxu0 0.0
  %3328 = vmatpush1.msra.mxu0 0.0
  %3329 = vmatprep.subr.mxu0 0.0
  %3330 = vmatpush1.msra.mxu0 0.0
  %3331 = vmatprep.subr.mxu0 0.0
  %3332 = vmatpush1.msra.mxu0 0.0
  %3333 = vmatprep.subr.mxu0 0.0
  %3334 = vmatpush1.msra.mxu0 0.0
  %3335 = vmatprep.subr.mxu0 0.0
  %3336 = vmatpush1.msra.mxu0 0.0
  %3337 = vmatprep.subr.mxu0 0.0
  %3338 = vmatpush1.msra.mxu0 0.0
  %3339 = vmatprep.subr.mxu0 0.0
  %3340 = vmatpush1.msra.mxu0 0.0
  %3341 = vmatprep.subr.mxu0 0.0
  %3342 = vmatpush1.msra.mxu0 0.0
  %3343 = vmatprep.subr.mxu0 0.0
  %3344 = vmatpush1.msra.mxu0 0.0
  %3345 = vmatprep.subr.mxu0 0.0
  %3346 = vmatpush1.msra.mxu0 0.0
  %3347 = vmatprep.mubr.f32.mxu0 0.0
  %3348 = vmatmul.mubr.f32.gmra.mrb[0].mxu0 %v3281
  %v3349 = vpop.f32.mrb[0].mxu0
  %v3350 = vadd.f32 0.0, %v3349
  %v3351 = vpop.f32.mrb[0].mxu0
  %3352 = vdwg.mxu0
  %vm3353 = vcmask 779264
  %3354 = vst.msk [vmem:[%s3] sm:$0x3] %vm3353, %v3350
  // Predicated region
  $region14: #{hybrid_partially_informed.1} parent=0 // pred_check
    _
  $region15: #{hybrid_partially_informed.1} parent=0 // pred_check_branch
    %3356 = sbr.rel (0) target = $region17
  $region16: #{hybrid_partially_informed.1} parent=0 // pred_region
    _
  $region17: #{hybrid_partially_informed.1} parent=0 // pred_fallthru
    _
  // Predicated region
  $region18: #{hybrid_partially_informed.1} parent=0 // pred_check
    _
  $region19: #{hybrid_partially_informed.1} parent=0 // pred_check_branch
    %3358 = sbr.rel (0) target = $region21
  $region20: #{hybrid_partially_informed.1} parent=0 // pred_region
    _
  $region21: #{hybrid_partially_informed.1} parent=0 // pred_fallthru
    _

</llo_original>
